<compile_context>
chip_gen: v6e
topology: v6e:2x2x1
jax: 0.10.0
libtpu: 0.0.40
codegen_flags: <defaults>
</compile_context>

<pallas_src>
import math

import jax
import jax.numpy as jnp
from jax import lax
from jax.experimental import pallas as pl
from jax.experimental.pallas import tpu as pltpu

SQRT2 = math.sqrt(2.0)
NEG_SLOPE = 0.2     # Activation('leaky_relu', use_scale=True, negative_slope=0.2)


def make_fused_kernel(S1, Lpp, halo, OFF, neg_slope, Cin, Cout):
    def leaky(v):                                   # valid for 0 < slope < 1
        return jnp.maximum(v, neg_slope * v)

    def kernel(mask_ref, x_ref, w1s_ref, b1_ref, w2_ref, b2_ref,
               out_ref, xs_ref, ph_ref):
        XL = x_ref.shape[2]

        # ---- build the K-stacked conv1 operand once per image ------------------------
        # block b = 2r+c holds the input shifted right by r*S1 + c lanes; all reads start
        # at lane >= halo = S1+2 > S1+1 >= shift, so the unwritten low-lane strip is
        # never consumed.
        for r in range(2):
            for c in range(2):
                sh = r * S1 + c
                b = 2 * r + c
                xs_ref[b * Cin:(b + 1) * Cin, sh:XL] = x_ref[0, :, 0:XL - sh]

        # hoisted broadcasts (JAX does not CSE broadcast_in_dim)
        mask_b = jnp.broadcast_to(mask_ref[...], (Cout, Lpp))       # f32 0/1 interior mask
        bias1 = jnp.broadcast_to(b1_ref[...], (Cout, Lpp))          # f32, sqrt2 folded
        bias2 = jnp.broadcast_to(b2_ref[...], (Cout, Lpp))          # f32, sqrt2 folded

        # ---- stage 1: WeightScaledConvTrans(4, s=2, p=1) + leaky*sqrt2 (folded) -------
        # one K = 4*Cin MXU matmul per output phase; accumulator lives in vregs.
        for py in range(2):
            for px in range(2):
                base = halo + py * S1 + px
                acc = bias1 + jnp.dot(w1s_ref[py, px],
                                      xs_ref[:, base:base + Lpp],
                                      preferred_element_type=jnp.float32)
                y = leaky(acc) * mask_b          # zero ring == conv2's zero padding
                ph_ref[2 * py + px, :, OFF:OFF + Lpp] = y.astype(jnp.bfloat16)

        # ---- stage 2: WeightScaledConv(3, p=1) + leaky*sqrt2 (folded) -----------------
        # sub-pixel 3x3 conv on the 4 VMEM-resident conv1 phases; per-tap dots with a
        # vreg accumulator, single lane-dense bf16 store per output phase.
        for qy in range(2):
            for qx in range(2):
                acc = bias2
                for dy in range(3):
                    ty = qy + dy - 1
                    py, ay = ty % 2, ty // 2
                    for dx in range(3):
                        tx = qx + dx - 1
                        px, ax = tx % 2, tx // 2
                        off = OFF + ay * S1 + ax
                        acc = acc + jnp.dot(
                            w2_ref[dy, dx],
                            ph_ref[2 * py + px, :, off:off + Lpp],
                            preferred_element_type=jnp.float32)
                out_ref[0, qy, qx] = leaky(acc).astype(jnp.bfloat16)

    return kernel


def discriminator_decoder_block(x, wt, b1, w2t, b2):
    """x: (N,Cin,H,W) f32 NCHW.  wt: (4,4,Cout,Cin), w2t: (3,3,Cout,Cout) per-tap matrices
    with he_std*lrmul*sqrt(2) folded in.  b1/b2: (Cout,1) f32 with lrmul*sqrt(2) folded in.
    Returns (N,Cout,2H,2W) f32 NCHW."""
    N, Cin, H, W = x.shape
    Cout = wt.shape[2]

    S1 = W + 2                                   # lane stride of one padded input row
    Lp = (H + 2) * S1                            # flattened padded image size
    Lpp = ((Lp + 127) // 128) * 128              # lane-dense (128-multiple) slab width
    halo = S1 + 2                                # input lane halo (absorbs +-(S1+1) taps)
    XL = Lpp + 2 * halo
    OFF = S1 + 2                                 # phase-buffer slab start (no 128 align)
    PHL = OFF + Lpp + S1 + 2                     # phase-buffer length

    # input prep: 1-px zero pad, flatten per image, pad to the lane-halo'd Lpp slab, bf16
    xp = jnp.pad(x, ((0, 0), (0, 0), (1, 1), (1, 1)))
    xf = xp.reshape(N, Cin, Lp)
    xph = jnp.pad(xf, ((0, 0), (0, 0), (halo, XL - halo - Lp))).astype(jnp.bfloat16)

    # 0/1 mask of interior positions of the flattened padded (H+2, W+2) grid, padded to Lpp
    r = lax.broadcasted_iota(jnp.int32, (H + 2, W + 2), 0)
    c = lax.broadcasted_iota(jnp.int32, (H + 2, W + 2), 1)
    mask = ((r >= 1) & (r <= H) & (c >= 1) & (c <= W)).astype(jnp.float32).reshape(1, Lp)
    mask = jnp.pad(mask, ((0, 0), (0, Lpp - Lp)))

    # K-stacked conv1 weights: (2,2,Cout,4*Cin).  For output phase (py,px), K-block
    # b = 2r+c (input shift r*S1+c) is hit by conv_transpose tap (ky,kx) = (2r+1-py, 2c+1-px).
    w1s = jnp.stack([
        jnp.stack([
            jnp.concatenate([wt[2 * rr + 1 - py, 2 * cc + 1 - px]
                             for rr in range(2) for cc in range(2)], axis=1)
            for px in range(2)], axis=0)
        for py in range(2)], axis=0)

    kernel = make_fused_kernel(S1, Lpp, halo, OFF, NEG_SLOPE, Cin, Cout)

    out_ph = pl.pallas_call(
        kernel,
        out_shape=jax.ShapeDtypeStruct((N, 2, 2, Cout, Lpp), jnp.bfloat16),
        grid=(N,),
        in_specs=[
            pl.BlockSpec((1, Lpp), lambda n: (0, 0)),                      # interior mask
            pl.BlockSpec((1, Cin, XL), lambda n: (n, 0, 0)),               # one image/step
            pl.BlockSpec((2, 2, Cout, 4 * Cin), lambda n: (0, 0, 0, 0)),   # conv1 weights
            pl.BlockSpec((Cout, 1), lambda n: (0, 0)),                     # conv1 bias
            pl.BlockSpec((3, 3, Cout, Cout), lambda n: (0, 0, 0, 0)),      # conv2 weights
            pl.BlockSpec((Cout, 1), lambda n: (0, 0)),                     # conv2 bias
        ],
        out_specs=pl.BlockSpec((1, 2, 2, Cout, Lpp), lambda n: (n, 0, 0, 0, 0)),
        scratch_shapes=[
            pltpu.VMEM((4 * Cin, XL), jnp.bfloat16),     # K-stacked conv1 operand
            pltpu.VMEM((4, Cout, PHL), jnp.bfloat16),    # conv1 phases resident in VMEM
        ],
        compiler_params=pltpu.CompilerParams(
            dimension_semantics=("parallel",)),
    )(mask, xph, w1s.astype(jnp.bfloat16), b1.astype(jnp.float32),
      w2t.astype(jnp.bfloat16), b2.astype(jnp.float32))

    # interleave the 2x2 output phases, crop lane padding + the padded border (all bf16);
    # upcast only at the very end.
    out = out_ph[..., :Lp].reshape(N, 2, 2, Cout, H + 2, W + 2)[:, :, :, :, 1:H + 1, 1:W + 1]
    out = out.transpose(0, 3, 4, 1, 5, 2).reshape(N, Cout, 2 * H, 2 * W)
    return out.astype(jnp.float32)


if __name__ == "__main__":
    N, Cin, Cout, H, W = 2, 4, 8, 16, 16
    lrmul = 1.0    # use_scale=True, use_fp16=False
    key = jax.random.PRNGKey(0)
    kw1, kw2, kb1, kb2, kx = jax.random.split(key, 5)

    # WeightScaledConvTrans: weight (in, out, 4, 4) ~ N(0, 1/lrmul); runtime scale he*lrmul
    he1 = math.sqrt(1.0 / (Cin * 4 * 4))
    w1 = jax.random.normal(kw1, (Cin, Cout, 4, 4), jnp.float32)
    # WeightScaledConv: weight (out, in, 3, 3) ~ N(0, 1/lrmul); runtime scale he*lrmul
    he2 = math.sqrt(1.0 / (Cout * 3 * 3))
    w2 = jax.random.normal(kw2, (Cout, Cout, 3, 3), jnp.float32)
    # the module initializes biases to zero; use nonzero values here so the
    # bias + folded-sqrt(2) path is actually exercised (per review feedback)
    b1 = 0.1 * jax.random.normal(kb1, (Cout,), jnp.float32)
    b2 = 0.1 * jax.random.normal(kb2, (Cout,), jnp.float32)
    x = jax.random.normal(kx, (N, Cin, H, W), jnp.float32)

    # fold the runtime weight scale AND the sqrt(2) activation gain into weights/bias
    # (leaky_relu is positively homogeneous)
    w1f = w1 * (he1 * lrmul) * SQRT2                  # (Cin, Cout, 4, 4)
    w2f = w2 * (he2 * lrmul) * SQRT2                  # (Cout, Cout, 3, 3)
    wt = w1f.transpose(2, 3, 1, 0)                    # (4, 4, Cout, Cin) per-tap matrices
    w2t = w2f.transpose(2, 3, 0, 1)                   # (3, 3, Cout, Cout)
    b1f = (b1 * lrmul * SQRT2).reshape(Cout, 1)
    b2f = (b2 * lrmul * SQRT2).reshape(Cout, 1)

    out = jax.jit(discriminator_decoder_block)(x, wt, b1f, w2t, b2f)
    out = jax.block_until_ready(out)
    assert out.shape == (N, Cout, 2 * H, 2 * W), out.shape

    # pure-JAX reference (torch F.conv_transpose2d / F.conv2d semantics), fed the same
    # bf16-rounded inputs/weights the kernel consumes; remaining differences are the bf16
    # rounding of the resident y1 intermediate and of the kernel output (documented,
    # intentional), so a 5e-2 abs tolerance is ample.
    def leaky(v):
        return jnp.maximum(v, NEG_SLOPE * v)

    xr = x.astype(jnp.bfloat16).astype(jnp.float32)
    w1r = w1f.astype(jnp.bfloat16).astype(jnp.float32)
    w2r = w2f.astype(jnp.bfloat16).astype(jnp.float32)
    w1c = jnp.flip(w1r, (2, 3)).transpose(1, 0, 2, 3)           # OIHW, spatially flipped
    y = lax.conv_general_dilated(xr, w1c, window_strides=(1, 1),
                                 padding=((2, 2), (2, 2)), lhs_dilation=(2, 2),
                                 dimension_numbers=('NCHW', 'OIHW', 'NCHW'),
                                 precision=lax.Precision.HIGHEST)
    y = leaky(y + b1f.reshape(1, Cout, 1, 1))
    y = lax.conv_general_dilated(y, w2r, window_strides=(1, 1),
                                 padding=((1, 1), (1, 1)),
                                 dimension_numbers=('NCHW', 'OIHW', 'NCHW'),
                                 precision=lax.Precision.HIGHEST)
    ref = leaky(y + b2f.reshape(1, Cout, 1, 1))

    err = float(jnp.max(jnp.abs(out - ref)))
    assert err < 5e-2, f"mismatch vs reference: max abs err = {err}"
    print("KERNEL_OK")
</pallas_src>

<mosaic_0001>
module attributes {stable_mosaic.version = 11 : i64} {
  func.func @kernel(%arg0: i32, %arg1: memref<1x384xf32, #tpu.memory_space<vmem>>, %arg2: memref<1x4x424xbf16, #tpu.memory_space<vmem>>, %arg3: memref<2x2x8x16xbf16, #tpu.memory_space<vmem>>, %arg4: memref<8x1xf32, #tpu.memory_space<vmem>>, %arg5: memref<3x3x8x8xbf16, #tpu.memory_space<vmem>>, %arg6: memref<8x1xf32, #tpu.memory_space<vmem>>, %arg7: memref<1x2x2x8x384xbf16, #tpu.memory_space<vmem>>, %arg8: memref<16x424xbf16, #tpu.memory_space<vmem>>, %arg9: memref<4x8x424xbf16, #tpu.memory_space<vmem>>) attributes {dimension_semantics = [#tpu.dimension_semantics<parallel>], iteration_bounds = array<i64: 2>, scalar_prefetch = 0 : i64, scratch_operands = 2 : i64, tpu.core_type = #tpu.core_type<tc>, window_params = [{pipeline_mode = #tpu.pipeline_mode<synchronous>, transform_indices = @transform_0, window_bounds = array<i64: 1, 384>}, {transform_indices = @transform_1, window_bounds = array<i64: 1, 4, 424>}, {pipeline_mode = #tpu.pipeline_mode<synchronous>, transform_indices = @transform_2, window_bounds = array<i64: 2, 2, 8, 16>}, {pipeline_mode = #tpu.pipeline_mode<synchronous>, transform_indices = @transform_3, window_bounds = array<i64: 8, 1>}, {pipeline_mode = #tpu.pipeline_mode<synchronous>, transform_indices = @transform_4, window_bounds = array<i64: 3, 3, 8, 8>}, {pipeline_mode = #tpu.pipeline_mode<synchronous>, transform_indices = @transform_5, window_bounds = array<i64: 8, 1>}, {transform_indices = @transform_6, window_bounds = array<i64: 1, 2, 2, 8, 384>}]} {
    %c0 = arith.constant 0 : index
    %c0_0 = arith.constant 0 : index
    %c0_1 = arith.constant 0 : index
    %0 = vector.load %arg2[%c0, %c0_0, %c0_1] : memref<1x4x424xbf16, #tpu.memory_space<vmem>>, vector<1x4x424xbf16>
    %1 = vector.shape_cast %0 : vector<1x4x424xbf16> to vector<4x424xbf16>
    %c0_2 = arith.constant 0 : index
    %c0_3 = arith.constant 0 : index
    %2 = vector.load %arg8[%c0_2, %c0_3] : memref<16x424xbf16, #tpu.memory_space<vmem>>, vector<4x424xbf16>
    tpu.vector_store %arg8[%c0_2, %c0_3], %1 {strides = array<i32>} : memref<16x424xbf16, #tpu.memory_space<vmem>>, vector<4x424xbf16>,
    %c0_4 = arith.constant 0 : index
    %c0_5 = arith.constant 0 : index
    %c0_6 = arith.constant 0 : index
    %3 = vector.load %arg2[%c0_4, %c0_5, %c0_6] : memref<1x4x424xbf16, #tpu.memory_space<vmem>>, vector<1x4x423xbf16>
    %4 = vector.shape_cast %3 : vector<1x4x423xbf16> to vector<4x423xbf16>
    %c4 = arith.constant 4 : index
    %c1 = arith.constant 1 : index
    %5 = vector.load %arg8[%c4, %c1] : memref<16x424xbf16, #tpu.memory_space<vmem>>, vector<4x423xbf16>
    tpu.vector_store %arg8[%c4, %c1], %4 {strides = array<i32>} : memref<16x424xbf16, #tpu.memory_space<vmem>>, vector<4x423xbf16>,
    %c0_7 = arith.constant 0 : index
    %c0_8 = arith.constant 0 : index
    %c0_9 = arith.constant 0 : index
    %6 = vector.load %arg2[%c0_7, %c0_8, %c0_9] : memref<1x4x424xbf16, #tpu.memory_space<vmem>>, vector<1x4x406xbf16>
    %7 = vector.shape_cast %6 : vector<1x4x406xbf16> to vector<4x406xbf16>
    %c8 = arith.constant 8 : index
    %c18 = arith.constant 18 : index
    %8 = vector.load %arg8[%c8, %c18] : memref<16x424xbf16, #tpu.memory_space<vmem>>, vector<4x406xbf16>
    tpu.vector_store %arg8[%c8, %c18], %7 {strides = array<i32>} : memref<16x424xbf16, #tpu.memory_space<vmem>>, vector<4x406xbf16>,
    %c0_10 = arith.constant 0 : index
    %c0_11 = arith.constant 0 : index
    %c0_12 = arith.constant 0 : index
    %9 = vector.load %arg2[%c0_10, %c0_11, %c0_12] : memref<1x4x424xbf16, #tpu.memory_space<vmem>>, vector<1x4x405xbf16>
    %10 = vector.shape_cast %9 : vector<1x4x405xbf16> to vector<4x405xbf16>
    %c12 = arith.constant 12 : index
    %c19 = arith.constant 19 : index
    %11 = vector.load %arg8[%c12, %c19] : memref<16x424xbf16, #tpu.memory_space<vmem>>, vector<4x405xbf16>
    tpu.vector_store %arg8[%c12, %c19], %10 {strides = array<i32>} : memref<16x424xbf16, #tpu.memory_space<vmem>>, vector<4x405xbf16>,
    %c0_13 = arith.constant 0 : index
    %c0_14 = arith.constant 0 : index
    %12 = vector.load %arg1[%c0_13, %c0_14] : memref<1x384xf32, #tpu.memory_space<vmem>>, vector<1x384xf32>
    %13 = vector.shape_cast %12 : vector<1x384xf32> to vector<1x384xf32>
    %14 = vector.broadcast %13 : vector<1x384xf32> to vector<8x384xf32>
    %c0_15 = arith.constant 0 : index
    %c0_16 = arith.constant 0 : index
    %15 = vector.load %arg4[%c0_15, %c0_16] : memref<8x1xf32, #tpu.memory_space<vmem>>, vector<8x1xf32>
    %16 = vector.shape_cast %15 : vector<8x1xf32> to vector<8x1xf32>
    %17 = vector.broadcast %16 : vector<8x1xf32> to vector<8x384xf32>
    %c0_17 = arith.constant 0 : index
    %c0_18 = arith.constant 0 : index
    %18 = vector.load %arg6[%c0_17, %c0_18] : memref<8x1xf32, #tpu.memory_space<vmem>>, vector<8x1xf32>
    %19 = vector.shape_cast %18 : vector<8x1xf32> to vector<8x1xf32>
    %20 = vector.broadcast %19 : vector<8x1xf32> to vector<8x384xf32>
    %c0_19 = arith.constant 0 : index
    %c0_20 = arith.constant 0 : index
    %c0_21 = arith.constant 0 : index
    %c0_22 = arith.constant 0 : index
    %21 = vector.load %arg3[%c0_19, %c0_20, %c0_21, %c0_22] : memref<2x2x8x16xbf16, #tpu.memory_space<vmem>>, vector<1x1x8x16xbf16>
    %22 = vector.shape_cast %21 : vector<1x1x8x16xbf16> to vector<8x16xbf16>
    %c0_23 = arith.constant 0 : index
    %c20 = arith.constant 20 : index
    %23 = vector.load %arg8[%c0_23, %c20] : memref<16x424xbf16, #tpu.memory_space<vmem>>, vector<16x384xbf16>
    %cst = arith.constant dense<0.000000e+00> : vector<8x384xf32>
    %24 = tpu.matmul %22, %23, %cst {dimension_numbers = #tpu.dot_dimension_numbers<[1], [0], [0], [1], [0, 0, 1, 1], [], []>} : vector<8x16xbf16>, vector<16x384xbf16>, vector<8x384xf32> -> vector<8x384xf32>
    %25 = arith.addf %17, %24 : vector<8x384xf32>
    %cst_24 = arith.constant 2.000000e-01 : f32
    %26 = vector.broadcast %cst_24 : f32 to vector<8x384xf32>
    %27 = arith.mulf %26, %25 : vector<8x384xf32>
    %28 = arith.maximumf %25, %27 : vector<8x384xf32>
    %29 = arith.mulf %28, %14 : vector<8x384xf32>
    %30 = arith.truncf %29 : vector<8x384xf32> to vector<8x384xbf16>
    %c0_25 = arith.constant 0 : index
    %c0_26 = arith.constant 0 : index
    %c20_27 = arith.constant 20 : index
    %31 = vector.load %arg9[%c0_25, %c0_26, %c20_27] : memref<4x8x424xbf16, #tpu.memory_space<vmem>>, vector<1x8x384xbf16>
    %32 = vector.shape_cast %31 : vector<1x8x384xbf16> to vector<8x384xbf16>
    %33 = vector.shape_cast %30 : vector<8x384xbf16> to vector<1x8x384xbf16>
    tpu.vector_store %arg9[%c0_25, %c0_26, %c20_27], %33 {strides = array<i32>} : memref<4x8x424xbf16, #tpu.memory_space<vmem>>, vector<1x8x384xbf16>,
    %c0_28 = arith.constant 0 : index
    %c1_29 = arith.constant 1 : index
    %c0_30 = arith.constant 0 : index
    %c0_31 = arith.constant 0 : index
    %34 = vector.load %arg3[%c0_28, %c1_29, %c0_30, %c0_31] : memref<2x2x8x16xbf16, #tpu.memory_space<vmem>>, vector<1x1x8x16xbf16>
    %35 = vector.shape_cast %34 : vector<1x1x8x16xbf16> to vector<8x16xbf16>
    %c0_32 = arith.constant 0 : index
    %c21 = arith.constant 21 : index
    %36 = vector.load %arg8[%c0_32, %c21] : memref<16x424xbf16, #tpu.memory_space<vmem>>, vector<16x384xbf16>
    %cst_33 = arith.constant dense<0.000000e+00> : vector<8x384xf32>
    %37 = tpu.matmul %35, %36, %cst_33 {dimension_numbers = #tpu.dot_dimension_numbers<[1], [0], [0], [1], [0, 0, 1, 1], [], []>} : vector<8x16xbf16>, vector<16x384xbf16>, vector<8x384xf32> -> vector<8x384xf32>
    %38 = arith.addf %17, %37 : vector<8x384xf32>
    %cst_34 = arith.constant 2.000000e-01 : f32
    %39 = vector.broadcast %cst_34 : f32 to vector<8x384xf32>
    %40 = arith.mulf %39, %38 : vector<8x384xf32>
    %41 = arith.maximumf %38, %40 : vector<8x384xf32>
    %42 = arith.mulf %41, %14 : vector<8x384xf32>
    %43 = arith.truncf %42 : vector<8x384xf32> to vector<8x384xbf16>
    %c1_35 = arith.constant 1 : index
    %c0_36 = arith.constant 0 : index
    %c20_37 = arith.constant 20 : index
    %44 = vector.load %arg9[%c1_35, %c0_36, %c20_37] : memref<4x8x424xbf16, #tpu.memory_space<vmem>>, vector<1x8x384xbf16>
    %45 = vector.shape_cast %44 : vector<1x8x384xbf16> to vector<8x384xbf16>
    %46 = vector.shape_cast %43 : vector<8x384xbf16> to vector<1x8x384xbf16>
    tpu.vector_store %arg9[%c1_35, %c0_36, %c20_37], %46 {strides = array<i32>} : memref<4x8x424xbf16, #tpu.memory_space<vmem>>, vector<1x8x384xbf16>,
    %c1_38 = arith.constant 1 : index
    %c0_39 = arith.constant 0 : index
    %c0_40 = arith.constant 0 : index
    %c0_41 = arith.constant 0 : index
    %47 = vector.load %arg3[%c1_38, %c0_39, %c0_40, %c0_41] : memref<2x2x8x16xbf16, #tpu.memory_space<vmem>>, vector<1x1x8x16xbf16>
    %48 = vector.shape_cast %47 : vector<1x1x8x16xbf16> to vector<8x16xbf16>
    %c0_42 = arith.constant 0 : index
    %c38 = arith.constant 38 : index
    %49 = vector.load %arg8[%c0_42, %c38] : memref<16x424xbf16, #tpu.memory_space<vmem>>, vector<16x384xbf16>
    %cst_43 = arith.constant dense<0.000000e+00> : vector<8x384xf32>
    %50 = tpu.matmul %48, %49, %cst_43 {dimension_numbers = #tpu.dot_dimension_numbers<[1], [0], [0], [1], [0, 0, 1, 1], [], []>} : vector<8x16xbf16>, vector<16x384xbf16>, vector<8x384xf32> -> vector<8x384xf32>
    %51 = arith.addf %17, %50 : vector<8x384xf32>
    %cst_44 = arith.constant 2.000000e-01 : f32
    %52 = vector.broadcast %cst_44 : f32 to vector<8x384xf32>
    %53 = arith.mulf %52, %51 : vector<8x384xf32>
    %54 = arith.maximumf %51, %53 : vector<8x384xf32>
    %55 = arith.mulf %54, %14 : vector<8x384xf32>
    %56 = arith.truncf %55 : vector<8x384xf32> to vector<8x384xbf16>
    %c2 = arith.constant 2 : index
    %c0_45 = arith.constant 0 : index
    %c20_46 = arith.constant 20 : index
    %57 = vector.load %arg9[%c2, %c0_45, %c20_46] : memref<4x8x424xbf16, #tpu.memory_space<vmem>>, vector<1x8x384xbf16>
    %58 = vector.shape_cast %57 : vector<1x8x384xbf16> to vector<8x384xbf16>
    %59 = vector.shape_cast %56 : vector<8x384xbf16> to vector<1x8x384xbf16>
    tpu.vector_store %arg9[%c2, %c0_45, %c20_46], %59 {strides = array<i32>} : memref<4x8x424xbf16, #tpu.memory_space<vmem>>, vector<1x8x384xbf16>,
    %c1_47 = arith.constant 1 : index
    %c1_48 = arith.constant 1 : index
    %c0_49 = arith.constant 0 : index
    %c0_50 = arith.constant 0 : index
    %60 = vector.load %arg3[%c1_47, %c1_48, %c0_49, %c0_50] : memref<2x2x8x16xbf16, #tpu.memory_space<vmem>>, vector<1x1x8x16xbf16>
    %61 = vector.shape_cast %60 : vector<1x1x8x16xbf16> to vector<8x16xbf16>
    %c0_51 = arith.constant 0 : index
    %c39 = arith.constant 39 : index
    %62 = vector.load %arg8[%c0_51, %c39] : memref<16x424xbf16, #tpu.memory_space<vmem>>, vector<16x384xbf16>
    %cst_52 = arith.constant dense<0.000000e+00> : vector<8x384xf32>
    %63 = tpu.matmul %61, %62, %cst_52 {dimension_numbers = #tpu.dot_dimension_numbers<[1], [0], [0], [1], [0, 0, 1, 1], [], []>} : vector<8x16xbf16>, vector<16x384xbf16>, vector<8x384xf32> -> vector<8x384xf32>
    %64 = arith.addf %17, %63 : vector<8x384xf32>
    %cst_53 = arith.constant 2.000000e-01 : f32
    %65 = vector.broadcast %cst_53 : f32 to vector<8x384xf32>
    %66 = arith.mulf %65, %64 : vector<8x384xf32>
    %67 = arith.maximumf %64, %66 : vector<8x384xf32>
    %68 = arith.mulf %67, %14 : vector<8x384xf32>
    %69 = arith.truncf %68 : vector<8x384xf32> to vector<8x384xbf16>
    %c3 = arith.constant 3 : index
    %c0_54 = arith.constant 0 : index
    %c20_55 = arith.constant 20 : index
    %70 = vector.load %arg9[%c3, %c0_54, %c20_55] : memref<4x8x424xbf16, #tpu.memory_space<vmem>>, vector<1x8x384xbf16>
    %71 = vector.shape_cast %70 : vector<1x8x384xbf16> to vector<8x384xbf16>
    %72 = vector.shape_cast %69 : vector<8x384xbf16> to vector<1x8x384xbf16>
    tpu.vector_store %arg9[%c3, %c0_54, %c20_55], %72 {strides = array<i32>} : memref<4x8x424xbf16, #tpu.memory_space<vmem>>, vector<1x8x384xbf16>,
    %c0_56 = arith.constant 0 : index
    %c0_57 = arith.constant 0 : index
    %c0_58 = arith.constant 0 : index
    %c0_59 = arith.constant 0 : index
    %73 = vector.load %arg5[%c0_56, %c0_57, %c0_58, %c0_59] : memref<3x3x8x8xbf16, #tpu.memory_space<vmem>>, vector<1x1x8x8xbf16>
    %74 = vector.shape_cast %73 : vector<1x1x8x8xbf16> to vector<8x8xbf16>
    %c3_60 = arith.constant 3 : index
    %c0_61 = arith.constant 0 : index
    %c1_62 = arith.constant 1 : index
    %75 = vector.load %arg9[%c3_60, %c0_61, %c1_62] : memref<4x8x424xbf16, #tpu.memory_space<vmem>>, vector<1x8x384xbf16>
    %76 = vector.shape_cast %75 : vector<1x8x384xbf16> to vector<8x384xbf16>
    %cst_63 = arith.constant dense<0.000000e+00> : vector<8x384xf32>
    %77 = tpu.matmul %74, %76, %cst_63 {dimension_numbers = #tpu.dot_dimension_numbers<[1], [0], [0], [1], [0, 0, 1, 1], [], []>} : vector<8x8xbf16>, vector<8x384xbf16>, vector<8x384xf32> -> vector<8x384xf32>
    %78 = arith.addf %20, %77 : vector<8x384xf32>
    %c0_64 = arith.constant 0 : index
    %c1_65 = arith.constant 1 : index
    %c0_66 = arith.constant 0 : index
    %c0_67 = arith.constant 0 : index
    %79 = vector.load %arg5[%c0_64, %c1_65, %c0_66, %c0_67] : memref<3x3x8x8xbf16, #tpu.memory_space<vmem>>, vector<1x1x8x8xbf16>
    %80 = vector.shape_cast %79 : vector<1x1x8x8xbf16> to vector<8x8xbf16>
    %c2_68 = arith.constant 2 : index
    %c0_69 = arith.constant 0 : index
    %c2_70 = arith.constant 2 : index
    %81 = vector.load %arg9[%c2_68, %c0_69, %c2_70] : memref<4x8x424xbf16, #tpu.memory_space<vmem>>, vector<1x8x384xbf16>
    %82 = vector.shape_cast %81 : vector<1x8x384xbf16> to vector<8x384xbf16>
    %cst_71 = arith.constant dense<0.000000e+00> : vector<8x384xf32>
    %83 = tpu.matmul %80, %82, %cst_71 {dimension_numbers = #tpu.dot_dimension_numbers<[1], [0], [0], [1], [0, 0, 1, 1], [], []>} : vector<8x8xbf16>, vector<8x384xbf16>, vector<8x384xf32> -> vector<8x384xf32>
    %84 = arith.addf %78, %83 : vector<8x384xf32>
    %c0_72 = arith.constant 0 : index
    %c2_73 = arith.constant 2 : index
    %c0_74 = arith.constant 0 : index
    %c0_75 = arith.constant 0 : index
    %85 = vector.load %arg5[%c0_72, %c2_73, %c0_74, %c0_75] : memref<3x3x8x8xbf16, #tpu.memory_space<vmem>>, vector<1x1x8x8xbf16>
    %86 = vector.shape_cast %85 : vector<1x1x8x8xbf16> to vector<8x8xbf16>
    %c3_76 = arith.constant 3 : index
    %c0_77 = arith.constant 0 : index
    %c2_78 = arith.constant 2 : index
    %87 = vector.load %arg9[%c3_76, %c0_77, %c2_78] : memref<4x8x424xbf16, #tpu.memory_space<vmem>>, vector<1x8x384xbf16>
    %88 = vector.shape_cast %87 : vector<1x8x384xbf16> to vector<8x384xbf16>
    %cst_79 = arith.constant dense<0.000000e+00> : vector<8x384xf32>
    %89 = tpu.matmul %86, %88, %cst_79 {dimension_numbers = #tpu.dot_dimension_numbers<[1], [0], [0], [1], [0, 0, 1, 1], [], []>} : vector<8x8xbf16>, vector<8x384xbf16>, vector<8x384xf32> -> vector<8x384xf32>
    %90 = arith.addf %84, %89 : vector<8x384xf32>
    %c1_80 = arith.constant 1 : index
    %c0_81 = arith.constant 0 : index
    %c0_82 = arith.constant 0 : index
    %c0_83 = arith.constant 0 : index
    %91 = vector.load %arg5[%c1_80, %c0_81, %c0_82, %c0_83] : memref<3x3x8x8xbf16, #tpu.memory_space<vmem>>, vector<1x1x8x8xbf16>
    %92 = vector.shape_cast %91 : vector<1x1x8x8xbf16> to vector<8x8xbf16>
    %c1_84 = arith.constant 1 : index
    %c0_85 = arith.constant 0 : index
    %c19_86 = arith.constant 19 : index
    %93 = vector.load %arg9[%c1_84, %c0_85, %c19_86] : memref<4x8x424xbf16, #tpu.memory_space<vmem>>, vector<1x8x384xbf16>
    %94 = vector.shape_cast %93 : vector<1x8x384xbf16> to vector<8x384xbf16>
    %cst_87 = arith.constant dense<0.000000e+00> : vector<8x384xf32>
    %95 = tpu.matmul %92, %94, %cst_87 {dimension_numbers = #tpu.dot_dimension_numbers<[1], [0], [0], [1], [0, 0, 1, 1], [], []>} : vector<8x8xbf16>, vector<8x384xbf16>, vector<8x384xf32> -> vector<8x384xf32>
    %96 = arith.addf %90, %95 : vector<8x384xf32>
    %c1_88 = arith.constant 1 : index
    %c1_89 = arith.constant 1 : index
    %c0_90 = arith.constant 0 : index
    %c0_91 = arith.constant 0 : index
    %97 = vector.load %arg5[%c1_88, %c1_89, %c0_90, %c0_91] : memref<3x3x8x8xbf16, #tpu.memory_space<vmem>>, vector<1x1x8x8xbf16>
    %98 = vector.shape_cast %97 : vector<1x1x8x8xbf16> to vector<8x8xbf16>
    %c0_92 = arith.constant 0 : index
    %c0_93 = arith.constant 0 : index
    %c20_94 = arith.constant 20 : index
    %99 = vector.load %arg9[%c0_92, %c0_93, %c20_94] : memref<4x8x424xbf16, #tpu.memory_space<vmem>>, vector<1x8x384xbf16>
    %100 = vector.shape_cast %99 : vector<1x8x384xbf16> to vector<8x384xbf16>
    %cst_95 = arith.constant dense<0.000000e+00> : vector<8x384xf32>
    %101 = tpu.matmul %98, %100, %cst_95 {dimension_numbers = #tpu.dot_dimension_numbers<[1], [0], [0], [1], [0, 0, 1, 1], [], []>} : vector<8x8xbf16>, vector<8x384xbf16>, vector<8x384xf32> -> vector<8x384xf32>
    %102 = arith.addf %96, %101 : vector<8x384xf32>
    %c1_96 = arith.constant 1 : index
    %c2_97 = arith.constant 2 : index
    %c0_98 = arith.constant 0 : index
    %c0_99 = arith.constant 0 : index
    %103 = vector.load %arg5[%c1_96, %c2_97, %c0_98, %c0_99] : memref<3x3x8x8xbf16, #tpu.memory_space<vmem>>, vector<1x1x8x8xbf16>
    %104 = vector.shape_cast %103 : vector<1x1x8x8xbf16> to vector<8x8xbf16>
    %c1_100 = arith.constant 1 : index
    %c0_101 = arith.constant 0 : index
    %c20_102 = arith.constant 20 : index
    %105 = vector.load %arg9[%c1_100, %c0_101, %c20_102] : memref<4x8x424xbf16, #tpu.memory_space<vmem>>, vector<1x8x384xbf16>
    %106 = vector.shape_cast %105 : vector<1x8x384xbf16> to vector<8x384xbf16>
    %cst_103 = arith.constant dense<0.000000e+00> : vector<8x384xf32>
    %107 = tpu.matmul %104, %106, %cst_103 {dimension_numbers = #tpu.dot_dimension_numbers<[1], [0], [0], [1], [0, 0, 1, 1], [], []>} : vector<8x8xbf16>, vector<8x384xbf16>, vector<8x384xf32> -> vector<8x384xf32>
    %108 = arith.addf %102, %107 : vector<8x384xf32>
    %c2_104 = arith.constant 2 : index
    %c0_105 = arith.constant 0 : index
    %c0_106 = arith.constant 0 : index
    %c0_107 = arith.constant 0 : index
    %109 = vector.load %arg5[%c2_104, %c0_105, %c0_106, %c0_107] : memref<3x3x8x8xbf16, #tpu.memory_space<vmem>>, vector<1x1x8x8xbf16>
    %110 = vector.shape_cast %109 : vector<1x1x8x8xbf16> to vector<8x8xbf16>
    %c3_108 = arith.constant 3 : index
    %c0_109 = arith.constant 0 : index
    %c19_110 = arith.constant 19 : index
    %111 = vector.load %arg9[%c3_108, %c0_109, %c19_110] : memref<4x8x424xbf16, #tpu.memory_space<vmem>>, vector<1x8x384xbf16>
    %112 = vector.shape_cast %111 : vector<1x8x384xbf16> to vector<8x384xbf16>
    %cst_111 = arith.constant dense<0.000000e+00> : vector<8x384xf32>
    %113 = tpu.matmul %110, %112, %cst_111 {dimension_numbers = #tpu.dot_dimension_numbers<[1], [0], [0], [1], [0, 0, 1, 1], [], []>} : vector<8x8xbf16>, vector<8x384xbf16>, vector<8x384xf32> -> vector<8x384xf32>
    %114 = arith.addf %108, %113 : vector<8x384xf32>
    %c2_112 = arith.constant 2 : index
    %c1_113 = arith.constant 1 : index
    %c0_114 = arith.constant 0 : index
    %c0_115 = arith.constant 0 : index
    %115 = vector.load %arg5[%c2_112, %c1_113, %c0_114, %c0_115] : memref<3x3x8x8xbf16, #tpu.memory_space<vmem>>, vector<1x1x8x8xbf16>
    %116 = vector.shape_cast %115 : vector<1x1x8x8xbf16> to vector<8x8xbf16>
    %c2_116 = arith.constant 2 : index
    %c0_117 = arith.constant 0 : index
    %c20_118 = arith.constant 20 : index
    %117 = vector.load %arg9[%c2_116, %c0_117, %c20_118] : memref<4x8x424xbf16, #tpu.memory_space<vmem>>, vector<1x8x384xbf16>
    %118 = vector.shape_cast %117 : vector<1x8x384xbf16> to vector<8x384xbf16>
    %cst_119 = arith.constant dense<0.000000e+00> : vector<8x384xf32>
    %119 = tpu.matmul %116, %118, %cst_119 {dimension_numbers = #tpu.dot_dimension_numbers<[1], [0], [0], [1], [0, 0, 1, 1], [], []>} : vector<8x8xbf16>, vector<8x384xbf16>, vector<8x384xf32> -> vector<8x384xf32>
    %120 = arith.addf %114, %119 : vector<8x384xf32>
    %c2_120 = arith.constant 2 : index
    %c2_121 = arith.constant 2 : index
    %c0_122 = arith.constant 0 : index
    %c0_123 = arith.constant 0 : index
    %121 = vector.load %arg5[%c2_120, %c2_121, %c0_122, %c0_123] : memref<3x3x8x8xbf16, #tpu.memory_space<vmem>>, vector<1x1x8x8xbf16>
    %122 = vector.shape_cast %121 : vector<1x1x8x8xbf16> to vector<8x8xbf16>
    %c3_124 = arith.constant 3 : index
    %c0_125 = arith.constant 0 : index
    %c20_126 = arith.constant 20 : index
    %123 = vector.load %arg9[%c3_124, %c0_125, %c20_126] : memref<4x8x424xbf16, #tpu.memory_space<vmem>>, vector<1x8x384xbf16>
    %124 = vector.shape_cast %123 : vector<1x8x384xbf16> to vector<8x384xbf16>
    %cst_127 = arith.constant dense<0.000000e+00> : vector<8x384xf32>
    %125 = tpu.matmul %122, %124, %cst_127 {dimension_numbers = #tpu.dot_dimension_numbers<[1], [0], [0], [1], [0, 0, 1, 1], [], []>} : vector<8x8xbf16>, vector<8x384xbf16>, vector<8x384xf32> -> vector<8x384xf32>
    %126 = arith.addf %120, %125 : vector<8x384xf32>
    %cst_128 = arith.constant 2.000000e-01 : f32
    %127 = vector.broadcast %cst_128 : f32 to vector<8x384xf32>
    %128 = arith.mulf %127, %126 : vector<8x384xf32>
    %129 = arith.maximumf %126, %128 : vector<8x384xf32>
    %130 = arith.truncf %129 : vector<8x384xf32> to vector<8x384xbf16>
    %c0_129 = arith.constant 0 : index
    %c0_130 = arith.constant 0 : index
    %c0_131 = arith.constant 0 : index
    %c0_132 = arith.constant 0 : index
    %c0_133 = arith.constant 0 : index
    %131 = vector.load %arg7[%c0_129, %c0_130, %c0_131, %c0_132, %c0_133] : memref<1x2x2x8x384xbf16, #tpu.memory_space<vmem>>, vector<1x1x1x8x384xbf16>
    %132 = vector.shape_cast %131 : vector<1x1x1x8x384xbf16> to vector<8x384xbf16>
    %133 = vector.shape_cast %130 : vector<8x384xbf16> to vector<1x1x1x8x384xbf16>
    tpu.vector_store %arg7[%c0_129, %c0_130, %c0_131, %c0_132, %c0_133], %133 {strides = array<i32>} : memref<1x2x2x8x384xbf16, #tpu.memory_space<vmem>>, vector<1x1x1x8x384xbf16>,
    %c0_134 = arith.constant 0 : index
    %c0_135 = arith.constant 0 : index
    %c0_136 = arith.constant 0 : index
    %c0_137 = arith.constant 0 : index
    %134 = vector.load %arg5[%c0_134, %c0_135, %c0_136, %c0_137] : memref<3x3x8x8xbf16, #tpu.memory_space<vmem>>, vector<1x1x8x8xbf16>
    %135 = vector.shape_cast %134 : vector<1x1x8x8xbf16> to vector<8x8xbf16>
    %c2_138 = arith.constant 2 : index
    %c0_139 = arith.constant 0 : index
    %c2_140 = arith.constant 2 : index
    %136 = vector.load %arg9[%c2_138, %c0_139, %c2_140] : memref<4x8x424xbf16, #tpu.memory_space<vmem>>, vector<1x8x384xbf16>
    %137 = vector.shape_cast %136 : vector<1x8x384xbf16> to vector<8x384xbf16>
    %cst_141 = arith.constant dense<0.000000e+00> : vector<8x384xf32>
    %138 = tpu.matmul %135, %137, %cst_141 {dimension_numbers = #tpu.dot_dimension_numbers<[1], [0], [0], [1], [0, 0, 1, 1], [], []>} : vector<8x8xbf16>, vector<8x384xbf16>, vector<8x384xf32> -> vector<8x384xf32>
    %139 = arith.addf %20, %138 : vector<8x384xf32>
    %c0_142 = arith.constant 0 : index
    %c1_143 = arith.constant 1 : index
    %c0_144 = arith.constant 0 : index
    %c0_145 = arith.constant 0 : index
    %140 = vector.load %arg5[%c0_142, %c1_143, %c0_144, %c0_145] : memref<3x3x8x8xbf16, #tpu.memory_space<vmem>>, vector<1x1x8x8xbf16>
    %141 = vector.shape_cast %140 : vector<1x1x8x8xbf16> to vector<8x8xbf16>
    %c3_146 = arith.constant 3 : index
    %c0_147 = arith.constant 0 : index
    %c2_148 = arith.constant 2 : index
    %142 = vector.load %arg9[%c3_146, %c0_147, %c2_148] : memref<4x8x424xbf16, #tpu.memory_space<vmem>>, vector<1x8x384xbf16>
    %143 = vector.shape_cast %142 : vector<1x8x384xbf16> to vector<8x384xbf16>
    %cst_149 = arith.constant dense<0.000000e+00> : vector<8x384xf32>
    %144 = tpu.matmul %141, %143, %cst_149 {dimension_numbers = #tpu.dot_dimension_numbers<[1], [0], [0], [1], [0, 0, 1, 1], [], []>} : vector<8x8xbf16>, vector<8x384xbf16>, vector<8x384xf32> -> vector<8x384xf32>
    %145 = arith.addf %139, %144 : vector<8x384xf32>
    %c0_150 = arith.constant 0 : index
    %c2_151 = arith.constant 2 : index
    %c0_152 = arith.constant 0 : index
    %c0_153 = arith.constant 0 : index
    %146 = vector.load %arg5[%c0_150, %c2_151, %c0_152, %c0_153] : memref<3x3x8x8xbf16, #tpu.memory_space<vmem>>, vector<1x1x8x8xbf16>
    %147 = vector.shape_cast %146 : vector<1x1x8x8xbf16> to vector<8x8xbf16>
    %c2_154 = arith.constant 2 : index
    %c0_155 = arith.constant 0 : index
    %c3_156 = arith.constant 3 : index
    %148 = vector.load %arg9[%c2_154, %c0_155, %c3_156] : memref<4x8x424xbf16, #tpu.memory_space<vmem>>, vector<1x8x384xbf16>
    %149 = vector.shape_cast %148 : vector<1x8x384xbf16> to vector<8x384xbf16>
    %cst_157 = arith.constant dense<0.000000e+00> : vector<8x384xf32>
    %150 = tpu.matmul %147, %149, %cst_157 {dimension_numbers = #tpu.dot_dimension_numbers<[1], [0], [0], [1], [0, 0, 1, 1], [], []>} : vector<8x8xbf16>, vector<8x384xbf16>, vector<8x384xf32> -> vector<8x384xf32>
    %151 = arith.addf %145, %150 : vector<8x384xf32>
    %c1_158 = arith.constant 1 : index
    %c0_159 = arith.constant 0 : index
    %c0_160 = arith.constant 0 : index
    %c0_161 = arith.constant 0 : index
    %152 = vector.load %arg5[%c1_158, %c0_159, %c0_160, %c0_161] : memref<3x3x8x8xbf16, #tpu.memory_space<vmem>>, vector<1x1x8x8xbf16>
    %153 = vector.shape_cast %152 : vector<1x1x8x8xbf16> to vector<8x8xbf16>
    %c0_162 = arith.constant 0 : index
    %c0_163 = arith.constant 0 : index
    %c20_164 = arith.constant 20 : index
    %154 = vector.load %arg9[%c0_162, %c0_163, %c20_164] : memref<4x8x424xbf16, #tpu.memory_space<vmem>>, vector<1x8x384xbf16>
    %155 = vector.shape_cast %154 : vector<1x8x384xbf16> to vector<8x384xbf16>
    %cst_165 = arith.constant dense<0.000000e+00> : vector<8x384xf32>
    %156 = tpu.matmul %153, %155, %cst_165 {dimension_numbers = #tpu.dot_dimension_numbers<[1], [0], [0], [1], [0, 0, 1, 1], [], []>} : vector<8x8xbf16>, vector<8x384xbf16>, vector<8x384xf32> -> vector<8x384xf32>
    %157 = arith.addf %151, %156 : vector<8x384xf32>
    %c1_166 = arith.constant 1 : index
    %c1_167 = arith.constant 1 : index
    %c0_168 = arith.constant 0 : index
    %c0_169 = arith.constant 0 : index
    %158 = vector.load %arg5[%c1_166, %c1_167, %c0_168, %c0_169] : memref<3x3x8x8xbf16, #tpu.memory_space<vmem>>, vector<1x1x8x8xbf16>
    %159 = vector.shape_cast %158 : vector<1x1x8x8xbf16> to vector<8x8xbf16>
    %c1_170 = arith.constant 1 : index
    %c0_171 = arith.constant 0 : index
    %c20_172 = arith.constant 20 : index
    %160 = vector.load %arg9[%c1_170, %c0_171, %c20_172] : memref<4x8x424xbf16, #tpu.memory_space<vmem>>, vector<1x8x384xbf16>
    %161 = vector.shape_cast %160 : vector<1x8x384xbf16> to vector<8x384xbf16>
    %cst_173 = arith.constant dense<0.000000e+00> : vector<8x384xf32>
    %162 = tpu.matmul %159, %161, %cst_173 {dimension_numbers = #tpu.dot_dimension_numbers<[1], [0], [0], [1], [0, 0, 1, 1], [], []>} : vector<8x8xbf16>, vector<8x384xbf16>, vector<8x384xf32> -> vector<8x384xf32>
    %163 = arith.addf %157, %162 : vector<8x384xf32>
    %c1_174 = arith.constant 1 : index
    %c2_175 = arith.constant 2 : index
    %c0_176 = arith.constant 0 : index
    %c0_177 = arith.constant 0 : index
    %164 = vector.load %arg5[%c1_174, %c2_175, %c0_176, %c0_177] : memref<3x3x8x8xbf16, #tpu.memory_space<vmem>>, vector<1x1x8x8xbf16>
    %165 = vector.shape_cast %164 : vector<1x1x8x8xbf16> to vector<8x8xbf16>
    %c0_178 = arith.constant 0 : index
    %c0_179 = arith.constant 0 : index
    %c21_180 = arith.constant 21 : index
    %166 = vector.load %arg9[%c0_178, %c0_179, %c21_180] : memref<4x8x424xbf16, #tpu.memory_space<vmem>>, vector<1x8x384xbf16>
    %167 = vector.shape_cast %166 : vector<1x8x384xbf16> to vector<8x384xbf16>
    %cst_181 = arith.constant dense<0.000000e+00> : vector<8x384xf32>
    %168 = tpu.matmul %165, %167, %cst_181 {dimension_numbers = #tpu.dot_dimension_numbers<[1], [0], [0], [1], [0, 0, 1, 1], [], []>} : vector<8x8xbf16>, vector<8x384xbf16>, vector<8x384xf32> -> vector<8x384xf32>
    %169 = arith.addf %163, %168 : vector<8x384xf32>
    %c2_182 = arith.constant 2 : index
    %c0_183 = arith.constant 0 : index
    %c0_184 = arith.constant 0 : index
    %c0_185 = arith.constant 0 : index
    %170 = vector.load %arg5[%c2_182, %c0_183, %c0_184, %c0_185] : memref<3x3x8x8xbf16, #tpu.memory_space<vmem>>, vector<1x1x8x8xbf16>
    %171 = vector.shape_cast %170 : vector<1x1x8x8xbf16> to vector<8x8xbf16>
    %c2_186 = arith.constant 2 : index
    %c0_187 = arith.constant 0 : index
    %c20_188 = arith.constant 20 : index
    %172 = vector.load %arg9[%c2_186, %c0_187, %c20_188] : memref<4x8x424xbf16, #tpu.memory_space<vmem>>, vector<1x8x384xbf16>
    %173 = vector.shape_cast %172 : vector<1x8x384xbf16> to vector<8x384xbf16>
    %cst_189 = arith.constant dense<0.000000e+00> : vector<8x384xf32>
    %174 = tpu.matmul %171, %173, %cst_189 {dimension_numbers = #tpu.dot_dimension_numbers<[1], [0], [0], [1], [0, 0, 1, 1], [], []>} : vector<8x8xbf16>, vector<8x384xbf16>, vector<8x384xf32> -> vector<8x384xf32>
    %175 = arith.addf %169, %174 : vector<8x384xf32>
    %c2_190 = arith.constant 2 : index
    %c1_191 = arith.constant 1 : index
    %c0_192 = arith.constant 0 : index
    %c0_193 = arith.constant 0 : index
    %176 = vector.load %arg5[%c2_190, %c1_191, %c0_192, %c0_193] : memref<3x3x8x8xbf16, #tpu.memory_space<vmem>>, vector<1x1x8x8xbf16>
    %177 = vector.shape_cast %176 : vector<1x1x8x8xbf16> to vector<8x8xbf16>
    %c3_194 = arith.constant 3 : index
    %c0_195 = arith.constant 0 : index
    %c20_196 = arith.constant 20 : index
    %178 = vector.load %arg9[%c3_194, %c0_195, %c20_196] : memref<4x8x424xbf16, #tpu.memory_space<vmem>>, vector<1x8x384xbf16>
    %179 = vector.shape_cast %178 : vector<1x8x384xbf16> to vector<8x384xbf16>
    %cst_197 = arith.constant dense<0.000000e+00> : vector<8x384xf32>
    %180 = tpu.matmul %177, %179, %cst_197 {dimension_numbers = #tpu.dot_dimension_numbers<[1], [0], [0], [1], [0, 0, 1, 1], [], []>} : vector<8x8xbf16>, vector<8x384xbf16>, vector<8x384xf32> -> vector<8x384xf32>
    %181 = arith.addf %175, %180 : vector<8x384xf32>
    %c2_198 = arith.constant 2 : index
    %c2_199 = arith.constant 2 : index
    %c0_200 = arith.constant 0 : index
    %c0_201 = arith.constant 0 : index
    %182 = vector.load %arg5[%c2_198, %c2_199, %c0_200, %c0_201] : memref<3x3x8x8xbf16, #tpu.memory_space<vmem>>, vector<1x1x8x8xbf16>
    %183 = vector.shape_cast %182 : vector<1x1x8x8xbf16> to vector<8x8xbf16>
    %c2_202 = arith.constant 2 : index
    %c0_203 = arith.constant 0 : index
    %c21_204 = arith.constant 21 : index
    %184 = vector.load %arg9[%c2_202, %c0_203, %c21_204] : memref<4x8x424xbf16, #tpu.memory_space<vmem>>, vector<1x8x384xbf16>
    %185 = vector.shape_cast %184 : vector<1x8x384xbf16> to vector<8x384xbf16>
    %cst_205 = arith.constant dense<0.000000e+00> : vector<8x384xf32>
    %186 = tpu.matmul %183, %185, %cst_205 {dimension_numbers = #tpu.dot_dimension_numbers<[1], [0], [0], [1], [0, 0, 1, 1], [], []>} : vector<8x8xbf16>, vector<8x384xbf16>, vector<8x384xf32> -> vector<8x384xf32>
    %187 = arith.addf %181, %186 : vector<8x384xf32>
    %cst_206 = arith.constant 2.000000e-01 : f32
    %188 = vector.broadcast %cst_206 : f32 to vector<8x384xf32>
    %189 = arith.mulf %188, %187 : vector<8x384xf32>
    %190 = arith.maximumf %187, %189 : vector<8x384xf32>
    %191 = arith.truncf %190 : vector<8x384xf32> to vector<8x384xbf16>
    %c0_207 = arith.constant 0 : index
    %c0_208 = arith.constant 0 : index
    %c1_209 = arith.constant 1 : index
    %c0_210 = arith.constant 0 : index
    %c0_211 = arith.constant 0 : index
    %192 = vector.load %arg7[%c0_207, %c0_208, %c1_209, %c0_210, %c0_211] : memref<1x2x2x8x384xbf16, #tpu.memory_space<vmem>>, vector<1x1x1x8x384xbf16>
    %193 = vector.shape_cast %192 : vector<1x1x1x8x384xbf16> to vector<8x384xbf16>
    %194 = vector.shape_cast %191 : vector<8x384xbf16> to vector<1x1x1x8x384xbf16>
    tpu.vector_store %arg7[%c0_207, %c0_208, %c1_209, %c0_210, %c0_211], %194 {strides = array<i32>} : memref<1x2x2x8x384xbf16, #tpu.memory_space<vmem>>, vector<1x1x1x8x384xbf16>,
    %c0_212 = arith.constant 0 : index
    %c0_213 = arith.constant 0 : index
    %c0_214 = arith.constant 0 : index
    %c0_215 = arith.constant 0 : index
    %195 = vector.load %arg5[%c0_212, %c0_213, %c0_214, %c0_215] : memref<3x3x8x8xbf16, #tpu.memory_space<vmem>>, vector<1x1x8x8xbf16>
    %196 = vector.shape_cast %195 : vector<1x1x8x8xbf16> to vector<8x8xbf16>
    %c1_216 = arith.constant 1 : index
    %c0_217 = arith.constant 0 : index
    %c19_218 = arith.constant 19 : index
    %197 = vector.load %arg9[%c1_216, %c0_217, %c19_218] : memref<4x8x424xbf16, #tpu.memory_space<vmem>>, vector<1x8x384xbf16>
    %198 = vector.shape_cast %197 : vector<1x8x384xbf16> to vector<8x384xbf16>
    %cst_219 = arith.constant dense<0.000000e+00> : vector<8x384xf32>
    %199 = tpu.matmul %196, %198, %cst_219 {dimension_numbers = #tpu.dot_dimension_numbers<[1], [0], [0], [1], [0, 0, 1, 1], [], []>} : vector<8x8xbf16>, vector<8x384xbf16>, vector<8x384xf32> -> vector<8x384xf32>
    %200 = arith.addf %20, %199 : vector<8x384xf32>
    %c0_220 = arith.constant 0 : index
    %c1_221 = arith.constant 1 : index
    %c0_222 = arith.constant 0 : index
    %c0_223 = arith.constant 0 : index
    %201 = vector.load %arg5[%c0_220, %c1_221, %c0_222, %c0_223] : memref<3x3x8x8xbf16, #tpu.memory_space<vmem>>, vector<1x1x8x8xbf16>
    %202 = vector.shape_cast %201 : vector<1x1x8x8xbf16> to vector<8x8xbf16>
    %c0_224 = arith.constant 0 : index
    %c0_225 = arith.constant 0 : index
    %c20_226 = arith.constant 20 : index
    %203 = vector.load %arg9[%c0_224, %c0_225, %c20_226] : memref<4x8x424xbf16, #tpu.memory_space<vmem>>, vector<1x8x384xbf16>
    %204 = vector.shape_cast %203 : vector<1x8x384xbf16> to vector<8x384xbf16>
    %cst_227 = arith.constant dense<0.000000e+00> : vector<8x384xf32>
    %205 = tpu.matmul %202, %204, %cst_227 {dimension_numbers = #tpu.dot_dimension_numbers<[1], [0], [0], [1], [0, 0, 1, 1], [], []>} : vector<8x8xbf16>, vector<8x384xbf16>, vector<8x384xf32> -> vector<8x384xf32>
    %206 = arith.addf %200, %205 : vector<8x384xf32>
    %c0_228 = arith.constant 0 : index
    %c2_229 = arith.constant 2 : index
    %c0_230 = arith.constant 0 : index
    %c0_231 = arith.constant 0 : index
    %207 = vector.load %arg5[%c0_228, %c2_229, %c0_230, %c0_231] : memref<3x3x8x8xbf16, #tpu.memory_space<vmem>>, vector<1x1x8x8xbf16>
    %208 = vector.shape_cast %207 : vector<1x1x8x8xbf16> to vector<8x8xbf16>
    %c1_232 = arith.constant 1 : index
    %c0_233 = arith.constant 0 : index
    %c20_234 = arith.constant 20 : index
    %209 = vector.load %arg9[%c1_232, %c0_233, %c20_234] : memref<4x8x424xbf16, #tpu.memory_space<vmem>>, vector<1x8x384xbf16>
    %210 = vector.shape_cast %209 : vector<1x8x384xbf16> to vector<8x384xbf16>
    %cst_235 = arith.constant dense<0.000000e+00> : vector<8x384xf32>
    %211 = tpu.matmul %208, %210, %cst_235 {dimension_numbers = #tpu.dot_dimension_numbers<[1], [0], [0], [1], [0, 0, 1, 1], [], []>} : vector<8x8xbf16>, vector<8x384xbf16>, vector<8x384xf32> -> vector<8x384xf32>
    %212 = arith.addf %206, %211 : vector<8x384xf32>
    %c1_236 = arith.constant 1 : index
    %c0_237 = arith.constant 0 : index
    %c0_238 = arith.constant 0 : index
    %c0_239 = arith.constant 0 : index
    %213 = vector.load %arg5[%c1_236, %c0_237, %c0_238, %c0_239] : memref<3x3x8x8xbf16, #tpu.memory_space<vmem>>, vector<1x1x8x8xbf16>
    %214 = vector.shape_cast %213 : vector<1x1x8x8xbf16> to vector<8x8xbf16>
    %c3_240 = arith.constant 3 : index
    %c0_241 = arith.constant 0 : index
    %c19_242 = arith.constant 19 : index
    %215 = vector.load %arg9[%c3_240, %c0_241, %c19_242] : memref<4x8x424xbf16, #tpu.memory_space<vmem>>, vector<1x8x384xbf16>
    %216 = vector.shape_cast %215 : vector<1x8x384xbf16> to vector<8x384xbf16>
    %cst_243 = arith.constant dense<0.000000e+00> : vector<8x384xf32>
    %217 = tpu.matmul %214, %216, %cst_243 {dimension_numbers = #tpu.dot_dimension_numbers<[1], [0], [0], [1], [0, 0, 1, 1], [], []>} : vector<8x8xbf16>, vector<8x384xbf16>, vector<8x384xf32> -> vector<8x384xf32>
    %218 = arith.addf %212, %217 : vector<8x384xf32>
    %c1_244 = arith.constant 1 : index
    %c1_245 = arith.constant 1 : index
    %c0_246 = arith.constant 0 : index
    %c0_247 = arith.constant 0 : index
    %219 = vector.load %arg5[%c1_244, %c1_245, %c0_246, %c0_247] : memref<3x3x8x8xbf16, #tpu.memory_space<vmem>>, vector<1x1x8x8xbf16>
    %220 = vector.shape_cast %219 : vector<1x1x8x8xbf16> to vector<8x8xbf16>
    %c2_248 = arith.constant 2 : index
    %c0_249 = arith.constant 0 : index
    %c20_250 = arith.constant 20 : index
    %221 = vector.load %arg9[%c2_248, %c0_249, %c20_250] : memref<4x8x424xbf16, #tpu.memory_space<vmem>>, vector<1x8x384xbf16>
    %222 = vector.shape_cast %221 : vector<1x8x384xbf16> to vector<8x384xbf16>
    %cst_251 = arith.constant dense<0.000000e+00> : vector<8x384xf32>
    %223 = tpu.matmul %220, %222, %cst_251 {dimension_numbers = #tpu.dot_dimension_numbers<[1], [0], [0], [1], [0, 0, 1, 1], [], []>} : vector<8x8xbf16>, vector<8x384xbf16>, vector<8x384xf32> -> vector<8x384xf32>
    %224 = arith.addf %218, %223 : vector<8x384xf32>
    %c1_252 = arith.constant 1 : index
    %c2_253 = arith.constant 2 : index
    %c0_254 = arith.constant 0 : index
    %c0_255 = arith.constant 0 : index
    %225 = vector.load %arg5[%c1_252, %c2_253, %c0_254, %c0_255] : memref<3x3x8x8xbf16, #tpu.memory_space<vmem>>, vector<1x1x8x8xbf16>
    %226 = vector.shape_cast %225 : vector<1x1x8x8xbf16> to vector<8x8xbf16>
    %c3_256 = arith.constant 3 : index
    %c0_257 = arith.constant 0 : index
    %c20_258 = arith.constant 20 : index
    %227 = vector.load %arg9[%c3_256, %c0_257, %c20_258] : memref<4x8x424xbf16, #tpu.memory_space<vmem>>, vector<1x8x384xbf16>
    %228 = vector.shape_cast %227 : vector<1x8x384xbf16> to vector<8x384xbf16>
    %cst_259 = arith.constant dense<0.000000e+00> : vector<8x384xf32>
    %229 = tpu.matmul %226, %228, %cst_259 {dimension_numbers = #tpu.dot_dimension_numbers<[1], [0], [0], [1], [0, 0, 1, 1], [], []>} : vector<8x8xbf16>, vector<8x384xbf16>, vector<8x384xf32> -> vector<8x384xf32>
    %230 = arith.addf %224, %229 : vector<8x384xf32>
    %c2_260 = arith.constant 2 : index
    %c0_261 = arith.constant 0 : index
    %c0_262 = arith.constant 0 : index
    %c0_263 = arith.constant 0 : index
    %231 = vector.load %arg5[%c2_260, %c0_261, %c0_262, %c0_263] : memref<3x3x8x8xbf16, #tpu.memory_space<vmem>>, vector<1x1x8x8xbf16>
    %232 = vector.shape_cast %231 : vector<1x1x8x8xbf16> to vector<8x8xbf16>
    %c1_264 = arith.constant 1 : index
    %c0_265 = arith.constant 0 : index
    %c37 = arith.constant 37 : index
    %233 = vector.load %arg9[%c1_264, %c0_265, %c37] : memref<4x8x424xbf16, #tpu.memory_space<vmem>>, vector<1x8x384xbf16>
    %234 = vector.shape_cast %233 : vector<1x8x384xbf16> to vector<8x384xbf16>
    %cst_266 = arith.constant dense<0.000000e+00> : vector<8x384xf32>
    %235 = tpu.matmul %232, %234, %cst_266 {dimension_numbers = #tpu.dot_dimension_numbers<[1], [0], [0], [1], [0, 0, 1, 1], [], []>} : vector<8x8xbf16>, vector<8x384xbf16>, vector<8x384xf32> -> vector<8x384xf32>
    %236 = arith.addf %230, %235 : vector<8x384xf32>
    %c2_267 = arith.constant 2 : index
    %c1_268 = arith.constant 1 : index
    %c0_269 = arith.constant 0 : index
    %c0_270 = arith.constant 0 : index
    %237 = vector.load %arg5[%c2_267, %c1_268, %c0_269, %c0_270] : memref<3x3x8x8xbf16, #tpu.memory_space<vmem>>, vector<1x1x8x8xbf16>
    %238 = vector.shape_cast %237 : vector<1x1x8x8xbf16> to vector<8x8xbf16>
    %c0_271 = arith.constant 0 : index
    %c0_272 = arith.constant 0 : index
    %c38_273 = arith.constant 38 : index
    %239 = vector.load %arg9[%c0_271, %c0_272, %c38_273] : memref<4x8x424xbf16, #tpu.memory_space<vmem>>, vector<1x8x384xbf16>
    %240 = vector.shape_cast %239 : vector<1x8x384xbf16> to vector<8x384xbf16>
    %cst_274 = arith.constant dense<0.000000e+00> : vector<8x384xf32>
    %241 = tpu.matmul %238, %240, %cst_274 {dimension_numbers = #tpu.dot_dimension_numbers<[1], [0], [0], [1], [0, 0, 1, 1], [], []>} : vector<8x8xbf16>, vector<8x384xbf16>, vector<8x384xf32> -> vector<8x384xf32>
    %242 = arith.addf %236, %241 : vector<8x384xf32>
    %c2_275 = arith.constant 2 : index
    %c2_276 = arith.constant 2 : index
    %c0_277 = arith.constant 0 : index
    %c0_278 = arith.constant 0 : index
    %243 = vector.load %arg5[%c2_275, %c2_276, %c0_277, %c0_278] : memref<3x3x8x8xbf16, #tpu.memory_space<vmem>>, vector<1x1x8x8xbf16>
    %244 = vector.shape_cast %243 : vector<1x1x8x8xbf16> to vector<8x8xbf16>
    %c1_279 = arith.constant 1 : index
    %c0_280 = arith.constant 0 : index
    %c38_281 = arith.constant 38 : index
    %245 = vector.load %arg9[%c1_279, %c0_280, %c38_281] : memref<4x8x424xbf16, #tpu.memory_space<vmem>>, vector<1x8x384xbf16>
    %246 = vector.shape_cast %245 : vector<1x8x384xbf16> to vector<8x384xbf16>
    %cst_282 = arith.constant dense<0.000000e+00> : vector<8x384xf32>
    %247 = tpu.matmul %244, %246, %cst_282 {dimension_numbers = #tpu.dot_dimension_numbers<[1], [0], [0], [1], [0, 0, 1, 1], [], []>} : vector<8x8xbf16>, vector<8x384xbf16>, vector<8x384xf32> -> vector<8x384xf32>
    %248 = arith.addf %242, %247 : vector<8x384xf32>
    %cst_283 = arith.constant 2.000000e-01 : f32
    %249 = vector.broadcast %cst_283 : f32 to vector<8x384xf32>
    %250 = arith.mulf %249, %248 : vector<8x384xf32>
    %251 = arith.maximumf %248, %250 : vector<8x384xf32>
    %252 = arith.truncf %251 : vector<8x384xf32> to vector<8x384xbf16>
    %c0_284 = arith.constant 0 : index
    %c1_285 = arith.constant 1 : index
    %c0_286 = arith.constant 0 : index
    %c0_287 = arith.constant 0 : index
    %c0_288 = arith.constant 0 : index
    %253 = vector.load %arg7[%c0_284, %c1_285, %c0_286, %c0_287, %c0_288] : memref<1x2x2x8x384xbf16, #tpu.memory_space<vmem>>, vector<1x1x1x8x384xbf16>
    %254 = vector.shape_cast %253 : vector<1x1x1x8x384xbf16> to vector<8x384xbf16>
    %255 = vector.shape_cast %252 : vector<8x384xbf16> to vector<1x1x1x8x384xbf16>
    tpu.vector_store %arg7[%c0_284, %c1_285, %c0_286, %c0_287, %c0_288], %255 {strides = array<i32>} : memref<1x2x2x8x384xbf16, #tpu.memory_space<vmem>>, vector<1x1x1x8x384xbf16>,
    %c0_289 = arith.constant 0 : index
    %c0_290 = arith.constant 0 : index
    %c0_291 = arith.constant 0 : index
    %c0_292 = arith.constant 0 : index
    %256 = vector.load %arg5[%c0_289, %c0_290, %c0_291, %c0_292] : memref<3x3x8x8xbf16, #tpu.memory_space<vmem>>, vector<1x1x8x8xbf16>
    %257 = vector.shape_cast %256 : vector<1x1x8x8xbf16> to vector<8x8xbf16>
    %c0_293 = arith.constant 0 : index
    %c0_294 = arith.constant 0 : index
    %c20_295 = arith.constant 20 : index
    %258 = vector.load %arg9[%c0_293, %c0_294, %c20_295] : memref<4x8x424xbf16, #tpu.memory_space<vmem>>, vector<1x8x384xbf16>
    %259 = vector.shape_cast %258 : vector<1x8x384xbf16> to vector<8x384xbf16>
    %cst_296 = arith.constant dense<0.000000e+00> : vector<8x384xf32>
    %260 = tpu.matmul %257, %259, %cst_296 {dimension_numbers = #tpu.dot_dimension_numbers<[1], [0], [0], [1], [0, 0, 1, 1], [], []>} : vector<8x8xbf16>, vector<8x384xbf16>, vector<8x384xf32> -> vector<8x384xf32>
    %261 = arith.addf %20, %260 : vector<8x384xf32>
    %c0_297 = arith.constant 0 : index
    %c1_298 = arith.constant 1 : index
    %c0_299 = arith.constant 0 : index
    %c0_300 = arith.constant 0 : index
    %262 = vector.load %arg5[%c0_297, %c1_298, %c0_299, %c0_300] : memref<3x3x8x8xbf16, #tpu.memory_space<vmem>>, vector<1x1x8x8xbf16>
    %263 = vector.shape_cast %262 : vector<1x1x8x8xbf16> to vector<8x8xbf16>
    %c1_301 = arith.constant 1 : index
    %c0_302 = arith.constant 0 : index
    %c20_303 = arith.constant 20 : index
    %264 = vector.load %arg9[%c1_301, %c0_302, %c20_303] : memref<4x8x424xbf16, #tpu.memory_space<vmem>>, vector<1x8x384xbf16>
    %265 = vector.shape_cast %264 : vector<1x8x384xbf16> to vector<8x384xbf16>
    %cst_304 = arith.constant dense<0.000000e+00> : vector<8x384xf32>
    %266 = tpu.matmul %263, %265, %cst_304 {dimension_numbers = #tpu.dot_dimension_numbers<[1], [0], [0], [1], [0, 0, 1, 1], [], []>} : vector<8x8xbf16>, vector<8x384xbf16>, vector<8x384xf32> -> vector<8x384xf32>
    %267 = arith.addf %261, %266 : vector<8x384xf32>
    %c0_305 = arith.constant 0 : index
    %c2_306 = arith.constant 2 : index
    %c0_307 = arith.constant 0 : index
    %c0_308 = arith.constant 0 : index
    %268 = vector.load %arg5[%c0_305, %c2_306, %c0_307, %c0_308] : memref<3x3x8x8xbf16, #tpu.memory_space<vmem>>, vector<1x1x8x8xbf16>
    %269 = vector.shape_cast %268 : vector<1x1x8x8xbf16> to vector<8x8xbf16>
    %c0_309 = arith.constant 0 : index
    %c0_310 = arith.constant 0 : index
    %c21_311 = arith.constant 21 : index
    %270 = vector.load %arg9[%c0_309, %c0_310, %c21_311] : memref<4x8x424xbf16, #tpu.memory_space<vmem>>, vector<1x8x384xbf16>
    %271 = vector.shape_cast %270 : vector<1x8x384xbf16> to vector<8x384xbf16>
    %cst_312 = arith.constant dense<0.000000e+00> : vector<8x384xf32>
    %272 = tpu.matmul %269, %271, %cst_312 {dimension_numbers = #tpu.dot_dimension_numbers<[1], [0], [0], [1], [0, 0, 1, 1], [], []>} : vector<8x8xbf16>, vector<8x384xbf16>, vector<8x384xf32> -> vector<8x384xf32>
    %273 = arith.addf %267, %272 : vector<8x384xf32>
    %c1_313 = arith.constant 1 : index
    %c0_314 = arith.constant 0 : index
    %c0_315 = arith.constant 0 : index
    %c0_316 = arith.constant 0 : index
    %274 = vector.load %arg5[%c1_313, %c0_314, %c0_315, %c0_316] : memref<3x3x8x8xbf16, #tpu.memory_space<vmem>>, vector<1x1x8x8xbf16>
    %275 = vector.shape_cast %274 : vector<1x1x8x8xbf16> to vector<8x8xbf16>
    %c2_317 = arith.constant 2 : index
    %c0_318 = arith.constant 0 : index
    %c20_319 = arith.constant 20 : index
    %276 = vector.load %arg9[%c2_317, %c0_318, %c20_319] : memref<4x8x424xbf16, #tpu.memory_space<vmem>>, vector<1x8x384xbf16>
    %277 = vector.shape_cast %276 : vector<1x8x384xbf16> to vector<8x384xbf16>
    %cst_320 = arith.constant dense<0.000000e+00> : vector<8x384xf32>
    %278 = tpu.matmul %275, %277, %cst_320 {dimension_numbers = #tpu.dot_dimension_numbers<[1], [0], [0], [1], [0, 0, 1, 1], [], []>} : vector<8x8xbf16>, vector<8x384xbf16>, vector<8x384xf32> -> vector<8x384xf32>
    %279 = arith.addf %273, %278 : vector<8x384xf32>
    %c1_321 = arith.constant 1 : index
    %c1_322 = arith.constant 1 : index
    %c0_323 = arith.constant 0 : index
    %c0_324 = arith.constant 0 : index
    %280 = vector.load %arg5[%c1_321, %c1_322, %c0_323, %c0_324] : memref<3x3x8x8xbf16, #tpu.memory_space<vmem>>, vector<1x1x8x8xbf16>
    %281 = vector.shape_cast %280 : vector<1x1x8x8xbf16> to vector<8x8xbf16>
    %c3_325 = arith.constant 3 : index
    %c0_326 = arith.constant 0 : index
    %c20_327 = arith.constant 20 : index
    %282 = vector.load %arg9[%c3_325, %c0_326, %c20_327] : memref<4x8x424xbf16, #tpu.memory_space<vmem>>, vector<1x8x384xbf16>
    %283 = vector.shape_cast %282 : vector<1x8x384xbf16> to vector<8x384xbf16>
    %cst_328 = arith.constant dense<0.000000e+00> : vector<8x384xf32>
    %284 = tpu.matmul %281, %283, %cst_328 {dimension_numbers = #tpu.dot_dimension_numbers<[1], [0], [0], [1], [0, 0, 1, 1], [], []>} : vector<8x8xbf16>, vector<8x384xbf16>, vector<8x384xf32> -> vector<8x384xf32>
    %285 = arith.addf %279, %284 : vector<8x384xf32>
    %c1_329 = arith.constant 1 : index
    %c2_330 = arith.constant 2 : index
    %c0_331 = arith.constant 0 : index
    %c0_332 = arith.constant 0 : index
    %286 = vector.load %arg5[%c1_329, %c2_330, %c0_331, %c0_332] : memref<3x3x8x8xbf16, #tpu.memory_space<vmem>>, vector<1x1x8x8xbf16>
    %287 = vector.shape_cast %286 : vector<1x1x8x8xbf16> to vector<8x8xbf16>
    %c2_333 = arith.constant 2 : index
    %c0_334 = arith.constant 0 : index
    %c21_335 = arith.constant 21 : index
    %288 = vector.load %arg9[%c2_333, %c0_334, %c21_335] : memref<4x8x424xbf16, #tpu.memory_space<vmem>>, vector<1x8x384xbf16>
    %289 = vector.shape_cast %288 : vector<1x8x384xbf16> to vector<8x384xbf16>
    %cst_336 = arith.constant dense<0.000000e+00> : vector<8x384xf32>
    %290 = tpu.matmul %287, %289, %cst_336 {dimension_numbers = #tpu.dot_dimension_numbers<[1], [0], [0], [1], [0, 0, 1, 1], [], []>} : vector<8x8xbf16>, vector<8x384xbf16>, vector<8x384xf32> -> vector<8x384xf32>
    %291 = arith.addf %285, %290 : vector<8x384xf32>
    %c2_337 = arith.constant 2 : index
    %c0_338 = arith.constant 0 : index
    %c0_339 = arith.constant 0 : index
    %c0_340 = arith.constant 0 : index
    %292 = vector.load %arg5[%c2_337, %c0_338, %c0_339, %c0_340] : memref<3x3x8x8xbf16, #tpu.memory_space<vmem>>, vector<1x1x8x8xbf16>
    %293 = vector.shape_cast %292 : vector<1x1x8x8xbf16> to vector<8x8xbf16>
    %c0_341 = arith.constant 0 : index
    %c0_342 = arith.constant 0 : index
    %c38_343 = arith.constant 38 : index
    %294 = vector.load %arg9[%c0_341, %c0_342, %c38_343] : memref<4x8x424xbf16, #tpu.memory_space<vmem>>, vector<1x8x384xbf16>
    %295 = vector.shape_cast %294 : vector<1x8x384xbf16> to vector<8x384xbf16>
    %cst_344 = arith.constant dense<0.000000e+00> : vector<8x384xf32>
    %296 = tpu.matmul %293, %295, %cst_344 {dimension_numbers = #tpu.dot_dimension_numbers<[1], [0], [0], [1], [0, 0, 1, 1], [], []>} : vector<8x8xbf16>, vector<8x384xbf16>, vector<8x384xf32> -> vector<8x384xf32>
    %297 = arith.addf %291, %296 : vector<8x384xf32>
    %c2_345 = arith.constant 2 : index
    %c1_346 = arith.constant 1 : index
    %c0_347 = arith.constant 0 : index
    %c0_348 = arith.constant 0 : index
    %298 = vector.load %arg5[%c2_345, %c1_346, %c0_347, %c0_348] : memref<3x3x8x8xbf16, #tpu.memory_space<vmem>>, vector<1x1x8x8xbf16>
    %299 = vector.shape_cast %298 : vector<1x1x8x8xbf16> to vector<8x8xbf16>
    %c1_349 = arith.constant 1 : index
    %c0_350 = arith.constant 0 : index
    %c38_351 = arith.constant 38 : index
    %300 = vector.load %arg9[%c1_349, %c0_350, %c38_351] : memref<4x8x424xbf16, #tpu.memory_space<vmem>>, vector<1x8x384xbf16>
    %301 = vector.shape_cast %300 : vector<1x8x384xbf16> to vector<8x384xbf16>
    %cst_352 = arith.constant dense<0.000000e+00> : vector<8x384xf32>
    %302 = tpu.matmul %299, %301, %cst_352 {dimension_numbers = #tpu.dot_dimension_numbers<[1], [0], [0], [1], [0, 0, 1, 1], [], []>} : vector<8x8xbf16>, vector<8x384xbf16>, vector<8x384xf32> -> vector<8x384xf32>
    %303 = arith.addf %297, %302 : vector<8x384xf32>
    %c2_353 = arith.constant 2 : index
    %c2_354 = arith.constant 2 : index
    %c0_355 = arith.constant 0 : index
    %c0_356 = arith.constant 0 : index
    %304 = vector.load %arg5[%c2_353, %c2_354, %c0_355, %c0_356] : memref<3x3x8x8xbf16, #tpu.memory_space<vmem>>, vector<1x1x8x8xbf16>
    %305 = vector.shape_cast %304 : vector<1x1x8x8xbf16> to vector<8x8xbf16>
    %c0_357 = arith.constant 0 : index
    %c0_358 = arith.constant 0 : index
    %c39_359 = arith.constant 39 : index
    %306 = vector.load %arg9[%c0_357, %c0_358, %c39_359] : memref<4x8x424xbf16, #tpu.memory_space<vmem>>, vector<1x8x384xbf16>
    %307 = vector.shape_cast %306 : vector<1x8x384xbf16> to vector<8x384xbf16>
    %cst_360 = arith.constant dense<0.000000e+00> : vector<8x384xf32>
    %308 = tpu.matmul %305, %307, %cst_360 {dimension_numbers = #tpu.dot_dimension_numbers<[1], [0], [0], [1], [0, 0, 1, 1], [], []>} : vector<8x8xbf16>, vector<8x384xbf16>, vector<8x384xf32> -> vector<8x384xf32>
    %309 = arith.addf %303, %308 : vector<8x384xf32>
    %cst_361 = arith.constant 2.000000e-01 : f32
    %310 = vector.broadcast %cst_361 : f32 to vector<8x384xf32>
    %311 = arith.mulf %310, %309 : vector<8x384xf32>
    %312 = arith.maximumf %309, %311 : vector<8x384xf32>
    %313 = arith.truncf %312 : vector<8x384xf32> to vector<8x384xbf16>
    %c0_362 = arith.constant 0 : index
    %c1_363 = arith.constant 1 : index
    %c1_364 = arith.constant 1 : index
    %c0_365 = arith.constant 0 : index
    %c0_366 = arith.constant 0 : index
    %314 = vector.load %arg7[%c0_362, %c1_363, %c1_364, %c0_365, %c0_366] : memref<1x2x2x8x384xbf16, #tpu.memory_space<vmem>>, vector<1x1x1x8x384xbf16>
    %315 = vector.shape_cast %314 : vector<1x1x1x8x384xbf16> to vector<8x384xbf16>
    %316 = vector.shape_cast %313 : vector<8x384xbf16> to vector<1x1x1x8x384xbf16>
    tpu.vector_store %arg7[%c0_362, %c1_363, %c1_364, %c0_365, %c0_366], %316 {strides = array<i32>} : memref<1x2x2x8x384xbf16, #tpu.memory_space<vmem>>, vector<1x1x1x8x384xbf16>,
    return
  }
  func.func @transform_0(%arg0: i32) -> (i32, i32) {
    %c0_i32 = arith.constant 0 : i32
    %c0_i32_0 = arith.constant 0 : i32
    %c0_i32_1 = arith.constant 0 : i32
    return %c0_i32, %c0_i32_0 : i32, i32
  }
  func.func @transform_1(%arg0: i32) -> (i32, i32, i32) {
    %c0_i32 = arith.constant 0 : i32
    %c0_i32_0 = arith.constant 0 : i32
    %c0_i32_1 = arith.constant 0 : i32
    return %arg0, %c0_i32, %c0_i32_0 : i32, i32, i32
  }
  func.func @transform_2(%arg0: i32) -> (i32, i32, i32, i32) {
    %c0_i32 = arith.constant 0 : i32
    %c0_i32_0 = arith.constant 0 : i32
    %c0_i32_1 = arith.constant 0 : i32
    %c0_i32_2 = arith.constant 0 : i32
    %c0_i32_3 = arith.constant 0 : i32
    return %c0_i32, %c0_i32_0, %c0_i32_1, %c0_i32_2 : i32, i32, i32, i32
  }
  func.func @transform_3(%arg0: i32) -> (i32, i32) {
    %c0_i32 = arith.constant 0 : i32
    %c0_i32_0 = arith.constant 0 : i32
    %c0_i32_1 = arith.constant 0 : i32
    return %c0_i32, %c0_i32_0 : i32, i32
  }
  func.func @transform_4(%arg0: i32) -> (i32, i32, i32, i32) {
    %c0_i32 = arith.constant 0 : i32
    %c0_i32_0 = arith.constant 0 : i32
    %c0_i32_1 = arith.constant 0 : i32
    %c0_i32_2 = arith.constant 0 : i32
    %c0_i32_3 = arith.constant 0 : i32
    return %c0_i32, %c0_i32_0, %c0_i32_1, %c0_i32_2 : i32, i32, i32, i32
  }
  func.func @transform_5(%arg0: i32) -> (i32, i32) {
    %c0_i32 = arith.constant 0 : i32
    %c0_i32_0 = arith.constant 0 : i32
    %c0_i32_1 = arith.constant 0 : i32
    return %c0_i32, %c0_i32_0 : i32, i32
  }
  func.func @transform_6(%arg0: i32) -> (i32, i32, i32, i32, i32) {
    %c0_i32 = arith.constant 0 : i32
    %c0_i32_0 = arith.constant 0 : i32
    %c0_i32_1 = arith.constant 0 : i32
    %c0_i32_2 = arith.constant 0 : i32
    %c0_i32_3 = arith.constant 0 : i32
    return %arg0, %c0_i32, %c0_i32_0, %c0_i32_1, %c0_i32_2 : i32, i32, i32, i32, i32
  }
}

</mosaic_0001>

<llo_original>
// kernel: discriminator_decoder_block.1
$region0: #{discriminator_decoder_block.1}
  #allocation0 [shape = 'u32[]', space=smem, size = 0x4, offset = 0x4, fixed_abs, tag = 'smem constant byte address 0x4 - core index']
  #allocation1 [shape = 'u32[144,128]{1,0:T(1,128)}', space=vmem, size = 0x12000, scoped, tag = 'internal scratch']
  #allocation2 [shape = 'bf16[16,424]{1,0:T(8,128)(2,1)}', space=vmem, size = 0x4000, scoped, tag = 'scratch operand']
  #allocation3 [shape = 'bf16[4,8,424]{2,1,0:T(8,128)(2,1)}', space=vmem, size = 0x8000, scoped, tag = 'scratch operand']
  %s0 = inlined_call_operand.vmem [shape: f32[1,384], index: 0, kind: input, shape index: {}]
  %s1 = inlined_call_operand.vmem [shape: bf16[2,4,424], index: 1, kind: input, shape index: {}]
  %s2 = inlined_call_operand.vmem [shape: bf16[2,2,8,16], index: 2, kind: input, shape index: {}]
  %s3 = inlined_call_operand.vmem [shape: f32[8,1], index: 3, kind: input, shape index: {}]
  %s4 = inlined_call_operand.vmem [shape: bf16[3,3,8,8], index: 4, kind: input, shape index: {}]
  %s5 = inlined_call_operand.vmem [shape: f32[8,1], index: 5, kind: input, shape index: {}]
  %s6 = inlined_call_operand.vmem [shape: bf16[2,2,2,8,384], index: 6, kind: output, shape index: {}]
  %s7 = sld [smem:[#allocation0]]
  $region57: #{discriminator_decoder_block.1} parent=0
    _
  %s9 = ssub.s32 1, %s7
  %s10 = scalar_select 0, %s9, %s7
  loop: start=0, step=1, limit=4
  $region2: #{discriminator_decoder_block.1} parent=0 // loop_pre_header
    _
  $region3: #{discriminator_decoder_block.1} parent=0 // loop_header
    %s12 = sphi 0, %s16
    %p13 = scmp.ge.s32.totalorder %s12, 4
    %s20 = sphi 0, %s20
    %s22 = sphi 0, %s20
    %s23 = sphi 0, %s22
    %s37 = sphi 0, %s23
    %s43 = sphi 0, %s45
    %s46 = sphi 0, %s43
    %s47 = sphi 0, %s46
    %s63 = sphi 0, %s47
    %s67 = sphi 0, %s67
    %s69 = sphi 0, %s67
    %s70 = sphi 0, %s69
    %s84 = sphi 0, %s70
    %s88 = sphi 0, %s88
    %s90 = sphi 0, %s88
    %s91 = sphi 0, %s90
    %s105 = sphi 0, %s91
    %s109 = sphi 0, %s109
    %s111 = sphi 0, %s109
    %s112 = sphi 0, %s111
    %s126 = sphi 0, %s112
    %s130 = sphi 0, %s130
    %s132 = sphi 0, %s130
    %s133 = sphi 0, %s132
    %s147 = sphi 0, %s133
    %s153 = sphi 0, %s155
    %s156 = sphi 0, %s153
    %s157 = sphi 0, %s156
    %s173 = sphi 0, %s157
  $region4: #{discriminator_decoder_block.1} parent=0 // loop_header_branch
    %15 = sbr.rel (%p13) target = $region8
  $region5: #{discriminator_decoder_block.1} parent=0 // loop_body
    %s17 = ssub.s32 %s12, 1
    %s18 = ssub.s32 %s12, 2
    %s19 = sadd.s32 %s12, 1
    %s21 = sadd.s32 %s20, 1
    %p24 = scmp.eq.s32.totalorder %s12, 1
    %p25 = scmp.ne.s32.totalorder %s20, %s22
    %p26 = scmp.eq.s32.totalorder %s12, 0
    %p27 = por %p25, %p26
    %p28 = scmp.ne.s32.totalorder %s20, %s22
    %p29 = scmp.eq.s32.totalorder %s17, 1
    %p30 = por %p28, %p29
    %p31 = scmp.ne.s32.totalorder %s22, %s23
    %p32 = scmp.eq.s32.totalorder %s17, 0
    %p33 = por %p31, %p32
    %p34 = scmp.ne.s32.totalorder %s22, %s23
    %p35 = scmp.eq.s32.totalorder %s18, 1
    %p36 = por %p34, %p35
    %p38 = scmp.ne.s32.totalorder %s23, %s37
    %p39 = scmp.eq.s32.totalorder %s18, 0
    %p40 = por %p38, %p39
    %s41 = ssub.s32 %s12, %s19
    %p42 = scmp.eq.s32.totalorder %s41, 0
    %s44 = sadd.s32 %s43, 1
    %s45 = scalar_select %p42, %s43, %s44
    %p48 = pneg %p42
    %p49 = scmp.eq.s32.totalorder %s12, 1
    %p50 = por %p48, %p49
    %p51 = scmp.ne.s32.totalorder %s43, %s46
    %p52 = scmp.eq.s32.totalorder %s12, 0
    %p53 = por %p51, %p52
    %p54 = scmp.ne.s32.totalorder %s43, %s46
    %p55 = scmp.eq.s32.totalorder %s17, 1
    %p56 = por %p54, %p55
    %p57 = scmp.ne.s32.totalorder %s46, %s47
    %p58 = scmp.eq.s32.totalorder %s17, 0
    %p59 = por %p57, %p58
    %p60 = scmp.ne.s32.totalorder %s46, %s47
    %p61 = scmp.eq.s32.totalorder %s18, 1
    %p62 = por %p60, %p61
    %p64 = scmp.ne.s32.totalorder %s47, %s63
    %p65 = scmp.eq.s32.totalorder %s18, 0
    %p66 = por %p64, %p65
    %s68 = sadd.s32 %s67, 1
    %p71 = scmp.eq.s32.totalorder %s12, 1
    %p72 = scmp.ne.s32.totalorder %s67, %s69
    %p73 = scmp.eq.s32.totalorder %s12, 0
    %p74 = por %p72, %p73
    %p75 = scmp.ne.s32.totalorder %s67, %s69
    %p76 = scmp.eq.s32.totalorder %s17, 1
    %p77 = por %p75, %p76
    %p78 = scmp.ne.s32.totalorder %s69, %s70
    %p79 = scmp.eq.s32.totalorder %s17, 0
    %p80 = por %p78, %p79
    %p81 = scmp.ne.s32.totalorder %s69, %s70
    %p82 = scmp.eq.s32.totalorder %s18, 1
    %p83 = por %p81, %p82
    %p85 = scmp.ne.s32.totalorder %s70, %s84
    %p86 = scmp.eq.s32.totalorder %s18, 0
    %p87 = por %p85, %p86
    %s89 = sadd.s32 %s88, 1
    %p92 = scmp.eq.s32.totalorder %s12, 1
    %p93 = scmp.ne.s32.totalorder %s88, %s90
    %p94 = scmp.eq.s32.totalorder %s12, 0
    %p95 = por %p93, %p94
    %p96 = scmp.ne.s32.totalorder %s88, %s90
    %p97 = scmp.eq.s32.totalorder %s17, 1
    %p98 = por %p96, %p97
    %p99 = scmp.ne.s32.totalorder %s90, %s91
    %p100 = scmp.eq.s32.totalorder %s17, 0
    %p101 = por %p99, %p100
    %p102 = scmp.ne.s32.totalorder %s90, %s91
    %p103 = scmp.eq.s32.totalorder %s18, 1
    %p104 = por %p102, %p103
    %p106 = scmp.ne.s32.totalorder %s91, %s105
    %p107 = scmp.eq.s32.totalorder %s18, 0
    %p108 = por %p106, %p107
    %s110 = sadd.s32 %s109, 1
    %p113 = scmp.eq.s32.totalorder %s12, 1
    %p114 = scmp.ne.s32.totalorder %s109, %s111
    %p115 = scmp.eq.s32.totalorder %s12, 0
    %p116 = por %p114, %p115
    %p117 = scmp.ne.s32.totalorder %s109, %s111
    %p118 = scmp.eq.s32.totalorder %s17, 1
    %p119 = por %p117, %p118
    %p120 = scmp.ne.s32.totalorder %s111, %s112
    %p121 = scmp.eq.s32.totalorder %s17, 0
    %p122 = por %p120, %p121
    %p123 = scmp.ne.s32.totalorder %s111, %s112
    %p124 = scmp.eq.s32.totalorder %s18, 1
    %p125 = por %p123, %p124
    %p127 = scmp.ne.s32.totalorder %s112, %s126
    %p128 = scmp.eq.s32.totalorder %s18, 0
    %p129 = por %p127, %p128
    %s131 = sadd.s32 %s130, 1
    %p134 = scmp.eq.s32.totalorder %s12, 1
    %p135 = scmp.ne.s32.totalorder %s130, %s132
    %p136 = scmp.eq.s32.totalorder %s12, 0
    %p137 = por %p135, %p136
    %p138 = scmp.ne.s32.totalorder %s130, %s132
    %p139 = scmp.eq.s32.totalorder %s17, 1
    %p140 = por %p138, %p139
    %p141 = scmp.ne.s32.totalorder %s132, %s133
    %p142 = scmp.eq.s32.totalorder %s17, 0
    %p143 = por %p141, %p142
    %p144 = scmp.ne.s32.totalorder %s132, %s133
    %p145 = scmp.eq.s32.totalorder %s18, 1
    %p146 = por %p144, %p145
    %p148 = scmp.ne.s32.totalorder %s133, %s147
    %p149 = scmp.eq.s32.totalorder %s18, 0
    %p150 = por %p148, %p149
    %s151 = ssub.s32 %s12, %s19
    %p152 = scmp.eq.s32.totalorder %s151, 0
    %s154 = sadd.s32 %s153, 1
    %s155 = scalar_select %p152, %s153, %s154
    %p158 = pneg %p152
    %p159 = scmp.eq.s32.totalorder %s12, 1
    %p160 = por %p158, %p159
    %p161 = scmp.ne.s32.totalorder %s153, %s156
    %p162 = scmp.eq.s32.totalorder %s12, 0
    %p163 = por %p161, %p162
    %p164 = scmp.ne.s32.totalorder %s153, %s156
    %p165 = scmp.eq.s32.totalorder %s17, 1
    %p166 = por %p164, %p165
    %p167 = scmp.ne.s32.totalorder %s156, %s157
    %p168 = scmp.eq.s32.totalorder %s17, 0
    %p169 = por %p167, %p168
    %p170 = scmp.ne.s32.totalorder %s156, %s157
    %p171 = scmp.eq.s32.totalorder %s18, 1
    %p172 = por %p170, %p171
    %p174 = scmp.ne.s32.totalorder %s157, %s173
    %p175 = scmp.eq.s32.totalorder %s18, 0
    %p176 = por %p174, %p175
    %p177 = scmp.le.s32.totalorder 1, %s12
    %p178 = scmp.lt.s32.totalorder %s12, 3
    %p179 = pnand %p177, %p178
    %p180 = pneg %p179
    // Predicated region
    $region9: #{discriminator_decoder_block.1} parent=5 // pred_check
      _
    $region10: #{discriminator_decoder_block.1} parent=5 // pred_check_branch
      %182 = sbr.rel (%p179) target = $region12
    $region11: #{discriminator_decoder_block.1} parent=5 // pred_region
      %s183 = ssub.s32 %s12, 1
      // Predicated region
      $region13: #{discriminator_decoder_block.1} parent=11 // pred_check
        %p184 = pneg %p33
      $region14: #{discriminator_decoder_block.1} parent=11 // pred_check_branch
        %186 = sbr.rel (%p184) target = $region16
      $region15: #{discriminator_decoder_block.1} parent=11 // pred_region
        _
      $region16: #{discriminator_decoder_block.1} parent=11 // pred_fallthru
        _
      // Predicated region
      $region17: #{discriminator_decoder_block.1} parent=11 // pred_check
        %p187 = pneg %p80
      $region18: #{discriminator_decoder_block.1} parent=11 // pred_check_branch
        %189 = sbr.rel (%p187) target = $region20
      $region19: #{discriminator_decoder_block.1} parent=11 // pred_region
        _
      $region20: #{discriminator_decoder_block.1} parent=11 // pred_fallthru
        _
      // Predicated region
      $region21: #{discriminator_decoder_block.1} parent=11 // pred_check
        %p190 = pneg %p101
      $region22: #{discriminator_decoder_block.1} parent=11 // pred_check_branch
        %192 = sbr.rel (%p190) target = $region24
      $region23: #{discriminator_decoder_block.1} parent=11 // pred_region
        _
      $region24: #{discriminator_decoder_block.1} parent=11 // pred_fallthru
        _
      // Predicated region
      $region25: #{discriminator_decoder_block.1} parent=11 // pred_check
        %p193 = pneg %p122
      $region26: #{discriminator_decoder_block.1} parent=11 // pred_check_branch
        %195 = sbr.rel (%p193) target = $region28
      $region27: #{discriminator_decoder_block.1} parent=11 // pred_region
        _
      $region28: #{discriminator_decoder_block.1} parent=11 // pred_fallthru
        _
      // Predicated region
      $region29: #{discriminator_decoder_block.1} parent=11 // pred_check
        %p196 = pneg %p143
      $region30: #{discriminator_decoder_block.1} parent=11 // pred_check_branch
        %198 = sbr.rel (%p196) target = $region32
      $region31: #{discriminator_decoder_block.1} parent=11 // pred_region
        _
      $region32: #{discriminator_decoder_block.1} parent=11 // pred_fallthru
        _
    $region12: #{discriminator_decoder_block.1} parent=5 // pred_fallthru
      _
    %p199 = scmp.lt.s32.totalorder %s12, 2
    // Predicated region
    $region33: #{discriminator_decoder_block.1} parent=5 // pred_check
      %p200 = pneg %p199
    $region34: #{discriminator_decoder_block.1} parent=5 // pred_check_branch
      %202 = sbr.rel (%p200) target = $region36
    $region35: #{discriminator_decoder_block.1} parent=5 // pred_region
      // Predicated region
      $region37: #{discriminator_decoder_block.1} parent=35 // pred_check
        %p203 = pneg %p53
      $region38: #{discriminator_decoder_block.1} parent=35 // pred_check_branch
        %205 = sbr.rel (%p203) target = $region40
      $region39: #{discriminator_decoder_block.1} parent=35 // pred_region
        %p206 = scmp.lt.s32.totalorder %s12, 1
        %s207 = scalar_select %p206, %s12, 1
        %s208 = smul.addr %s207, 4
        %s209 = smul.addr %s208, 2
        %s210 = scalar_lea.vmem %s1, %s209
      $region40: #{discriminator_decoder_block.1} parent=35 // pred_fallthru
        _
    $region36: #{discriminator_decoder_block.1} parent=5 // pred_fallthru
      _
    %p211 = scmp.le.s32.totalorder 1, %s12
    %p212 = scmp.lt.s32.totalorder %s12, 3
    %p213 = pnand %p211, %p212
    %p214 = pneg %p213
    // Predicated region
    $region41: #{discriminator_decoder_block.1} parent=5 // pred_check
      _
    $region42: #{discriminator_decoder_block.1} parent=5 // pred_check_branch
      %216 = sbr.rel (%p213) target = $region44
    $region43: #{discriminator_decoder_block.1} parent=5 // pred_region
      %s217 = ssub.s32 %s12, 1
      %p218 = pneg %p33
      %p219 = pneg %p30
      %p220 = scmp.lt.s32.totalorder %s17, 1
      %s221 = scalar_select %p220, %s17, 1
      %s222 = smul.addr %s221, 4
      %s223 = smul.addr %s222, 2
      %s224 = scalar_lea.vmem %s1, %s223
      %p225 = pneg %p59
      %p226 = pneg %p56
      %p227 = pneg %p80
      %p228 = pneg %p77
      %p229 = pneg %p101
      %p230 = pneg %p98
      %p231 = pneg %p122
      %p232 = pneg %p119
      %p233 = pneg %p143
      %p234 = pneg %p140
      %p235 = pneg %p169
      %p236 = pneg %p166
      %p237 = scmp.lt.s32.totalorder %s17, 1
      %s238 = scalar_select %p237, %s17, 1
      %s239 = smul.addr %s238, 12
      %s240 = smul.addr %s239, 4
      %s241 = scalar_lea.vmem %s6, %s240
      %p242 = scmp.lt.s32.totalorder %s17, 1
      %s243 = scalar_select %p242, %s17, 1
      %s244 = smul.addr %s243, 4
      %s245 = smul.addr %s244, 2
      %s246 = scalar_lea.vmem %s1, %s245
      %p247 = scmp.lt.s32.totalorder %s17, 1
      %s248 = scalar_select %p247, %s17, 1
      %s249 = smul.addr %s248, 12
      %s250 = smul.addr %s249, 4
      %s251 = scalar_lea.vmem %s6, %s250
      %v253 = vld [vmem:[%s246] sm:$0xff]
      %v255 = vcombine.high %v253, %v253
      %v257 = vunpack.c.l.s4 1983009808
      %v258 = vunpack.c.0.s8 %v257
      %v259 = vlaneseq
      %v260 = vshrl.u32 %v259, 7
      %v261 = vsub.s32 %v258, %v260
      %v262 = vrot.slane %v253, %v261
      %v264 = vunpack.c.l.s4 1983009808
      %v265 = vunpack.c.0.s8 %v264
      %v266 = vlaneseq
      %v267 = vshrl.u32 %v266, 7
      %v268 = vsub.s32 %v265, %v267
      %v269 = vrot.slane %v255, %v268
      %272 = vst [vmem:[#allocation2] sm:$0x33] %v262
      %vm273 = vcmask 1041408
      %vm274 = vcmask 324612
      %vm275 = vmor %vm274, %vm273
      %276 = vst.msk [vmem:[#allocation2 + $0x8] sm:$0x33] %vm275, %v269
      %v277 = vld [vmem:[%s246] sm:$0xff]
      %v279 = vcombine.low %v277, %v277
      %v281 = vunpack.c.l.s4 1983009808
      %v282 = vunpack.c.0.s8 %v281
      %v283 = vlaneseq
      %v284 = vshrl.u32 %v283, 7
      %v285 = vsub.s32 %v282, %v284
      %v286 = vrot.slane %v279, %v285
      %v288 = vunpack.c.l.s4 1983009808
      %v289 = vunpack.c.0.s8 %v288
      %v290 = vlaneseq
      %v291 = vshrl.u32 %v290, 7
      %v292 = vsub.s32 %v289, %v291
      %v293 = vrot.slane %v277, %v292
      %294 = vrot.lane.b32.xlu0 %v286, 1
      %v295 = vpop.permute.xlu0 %294
      %296 = vrot.lane.b32.xlu0 %v293, 1
      %v297 = vpop.permute.xlu0 %296
      %v298 = vrot.slane %v295, 4
      %v299 = vrot.slane %v297, 4
      %vm300 = vcmask 7168
      %v301 = vsel %vm300, %v298, %v295
      %vm302 = vcmask 1043456
      %v303 = vsel %vm302, %v298, %v299
      %v304 = vsel %vm300, %v303, %v297
      %vm307 = vcmask 1043466
      %vm308 = vcmask 1047558
      %vm309 = vmor %vm308, %vm307
      %310 = vst.msk [vmem:[#allocation2] sm:$0xcc] %vm309, %v301
      %vm311 = vcmask 1043458
      %vm312 = vcmask 326662
      %vm313 = vmor %vm312, %vm311
      %314 = vst.msk [vmem:[#allocation2 + $0x8] sm:$0xcc] %vm313, %v304
      %v315 = vld [vmem:[%s246] sm:$0xff]
      %v317 = vcombine.high %v315, %v315
      %v319 = vunpack.c.l.s4 1983009808
      %v320 = vunpack.c.0.s8 %v319
      %v321 = vlaneseq
      %v322 = vshrl.u32 %v321, 7
      %v323 = vsub.s32 %v320, %v322
      %v324 = vrot.slane %v315, %v323
      %v326 = vunpack.c.l.s4 1983009808
      %v327 = vunpack.c.0.s8 %v326
      %v328 = vlaneseq
      %v329 = vshrl.u32 %v328, 7
      %v330 = vsub.s32 %v327, %v329
      %v331 = vrot.slane %v317, %v330
      %332 = vrot.lane.b32.xlu0 %v324, 18
      %v333 = vpop.permute.xlu0 %332
      %334 = vrot.lane.b32.xlu0 %v331, 18
      %v335 = vpop.permute.xlu0 %334
      %v336 = vrot.slane %v333, 4
      %v337 = vrot.slane %v335, 4
      %vm338 = vcmask 146432
      %v339 = vsel %vm338, %v336, %v333
      %v340 = vsel %vm302, %v336, %v337
      %v341 = vsel %vm338, %v340, %v335
      %vm344 = vcmask 1041552
      %vm345 = vcmask 1045508
      %vm346 = vmor %vm345, %vm344
      %347 = vst.msk [vmem:[#allocation2 + $0x10] sm:$0x33] %vm346, %v339
      %348 = vst.msk [vmem:[#allocation2 + $0x18] sm:$0x33] %vm275, %v341
      %v349 = vld [vmem:[%s246] sm:$0xff]
      %v351 = vcombine.low %v349, %v349
      %v353 = vunpack.c.l.s4 1983009808
      %v354 = vunpack.c.0.s8 %v353
      %v355 = vlaneseq
      %v356 = vshrl.u32 %v355, 7
      %v357 = vsub.s32 %v354, %v356
      %v358 = vrot.slane %v351, %v357
      %v360 = vunpack.c.l.s4 1983009808
      %v361 = vunpack.c.0.s8 %v360
      %v362 = vlaneseq
      %v363 = vshrl.u32 %v362, 7
      %v364 = vsub.s32 %v361, %v363
      %v365 = vrot.slane %v349, %v364
      %366 = vrot.lane.b32.xlu0 %v358, 19
      %v367 = vpop.permute.xlu0 %366
      %368 = vrot.lane.b32.xlu0 %v365, 19
      %v369 = vpop.permute.xlu0 %368
      %v370 = vrot.slane %v367, 4
      %v371 = vrot.slane %v369, 4
      %vm372 = vcmask 154624
      %v373 = vsel %vm372, %v370, %v367
      %v374 = vsel %vm302, %v370, %v371
      %v375 = vsel %vm372, %v374, %v369
      %vm378 = vcmask 1043610
      %vm379 = vmor %vm308, %vm378
      %380 = vst.msk [vmem:[#allocation2 + $0x10] sm:$0xcc] %vm379, %v373
      %381 = vst.msk [vmem:[#allocation2 + $0x18] sm:$0xcc] %vm313, %v375
      %v382 = vld [vmem:[%s0] sm:$0x7]
      %v384 = vlaneseq
      %v385 = vshrl.u32 %v384, 7
      %v386 = vsub.s32 0, %v385
      %v387 = vrot.slane %v382, %v386
      %v388 = vlaneseq
      %v389 = vshrl.u32 %v388, 7
      %v390 = vsub.s32 1, %v389
      %v391 = vrot.slane %v382, %v390
      %v392 = vlaneseq
      %v393 = vshrl.u32 %v392, 7
      %v394 = vsub.s32 2, %v393
      %v395 = vrot.slane %v382, %v394
      %v399 = vld [vmem:[%s3] sm:$0xff]
      %401 = vset.pattern.permute.xlu0 0
      %402 = vperm.xlu0 %401, %v399
      %v403 = vpop.permute.xlu0 %402
      %v405 = vld [vmem:[%s5] sm:$0xff]
      %407 = vset.pattern.permute.xlu0 0
      %408 = vperm.xlu0 %407, %v405
      %v409 = vpop.permute.xlu0 %408
      %v411 = vld [vmem:[%s2] sm:$0xf]
      %v412 = vld [vmem:[#allocation2] sm:$0xff]
      %v413 = vld [vmem:[#allocation2 + $0x8] sm:$0xff]
      %v414 = vld [vmem:[#allocation2 + $0x10] sm:$0xff]
      %v415 = vld [vmem:[#allocation2 + $0x18] sm:$0xff]
      %v420 = vunpack.c.l.b16 %v412
      %v421 = vunpack.c.h.b16 %v412
      %v422 = vunpack.c.l.b16 %v413
      %v423 = vunpack.c.h.b16 %v413
      %v424 = vunpack.c.l.b16 %v414
      %v425 = vunpack.c.h.b16 %v414
      %v426 = vunpack.c.l.b16 %v415
      %v427 = vunpack.c.h.b16 %v415
      %v428 = vpack.c.b16 %v424, %v420
      %v429 = vpack.c.b16 %v425, %v421
      %v430 = vpack.c.b16 %v426, %v422
      %v431 = vpack.c.b16 %v427, %v423
      %432 = vrot.lane.b32.xlu0 %v428, 108
      %v433 = vpop.permute.xlu0 %432
      %434 = vrot.lane.b32.xlu0 %v429, 108
      %v435 = vpop.permute.xlu0 %434
      %436 = vrot.lane.b32.xlu0 %v430, 108
      %v437 = vpop.permute.xlu0 %436
      %438 = vrot.lane.b32.xlu0 %v431, 108
      %v439 = vpop.permute.xlu0 %438
      %vm440 = vcmask 883712
      %v441 = vsel %vm440, %v433, %v435
      %v442 = vsel %vm440, %v435, %v437
      %v443 = vsel %vm440, %v437, %v439
      %vm447 = vcmask 130048
      %v449 = vsel %vm447, %v411, 0
      %451 = vmatprep.subr.bf16.mxu0 0
      %452 = vmatpush1.bf16.msra.mxu0 0
      %453 = vmatprep.subr.bf16.mxu0 0
      %454 = vmatpush1.bf16.msra.mxu0 0
      %455 = vmatprep.subr.bf16.mxu0 0
      %456 = vmatpush1.bf16.msra.mxu0 0
      %457 = vmatprep.subr.bf16.mxu0 0
      %458 = vmatpush1.bf16.msra.mxu0 0
      %459 = vmatprep.subr.bf16.mxu0 0
      %460 = vmatpush1.bf16.msra.mxu0 0
      %461 = vmatprep.subr.bf16.mxu0 0
      %462 = vmatpush1.bf16.msra.mxu0 0
      %463 = vmatprep.subr.bf16.mxu0 0
      %464 = vmatpush1.bf16.msra.mxu0 0
      %465 = vmatprep.subr.bf16.mxu0 %v442
      %466 = vmatpush1.bf16.msra.mxu0 %v441
      %467 = vmatprep.subr.bf16.mxu0 0
      %468 = vmatpush2.bf16.msra.mxu0 0
      %469 = vmatprep.subr.bf16.mxu0 0
      %470 = vmatpush2.bf16.msra.mxu0 0
      %471 = vmatprep.subr.bf16.mxu0 0
      %472 = vmatpush2.bf16.msra.mxu0 0
      %473 = vmatprep.subr.bf16.mxu0 0
      %474 = vmatpush2.bf16.msra.mxu0 0
      %475 = vmatprep.subr.bf16.mxu0 0
      %476 = vmatpush2.bf16.msra.mxu0 0
      %477 = vmatprep.subr.bf16.mxu0 0
      %478 = vmatpush2.bf16.msra.mxu0 0
      %479 = vmatprep.subr.bf16.mxu0 0
      %480 = vmatpush2.bf16.msra.mxu0 0
      %481 = vmatprep.subr.bf16.mxu0 0
      %482 = vmatpush2.bf16.msra.mxu0 0
      %483 = vmatprep.mubr.bf16.mxu0 0
      %484 = vmatmul.mubr.bf16.gmra.mxu0 %v449
      %v485 = vpop.f32.mrf.mxu0
      %v486 = vadd.f32 0.0, %v485
      %v487 = vpop.f32.mrf.mxu0
      %v488 = vadd.f32 0.0, %v487
      %v489 = vpop.f32.mrf.mxu0
      %v490 = vpop.f32.mrf.mxu0
      %491 = vdwg.mxu0
      %492 = vmatprep.subr.bf16.mxu0 0
      %493 = vmatpush1.bf16.msra.mxu0 0
      %494 = vmatprep.subr.bf16.mxu0 0
      %495 = vmatpush1.bf16.msra.mxu0 0
      %496 = vmatprep.subr.bf16.mxu0 0
      %497 = vmatpush1.bf16.msra.mxu0 0
      %498 = vmatprep.subr.bf16.mxu0 0
      %499 = vmatpush1.bf16.msra.mxu0 0
      %500 = vmatprep.subr.bf16.mxu0 0
      %501 = vmatpush1.bf16.msra.mxu0 0
      %502 = vmatprep.subr.bf16.mxu0 0
      %503 = vmatpush1.bf16.msra.mxu0 0
      %504 = vmatprep.subr.bf16.mxu0 0
      %505 = vmatpush1.bf16.msra.mxu0 0
      %506 = vmatprep.subr.bf16.mxu0 0
      %507 = vmatpush1.bf16.msra.mxu0 %v443
      %508 = vmatprep.subr.bf16.mxu0 0
      %509 = vmatpush2.bf16.msra.mxu0 0
      %510 = vmatprep.subr.bf16.mxu0 0
      %511 = vmatpush2.bf16.msra.mxu0 0
      %512 = vmatprep.subr.bf16.mxu0 0
      %513 = vmatpush2.bf16.msra.mxu0 0
      %514 = vmatprep.subr.bf16.mxu0 0
      %515 = vmatpush2.bf16.msra.mxu0 0
      %516 = vmatprep.subr.bf16.mxu0 0
      %517 = vmatpush2.bf16.msra.mxu0 0
      %518 = vmatprep.subr.bf16.mxu0 0
      %519 = vmatpush2.bf16.msra.mxu0 0
      %520 = vmatprep.subr.bf16.mxu0 0
      %521 = vmatpush2.bf16.msra.mxu0 0
      %522 = vmatprep.subr.bf16.mxu0 0
      %523 = vmatpush2.bf16.msra.mxu0 0
      %524 = vmatprep.mubr.bf16.mxu0 0
      %525 = vmatmul.mubr.bf16.gmra.mxu0 %v449
      %v526 = vpop.f32.mrf.mxu0
      %v527 = vadd.f32 0.0, %v526
      %v528 = vpop.f32.mrf.mxu0
      %v529 = vpop.f32.mrf.mxu0
      %v530 = vpop.f32.mrf.mxu0
      %531 = vdwg.mxu0
      %v532 = vadd.f32 %v403, %v486
      %v533 = vadd.f32 %v403, %v488
      %v534 = vadd.f32 %v403, %v527
      %v535 = vmul.f32 %v532, 0.2
      %v536 = vmul.f32 %v533, 0.2
      %v537 = vmul.f32 %v534, 0.2
      %v538 = vmax.f32 %v532, %v535
      %v539 = vmax.f32 %v533, %v536
      %v540 = vmax.f32 %v534, %v537
      %v541 = vmul.f32 %v538, %v387
      %v542 = vmul.f32 %v539, %v391
      %v543 = vmul.f32 %v540, %v395
      %v544 = vpack.c.bf16 %v541, %v541
      %v545 = vpack.c.bf16 %v542, %v542
      %v546 = vpack.c.bf16 %v543, %v543
      %v550 = vunpack.c.l.b16 %v544
      %v551 = vunpack.c.l.b16 %v545
      %v552 = vunpack.c.l.b16 %v546
      %v553 = vpack.c.b16 %v551, %v550
      %v554 = vpack.c.b16 %v552, %v552
      %555 = vrot.lane.b32.xlu0 %v553, 20
      %v556 = vpop.permute.xlu0 %555
      %557 = vrot.lane.b32.xlu0 %v554, 20
      %v558 = vpop.permute.xlu0 %557
      %v559 = vrot.slane %v556, 4
      %v560 = vrot.slane %v558, 4
      %vm561 = vcmask 162816
      %v562 = vsel %vm561, %v559, %v556
      %v563 = vsel %vm302, %v559, %v560
      %v564 = vsel %vm561, %v563, %v558
      %vm567 = vcmask 1043616
      %vm568 = vcmask 1047556
      %vm569 = vmor %vm568, %vm567
      %570 = vst.msk [vmem:[#allocation3] sm:$0xff] %vm569, %v562
      %vm571 = vcmask 1043456
      %vm572 = vcmask 162820
      %vm573 = vmor %vm572, %vm571
      %574 = vst.msk [vmem:[#allocation3 + $0x8] sm:$0xff] %vm573, %v564
      %s575 = scalar_lea.vmem %s2, 4
      %v576 = vld [vmem:[%s575] sm:$0xf]
      %v577 = vld [vmem:[#allocation2] sm:$0xff]
      %v578 = vld [vmem:[#allocation2 + $0x8] sm:$0xff]
      %v579 = vld [vmem:[#allocation2 + $0x10] sm:$0xff]
      %v580 = vld [vmem:[#allocation2 + $0x18] sm:$0xff]
      %v585 = vunpack.c.l.b16 %v577
      %v586 = vunpack.c.h.b16 %v577
      %v587 = vunpack.c.l.b16 %v578
      %v588 = vunpack.c.h.b16 %v578
      %v589 = vunpack.c.l.b16 %v579
      %v590 = vunpack.c.h.b16 %v579
      %v591 = vunpack.c.l.b16 %v580
      %v592 = vunpack.c.h.b16 %v580
      %v593 = vpack.c.b16 %v589, %v585
      %v594 = vpack.c.b16 %v590, %v586
      %v595 = vpack.c.b16 %v591, %v587
      %v596 = vpack.c.b16 %v592, %v588
      %597 = vrot.lane.b32.xlu0 %v593, 107
      %v598 = vpop.permute.xlu0 %597
      %599 = vrot.lane.b32.xlu0 %v594, 107
      %v600 = vpop.permute.xlu0 %599
      %601 = vrot.lane.b32.xlu0 %v595, 107
      %v602 = vpop.permute.xlu0 %601
      %603 = vrot.lane.b32.xlu0 %v596, 107
      %v604 = vpop.permute.xlu0 %603
      %vm605 = vcmask 875520
      %v606 = vsel %vm605, %v598, %v600
      %v607 = vsel %vm605, %v600, %v602
      %v608 = vsel %vm605, %v602, %v604
      %v613 = vsel %vm447, %v576, 0
      %615 = vmatprep.subr.bf16.mxu0 0
      %616 = vmatpush1.bf16.msra.mxu0 0
      %617 = vmatprep.subr.bf16.mxu0 0
      %618 = vmatpush1.bf16.msra.mxu0 0
      %619 = vmatprep.subr.bf16.mxu0 0
      %620 = vmatpush1.bf16.msra.mxu0 0
      %621 = vmatprep.subr.bf16.mxu0 0
      %622 = vmatpush1.bf16.msra.mxu0 0
      %623 = vmatprep.subr.bf16.mxu0 0
      %624 = vmatpush1.bf16.msra.mxu0 0
      %625 = vmatprep.subr.bf16.mxu0 0
      %626 = vmatpush1.bf16.msra.mxu0 0
      %627 = vmatprep.subr.bf16.mxu0 0
      %628 = vmatpush1.bf16.msra.mxu0 0
      %629 = vmatprep.subr.bf16.mxu0 %v607
      %630 = vmatpush1.bf16.msra.mxu0 %v606
      %631 = vmatprep.subr.bf16.mxu0 0
      %632 = vmatpush2.bf16.msra.mxu0 0
      %633 = vmatprep.subr.bf16.mxu0 0
      %634 = vmatpush2.bf16.msra.mxu0 0
      %635 = vmatprep.subr.bf16.mxu0 0
      %636 = vmatpush2.bf16.msra.mxu0 0
      %637 = vmatprep.subr.bf16.mxu0 0
      %638 = vmatpush2.bf16.msra.mxu0 0
      %639 = vmatprep.subr.bf16.mxu0 0
      %640 = vmatpush2.bf16.msra.mxu0 0
      %641 = vmatprep.subr.bf16.mxu0 0
      %642 = vmatpush2.bf16.msra.mxu0 0
      %643 = vmatprep.subr.bf16.mxu0 0
      %644 = vmatpush2.bf16.msra.mxu0 0
      %645 = vmatprep.subr.bf16.mxu0 0
      %646 = vmatpush2.bf16.msra.mxu0 0
      %647 = vmatprep.mubr.bf16.mxu0 0
      %648 = vmatmul.mubr.bf16.gmra.mxu0 %v613
      %v649 = vpop.f32.mrf.mxu0
      %v650 = vadd.f32 0.0, %v649
      %v651 = vpop.f32.mrf.mxu0
      %v652 = vadd.f32 0.0, %v651
      %v653 = vpop.f32.mrf.mxu0
      %v654 = vpop.f32.mrf.mxu0
      %655 = vdwg.mxu0
      %656 = vmatprep.subr.bf16.mxu0 0
      %657 = vmatpush1.bf16.msra.mxu0 0
      %658 = vmatprep.subr.bf16.mxu0 0
      %659 = vmatpush1.bf16.msra.mxu0 0
      %660 = vmatprep.subr.bf16.mxu0 0
      %661 = vmatpush1.bf16.msra.mxu0 0
      %662 = vmatprep.subr.bf16.mxu0 0
      %663 = vmatpush1.bf16.msra.mxu0 0
      %664 = vmatprep.subr.bf16.mxu0 0
      %665 = vmatpush1.bf16.msra.mxu0 0
      %666 = vmatprep.subr.bf16.mxu0 0
      %667 = vmatpush1.bf16.msra.mxu0 0
      %668 = vmatprep.subr.bf16.mxu0 0
      %669 = vmatpush1.bf16.msra.mxu0 0
      %670 = vmatprep.subr.bf16.mxu0 0
      %671 = vmatpush1.bf16.msra.mxu0 %v608
      %672 = vmatprep.subr.bf16.mxu0 0
      %673 = vmatpush2.bf16.msra.mxu0 0
      %674 = vmatprep.subr.bf16.mxu0 0
      %675 = vmatpush2.bf16.msra.mxu0 0
      %676 = vmatprep.subr.bf16.mxu0 0
      %677 = vmatpush2.bf16.msra.mxu0 0
      %678 = vmatprep.subr.bf16.mxu0 0
      %679 = vmatpush2.bf16.msra.mxu0 0
      %680 = vmatprep.subr.bf16.mxu0 0
      %681 = vmatpush2.bf16.msra.mxu0 0
      %682 = vmatprep.subr.bf16.mxu0 0
      %683 = vmatpush2.bf16.msra.mxu0 0
      %684 = vmatprep.subr.bf16.mxu0 0
      %685 = vmatpush2.bf16.msra.mxu0 0
      %686 = vmatprep.subr.bf16.mxu0 0
      %687 = vmatpush2.bf16.msra.mxu0 0
      %688 = vmatprep.mubr.bf16.mxu0 0
      %689 = vmatmul.mubr.bf16.gmra.mxu0 %v613
      %v690 = vpop.f32.mrf.mxu0
      %v691 = vadd.f32 0.0, %v690
      %v692 = vpop.f32.mrf.mxu0
      %v693 = vpop.f32.mrf.mxu0
      %v694 = vpop.f32.mrf.mxu0
      %695 = vdwg.mxu0
      %v696 = vadd.f32 %v403, %v650
      %v697 = vadd.f32 %v403, %v652
      %v698 = vadd.f32 %v403, %v691
      %v699 = vmul.f32 %v696, 0.2
      %v700 = vmul.f32 %v697, 0.2
      %v701 = vmul.f32 %v698, 0.2
      %v702 = vmax.f32 %v696, %v699
      %v703 = vmax.f32 %v697, %v700
      %v704 = vmax.f32 %v698, %v701
      %v705 = vmul.f32 %v702, %v387
      %v706 = vmul.f32 %v703, %v391
      %v707 = vmul.f32 %v704, %v395
      %v708 = vpack.c.bf16 %v705, %v705
      %v709 = vpack.c.bf16 %v706, %v706
      %v710 = vpack.c.bf16 %v707, %v707
      %v714 = vunpack.c.l.b16 %v708
      %v715 = vunpack.c.l.b16 %v709
      %v716 = vunpack.c.l.b16 %v710
      %v717 = vpack.c.b16 %v715, %v714
      %v718 = vpack.c.b16 %v716, %v716
      %719 = vrot.lane.b32.xlu0 %v717, 20
      %v720 = vpop.permute.xlu0 %719
      %721 = vrot.lane.b32.xlu0 %v718, 20
      %v722 = vpop.permute.xlu0 %721
      %v723 = vrot.slane %v720, 4
      %v724 = vrot.slane %v722, 4
      %v725 = vsel %vm561, %v723, %v720
      %v726 = vsel %vm302, %v723, %v724
      %v727 = vsel %vm561, %v726, %v722
      %s730 = scalar_lea.vmem [#allocation3], 16
      %731 = vst.msk [vmem:[%s730] sm:$0xff] %vm569, %v725
      %732 = vst.msk [vmem:[%s730 + $0x8] sm:$0xff] %vm573, %v727
      %s733 = scalar_lea.vmem %s2, 8
      %v734 = vld [vmem:[%s733] sm:$0xf]
      %v735 = vld [vmem:[#allocation2] sm:$0xff]
      %v736 = vld [vmem:[#allocation2 + $0x8] sm:$0xff]
      %v737 = vld [vmem:[#allocation2 + $0x10] sm:$0xff]
      %v738 = vld [vmem:[#allocation2 + $0x18] sm:$0xff]
      %v743 = vunpack.c.l.b16 %v735
      %v744 = vunpack.c.h.b16 %v735
      %v745 = vunpack.c.l.b16 %v736
      %v746 = vunpack.c.h.b16 %v736
      %v747 = vunpack.c.l.b16 %v737
      %v748 = vunpack.c.h.b16 %v737
      %v749 = vunpack.c.l.b16 %v738
      %v750 = vunpack.c.h.b16 %v738
      %v751 = vpack.c.b16 %v747, %v743
      %v752 = vpack.c.b16 %v748, %v744
      %v753 = vpack.c.b16 %v749, %v745
      %v754 = vpack.c.b16 %v750, %v746
      %755 = vrot.lane.b32.xlu0 %v751, 90
      %v756 = vpop.permute.xlu0 %755
      %757 = vrot.lane.b32.xlu0 %v752, 90
      %v758 = vpop.permute.xlu0 %757
      %759 = vrot.lane.b32.xlu0 %v753, 90
      %v760 = vpop.permute.xlu0 %759
      %761 = vrot.lane.b32.xlu0 %v754, 90
      %v762 = vpop.permute.xlu0 %761
      %vm763 = vcmask 736256
      %v764 = vsel %vm763, %v756, %v758
      %v765 = vsel %vm763, %v758, %v760
      %v766 = vsel %vm763, %v760, %v762
      %v771 = vsel %vm447, %v734, 0
      %773 = vmatprep.subr.bf16.mxu0 0
      %774 = vmatpush1.bf16.msra.mxu0 0
      %775 = vmatprep.subr.bf16.mxu0 0
      %776 = vmatpush1.bf16.msra.mxu0 0
      %777 = vmatprep.subr.bf16.mxu0 0
      %778 = vmatpush1.bf16.msra.mxu0 0
      %779 = vmatprep.subr.bf16.mxu0 0
      %780 = vmatpush1.bf16.msra.mxu0 0
      %781 = vmatprep.subr.bf16.mxu0 0
      %782 = vmatpush1.bf16.msra.mxu0 0
      %783 = vmatprep.subr.bf16.mxu0 0
      %784 = vmatpush1.bf16.msra.mxu0 0
      %785 = vmatprep.subr.bf16.mxu0 0
      %786 = vmatpush1.bf16.msra.mxu0 0
      %787 = vmatprep.subr.bf16.mxu0 %v765
      %788 = vmatpush1.bf16.msra.mxu0 %v764
      %789 = vmatprep.subr.bf16.mxu0 0
      %790 = vmatpush2.bf16.msra.mxu0 0
      %791 = vmatprep.subr.bf16.mxu0 0
      %792 = vmatpush2.bf16.msra.mxu0 0
      %793 = vmatprep.subr.bf16.mxu0 0
      %794 = vmatpush2.bf16.msra.mxu0 0
      %795 = vmatprep.subr.bf16.mxu0 0
      %796 = vmatpush2.bf16.msra.mxu0 0
      %797 = vmatprep.subr.bf16.mxu0 0
      %798 = vmatpush2.bf16.msra.mxu0 0
      %799 = vmatprep.subr.bf16.mxu0 0
      %800 = vmatpush2.bf16.msra.mxu0 0
      %801 = vmatprep.subr.bf16.mxu0 0
      %802 = vmatpush2.bf16.msra.mxu0 0
      %803 = vmatprep.subr.bf16.mxu0 0
      %804 = vmatpush2.bf16.msra.mxu0 0
      %805 = vmatprep.mubr.bf16.mxu0 0
      %806 = vmatmul.mubr.bf16.gmra.mxu0 %v771
      %v807 = vpop.f32.mrf.mxu0
      %v808 = vadd.f32 0.0, %v807
      %v809 = vpop.f32.mrf.mxu0
      %v810 = vadd.f32 0.0, %v809
      %v811 = vpop.f32.mrf.mxu0
      %v812 = vpop.f32.mrf.mxu0
      %813 = vdwg.mxu0
      %814 = vmatprep.subr.bf16.mxu0 0
      %815 = vmatpush1.bf16.msra.mxu0 0
      %816 = vmatprep.subr.bf16.mxu0 0
      %817 = vmatpush1.bf16.msra.mxu0 0
      %818 = vmatprep.subr.bf16.mxu0 0
      %819 = vmatpush1.bf16.msra.mxu0 0
      %820 = vmatprep.subr.bf16.mxu0 0
      %821 = vmatpush1.bf16.msra.mxu0 0
      %822 = vmatprep.subr.bf16.mxu0 0
      %823 = vmatpush1.bf16.msra.mxu0 0
      %824 = vmatprep.subr.bf16.mxu0 0
      %825 = vmatpush1.bf16.msra.mxu0 0
      %826 = vmatprep.subr.bf16.mxu0 0
      %827 = vmatpush1.bf16.msra.mxu0 0
      %828 = vmatprep.subr.bf16.mxu0 0
      %829 = vmatpush1.bf16.msra.mxu0 %v766
      %830 = vmatprep.subr.bf16.mxu0 0
      %831 = vmatpush2.bf16.msra.mxu0 0
      %832 = vmatprep.subr.bf16.mxu0 0
      %833 = vmatpush2.bf16.msra.mxu0 0
      %834 = vmatprep.subr.bf16.mxu0 0
      %835 = vmatpush2.bf16.msra.mxu0 0
      %836 = vmatprep.subr.bf16.mxu0 0
      %837 = vmatpush2.bf16.msra.mxu0 0
      %838 = vmatprep.subr.bf16.mxu0 0
      %839 = vmatpush2.bf16.msra.mxu0 0
      %840 = vmatprep.subr.bf16.mxu0 0
      %841 = vmatpush2.bf16.msra.mxu0 0
      %842 = vmatprep.subr.bf16.mxu0 0
      %843 = vmatpush2.bf16.msra.mxu0 0
      %844 = vmatprep.subr.bf16.mxu0 0
      %845 = vmatpush2.bf16.msra.mxu0 0
      %846 = vmatprep.mubr.bf16.mxu0 0
      %847 = vmatmul.mubr.bf16.gmra.mxu0 %v771
      %v848 = vpop.f32.mrf.mxu0
      %v849 = vadd.f32 0.0, %v848
      %v850 = vpop.f32.mrf.mxu0
      %v851 = vpop.f32.mrf.mxu0
      %v852 = vpop.f32.mrf.mxu0
      %853 = vdwg.mxu0
      %v854 = vadd.f32 %v403, %v808
      %v855 = vadd.f32 %v403, %v810
      %v856 = vadd.f32 %v403, %v849
      %v857 = vmul.f32 %v854, 0.2
      %v858 = vmul.f32 %v855, 0.2
      %v859 = vmul.f32 %v856, 0.2
      %v860 = vmax.f32 %v854, %v857
      %v861 = vmax.f32 %v855, %v858
      %v862 = vmax.f32 %v856, %v859
      %v863 = vmul.f32 %v860, %v387
      %v864 = vmul.f32 %v861, %v391
      %v865 = vmul.f32 %v862, %v395
      %v866 = vpack.c.bf16 %v863, %v863
      %v867 = vpack.c.bf16 %v864, %v864
      %v868 = vpack.c.bf16 %v865, %v865
      %v872 = vunpack.c.l.b16 %v866
      %v873 = vunpack.c.l.b16 %v867
      %v874 = vunpack.c.l.b16 %v868
      %v875 = vpack.c.b16 %v873, %v872
      %v876 = vpack.c.b16 %v874, %v874
      %877 = vrot.lane.b32.xlu0 %v875, 20
      %v878 = vpop.permute.xlu0 %877
      %879 = vrot.lane.b32.xlu0 %v876, 20
      %v880 = vpop.permute.xlu0 %879
      %v881 = vrot.slane %v878, 4
      %v882 = vrot.slane %v880, 4
      %v883 = vsel %vm561, %v881, %v878
      %v884 = vsel %vm302, %v881, %v882
      %v885 = vsel %vm561, %v884, %v880
      %s888 = scalar_lea.vmem [#allocation3], 32
      %889 = vst.msk [vmem:[%s888] sm:$0xff] %vm569, %v883
      %890 = vst.msk [vmem:[%s888 + $0x8] sm:$0xff] %vm573, %v885
      %s891 = scalar_lea.vmem %s2, 12
      %v892 = vld [vmem:[%s891] sm:$0xf]
      %v893 = vld [vmem:[#allocation2] sm:$0xff]
      %v894 = vld [vmem:[#allocation2 + $0x8] sm:$0xff]
      %v895 = vld [vmem:[#allocation2 + $0x10] sm:$0xff]
      %v896 = vld [vmem:[#allocation2 + $0x18] sm:$0xff]
      %v901 = vunpack.c.l.b16 %v893
      %v902 = vunpack.c.h.b16 %v893
      %v903 = vunpack.c.l.b16 %v894
      %v904 = vunpack.c.h.b16 %v894
      %v905 = vunpack.c.l.b16 %v895
      %v906 = vunpack.c.h.b16 %v895
      %v907 = vunpack.c.l.b16 %v896
      %v908 = vunpack.c.h.b16 %v896
      %v909 = vpack.c.b16 %v905, %v901
      %v910 = vpack.c.b16 %v906, %v902
      %v911 = vpack.c.b16 %v907, %v903
      %v912 = vpack.c.b16 %v908, %v904
      %913 = vrot.lane.b32.xlu0 %v909, 89
      %v914 = vpop.permute.xlu0 %913
      %915 = vrot.lane.b32.xlu0 %v910, 89
      %v916 = vpop.permute.xlu0 %915
      %917 = vrot.lane.b32.xlu0 %v911, 89
      %v918 = vpop.permute.xlu0 %917
      %919 = vrot.lane.b32.xlu0 %v912, 89
      %v920 = vpop.permute.xlu0 %919
      %vm921 = vcmask 728064
      %v922 = vsel %vm921, %v914, %v916
      %v923 = vsel %vm921, %v916, %v918
      %v924 = vsel %vm921, %v918, %v920
      %v929 = vsel %vm447, %v892, 0
      %931 = vmatprep.subr.bf16.mxu0 0
      %932 = vmatpush1.bf16.msra.mxu0 0
      %933 = vmatprep.subr.bf16.mxu0 0
      %934 = vmatpush1.bf16.msra.mxu0 0
      %935 = vmatprep.subr.bf16.mxu0 0
      %936 = vmatpush1.bf16.msra.mxu0 0
      %937 = vmatprep.subr.bf16.mxu0 0
      %938 = vmatpush1.bf16.msra.mxu0 0
      %939 = vmatprep.subr.bf16.mxu0 0
      %940 = vmatpush1.bf16.msra.mxu0 0
      %941 = vmatprep.subr.bf16.mxu0 0
      %942 = vmatpush1.bf16.msra.mxu0 0
      %943 = vmatprep.subr.bf16.mxu0 0
      %944 = vmatpush1.bf16.msra.mxu0 0
      %945 = vmatprep.subr.bf16.mxu0 %v923
      %946 = vmatpush1.bf16.msra.mxu0 %v922
      %947 = vmatprep.subr.bf16.mxu0 0
      %948 = vmatpush2.bf16.msra.mxu0 0
      %949 = vmatprep.subr.bf16.mxu0 0
      %950 = vmatpush2.bf16.msra.mxu0 0
      %951 = vmatprep.subr.bf16.mxu0 0
      %952 = vmatpush2.bf16.msra.mxu0 0
      %953 = vmatprep.subr.bf16.mxu0 0
      %954 = vmatpush2.bf16.msra.mxu0 0
      %955 = vmatprep.subr.bf16.mxu0 0
      %956 = vmatpush2.bf16.msra.mxu0 0
      %957 = vmatprep.subr.bf16.mxu0 0
      %958 = vmatpush2.bf16.msra.mxu0 0
      %959 = vmatprep.subr.bf16.mxu0 0
      %960 = vmatpush2.bf16.msra.mxu0 0
      %961 = vmatprep.subr.bf16.mxu0 0
      %962 = vmatpush2.bf16.msra.mxu0 0
      %963 = vmatprep.mubr.bf16.mxu0 0
      %964 = vmatmul.mubr.bf16.gmra.mxu0 %v929
      %v965 = vpop.f32.mrf.mxu0
      %v966 = vadd.f32 0.0, %v965
      %v967 = vpop.f32.mrf.mxu0
      %v968 = vadd.f32 0.0, %v967
      %v969 = vpop.f32.mrf.mxu0
      %v970 = vpop.f32.mrf.mxu0
      %971 = vdwg.mxu0
      %972 = vmatprep.subr.bf16.mxu0 0
      %973 = vmatpush1.bf16.msra.mxu0 0
      %974 = vmatprep.subr.bf16.mxu0 0
      %975 = vmatpush1.bf16.msra.mxu0 0
      %976 = vmatprep.subr.bf16.mxu0 0
      %977 = vmatpush1.bf16.msra.mxu0 0
      %978 = vmatprep.subr.bf16.mxu0 0
      %979 = vmatpush1.bf16.msra.mxu0 0
      %980 = vmatprep.subr.bf16.mxu0 0
      %981 = vmatpush1.bf16.msra.mxu0 0
      %982 = vmatprep.subr.bf16.mxu0 0
      %983 = vmatpush1.bf16.msra.mxu0 0
      %984 = vmatprep.subr.bf16.mxu0 0
      %985 = vmatpush1.bf16.msra.mxu0 0
      %986 = vmatprep.subr.bf16.mxu0 0
      %987 = vmatpush1.bf16.msra.mxu0 %v924
      %988 = vmatprep.subr.bf16.mxu0 0
      %989 = vmatpush2.bf16.msra.mxu0 0
      %990 = vmatprep.subr.bf16.mxu0 0
      %991 = vmatpush2.bf16.msra.mxu0 0
      %992 = vmatprep.subr.bf16.mxu0 0
      %993 = vmatpush2.bf16.msra.mxu0 0
      %994 = vmatprep.subr.bf16.mxu0 0
      %995 = vmatpush2.bf16.msra.mxu0 0
      %996 = vmatprep.subr.bf16.mxu0 0
      %997 = vmatpush2.bf16.msra.mxu0 0
      %998 = vmatprep.subr.bf16.mxu0 0
      %999 = vmatpush2.bf16.msra.mxu0 0
      %1000 = vmatprep.subr.bf16.mxu0 0
      %1001 = vmatpush2.bf16.msra.mxu0 0
      %1002 = vmatprep.subr.bf16.mxu0 0
      %1003 = vmatpush2.bf16.msra.mxu0 0
      %1004 = vmatprep.mubr.bf16.mxu0 0
      %1005 = vmatmul.mubr.bf16.gmra.mxu0 %v929
      %v1006 = vpop.f32.mrf.mxu0
      %v1007 = vadd.f32 0.0, %v1006
      %v1008 = vpop.f32.mrf.mxu0
      %v1009 = vpop.f32.mrf.mxu0
      %v1010 = vpop.f32.mrf.mxu0
      %1011 = vdwg.mxu0
      %v1012 = vadd.f32 %v403, %v966
      %v1013 = vadd.f32 %v403, %v968
      %v1014 = vadd.f32 %v403, %v1007
      %v1015 = vmul.f32 %v1012, 0.2
      %v1016 = vmul.f32 %v1013, 0.2
      %v1017 = vmul.f32 %v1014, 0.2
      %v1018 = vmax.f32 %v1012, %v1015
      %v1019 = vmax.f32 %v1013, %v1016
      %v1020 = vmax.f32 %v1014, %v1017
      %v1021 = vmul.f32 %v1018, %v387
      %v1022 = vmul.f32 %v1019, %v391
      %v1023 = vmul.f32 %v1020, %v395
      %v1024 = vpack.c.bf16 %v1021, %v1021
      %v1025 = vpack.c.bf16 %v1022, %v1022
      %v1026 = vpack.c.bf16 %v1023, %v1023
      %v1030 = vunpack.c.l.b16 %v1024
      %v1031 = vunpack.c.l.b16 %v1025
      %v1032 = vunpack.c.l.b16 %v1026
      %v1033 = vpack.c.b16 %v1031, %v1030
      %v1034 = vpack.c.b16 %v1032, %v1032
      %1035 = vrot.lane.b32.xlu0 %v1033, 20
      %v1036 = vpop.permute.xlu0 %1035
      %1037 = vrot.lane.b32.xlu0 %v1034, 20
      %v1038 = vpop.permute.xlu0 %1037
      %v1039 = vrot.slane %v1036, 4
      %v1040 = vrot.slane %v1038, 4
      %v1041 = vsel %vm561, %v1039, %v1036
      %v1042 = vsel %vm302, %v1039, %v1040
      %v1043 = vsel %vm561, %v1042, %v1038
      %s1046 = scalar_lea.vmem [#allocation3], 48
      %1047 = vst.msk [vmem:[%s1046] sm:$0xff] %vm569, %v1041
      %1048 = vst.msk [vmem:[%s1046 + $0x8] sm:$0xff] %vm573, %v1043
      %v1049 = vld [vmem:[%s4] sm:$0xf]
      %v1050 = vld [vmem:[%s1046] sm:$0xff]
      %v1051 = vld [vmem:[%s1046 + $0x8] sm:$0xff]
      %v1054 = vunpack.c.l.b16 %v1050
      %v1055 = vunpack.c.h.b16 %v1050
      %v1056 = vunpack.c.l.b16 %v1051
      %v1057 = vunpack.c.h.b16 %v1051
      %v1058 = vpack.c.b16 %v1054, %v1054
      %v1059 = vpack.c.b16 %v1055, %v1055
      %v1060 = vpack.c.b16 %v1056, %v1056
      %v1061 = vpack.c.b16 %v1057, %v1057
      %1062 = vrot.lane.b32.xlu0 %v1058, 127
      %v1063 = vpop.permute.xlu0 %1062
      %1064 = vrot.lane.b32.xlu0 %v1059, 127
      %v1065 = vpop.permute.xlu0 %1064
      %1066 = vrot.lane.b32.xlu0 %v1060, 127
      %v1067 = vpop.permute.xlu0 %1066
      %1068 = vrot.lane.b32.xlu0 %v1061, 127
      %v1069 = vpop.permute.xlu0 %1068
      %vm1070 = vcmask 1039360
      %v1071 = vsel %vm1070, %v1063, %v1065
      %v1072 = vsel %vm1070, %v1065, %v1067
      %v1073 = vsel %vm1070, %v1067, %v1069
      %vm1074 = vcmask 64512
      %v1076 = vsel %vm1074, %v1049, 0
      %v1079 = vsel %vm571, %v1071, 0
      %v1082 = vsel %vm571, %v1072, 0
      %v1085 = vsel %vm571, %v1073, 0
      %1087 = vmatprep.subr.bf16.mxu0 0
      %1088 = vmatpush1.bf16.msra.mxu0 0
      %1089 = vmatprep.subr.bf16.mxu0 0
      %1090 = vmatpush1.bf16.msra.mxu0 0
      %1091 = vmatprep.subr.bf16.mxu0 0
      %1092 = vmatpush1.bf16.msra.mxu0 0
      %1093 = vmatprep.subr.bf16.mxu0 0
      %1094 = vmatpush1.bf16.msra.mxu0 0
      %1095 = vmatprep.subr.bf16.mxu0 0
      %1096 = vmatpush1.bf16.msra.mxu0 0
      %1097 = vmatprep.subr.bf16.mxu0 0
      %1098 = vmatpush1.bf16.msra.mxu0 0
      %1099 = vmatprep.subr.bf16.mxu0 0
      %1100 = vmatpush1.bf16.msra.mxu0 0
      %1101 = vmatprep.subr.bf16.mxu0 %v1082
      %1102 = vmatpush1.bf16.msra.mxu0 %v1079
      %1103 = vmatprep.subr.bf16.mxu0 0
      %1104 = vmatpush2.bf16.msra.mxu0 0
      %1105 = vmatprep.subr.bf16.mxu0 0
      %1106 = vmatpush2.bf16.msra.mxu0 0
      %1107 = vmatprep.subr.bf16.mxu0 0
      %1108 = vmatpush2.bf16.msra.mxu0 0
      %1109 = vmatprep.subr.bf16.mxu0 0
      %1110 = vmatpush2.bf16.msra.mxu0 0
      %1111 = vmatprep.subr.bf16.mxu0 0
      %1112 = vmatpush2.bf16.msra.mxu0 0
      %1113 = vmatprep.subr.bf16.mxu0 0
      %1114 = vmatpush2.bf16.msra.mxu0 0
      %1115 = vmatprep.subr.bf16.mxu0 0
      %1116 = vmatpush2.bf16.msra.mxu0 0
      %1117 = vmatprep.subr.bf16.mxu0 0
      %1118 = vmatpush2.bf16.msra.mxu0 0
      %1119 = vmatprep.mubr.bf16.mxu0 0
      %1120 = vmatmul.mubr.bf16.gmra.mxu0 %v1076
      %v1121 = vpop.f32.mrf.mxu0
      %v1122 = vadd.f32 0.0, %v1121
      %v1123 = vpop.f32.mrf.mxu0
      %v1124 = vadd.f32 0.0, %v1123
      %v1125 = vpop.f32.mrf.mxu0
      %v1126 = vpop.f32.mrf.mxu0
      %1127 = vdwg.mxu0
      %1128 = vmatprep.subr.bf16.mxu0 0
      %1129 = vmatpush1.bf16.msra.mxu0 0
      %1130 = vmatprep.subr.bf16.mxu0 0
      %1131 = vmatpush1.bf16.msra.mxu0 0
      %1132 = vmatprep.subr.bf16.mxu0 0
      %1133 = vmatpush1.bf16.msra.mxu0 0
      %1134 = vmatprep.subr.bf16.mxu0 0
      %1135 = vmatpush1.bf16.msra.mxu0 0
      %1136 = vmatprep.subr.bf16.mxu0 0
      %1137 = vmatpush1.bf16.msra.mxu0 0
      %1138 = vmatprep.subr.bf16.mxu0 0
      %1139 = vmatpush1.bf16.msra.mxu0 0
      %1140 = vmatprep.subr.bf16.mxu0 0
      %1141 = vmatpush1.bf16.msra.mxu0 0
      %1142 = vmatprep.subr.bf16.mxu0 0
      %1143 = vmatpush1.bf16.msra.mxu0 %v1085
      %1144 = vmatprep.subr.bf16.mxu0 0
      %1145 = vmatpush2.bf16.msra.mxu0 0
      %1146 = vmatprep.subr.bf16.mxu0 0
      %1147 = vmatpush2.bf16.msra.mxu0 0
      %1148 = vmatprep.subr.bf16.mxu0 0
      %1149 = vmatpush2.bf16.msra.mxu0 0
      %1150 = vmatprep.subr.bf16.mxu0 0
      %1151 = vmatpush2.bf16.msra.mxu0 0
      %1152 = vmatprep.subr.bf16.mxu0 0
      %1153 = vmatpush2.bf16.msra.mxu0 0
      %1154 = vmatprep.subr.bf16.mxu0 0
      %1155 = vmatpush2.bf16.msra.mxu0 0
      %1156 = vmatprep.subr.bf16.mxu0 0
      %1157 = vmatpush2.bf16.msra.mxu0 0
      %1158 = vmatprep.subr.bf16.mxu0 0
      %1159 = vmatpush2.bf16.msra.mxu0 0
      %1160 = vmatprep.mubr.bf16.mxu0 0
      %1161 = vmatmul.mubr.bf16.gmra.mxu0 %v1076
      %v1162 = vpop.f32.mrf.mxu0
      %v1163 = vadd.f32 0.0, %v1162
      %v1164 = vpop.f32.mrf.mxu0
      %v1165 = vpop.f32.mrf.mxu0
      %v1166 = vpop.f32.mrf.mxu0
      %1167 = vdwg.mxu0
      %v1168 = vadd.f32 %v409, %v1122
      %v1169 = vadd.f32 %v409, %v1124
      %v1170 = vadd.f32 %v409, %v1163
      %s1171 = scalar_lea.vmem %s4, 4
      %v1172 = vld [vmem:[%s1171] sm:$0xf]
      %v1173 = vld [vmem:[%s888] sm:$0xff]
      %v1174 = vld [vmem:[%s888 + $0x8] sm:$0xff]
      %v1177 = vunpack.c.l.b16 %v1173
      %v1178 = vunpack.c.h.b16 %v1173
      %v1179 = vunpack.c.l.b16 %v1174
      %v1180 = vunpack.c.h.b16 %v1174
      %v1181 = vpack.c.b16 %v1177, %v1177
      %v1182 = vpack.c.b16 %v1178, %v1178
      %v1183 = vpack.c.b16 %v1179, %v1179
      %v1184 = vpack.c.b16 %v1180, %v1180
      %1185 = vrot.lane.b32.xlu0 %v1181, 126
      %v1186 = vpop.permute.xlu0 %1185
      %1187 = vrot.lane.b32.xlu0 %v1182, 126
      %v1188 = vpop.permute.xlu0 %1187
      %1189 = vrot.lane.b32.xlu0 %v1183, 126
      %v1190 = vpop.permute.xlu0 %1189
      %1191 = vrot.lane.b32.xlu0 %v1184, 126
      %v1192 = vpop.permute.xlu0 %1191
      %vm1193 = vcmask 1031168
      %v1194 = vsel %vm1193, %v1186, %v1188
      %v1195 = vsel %vm1193, %v1188, %v1190
      %v1196 = vsel %vm1193, %v1190, %v1192
      %v1198 = vsel %vm1074, %v1172, 0
      %v1201 = vsel %vm571, %v1194, 0
      %v1204 = vsel %vm571, %v1195, 0
      %v1207 = vsel %vm571, %v1196, 0
      %1209 = vmatprep.subr.bf16.mxu0 0
      %1210 = vmatpush1.bf16.msra.mxu0 0
      %1211 = vmatprep.subr.bf16.mxu0 0
      %1212 = vmatpush1.bf16.msra.mxu0 0
      %1213 = vmatprep.subr.bf16.mxu0 0
      %1214 = vmatpush1.bf16.msra.mxu0 0
      %1215 = vmatprep.subr.bf16.mxu0 0
      %1216 = vmatpush1.bf16.msra.mxu0 0
      %1217 = vmatprep.subr.bf16.mxu0 0
      %1218 = vmatpush1.bf16.msra.mxu0 0
      %1219 = vmatprep.subr.bf16.mxu0 0
      %1220 = vmatpush1.bf16.msra.mxu0 0
      %1221 = vmatprep.subr.bf16.mxu0 0
      %1222 = vmatpush1.bf16.msra.mxu0 0
      %1223 = vmatprep.subr.bf16.mxu0 %v1204
      %1224 = vmatpush1.bf16.msra.mxu0 %v1201
      %1225 = vmatprep.subr.bf16.mxu0 0
      %1226 = vmatpush2.bf16.msra.mxu0 0
      %1227 = vmatprep.subr.bf16.mxu0 0
      %1228 = vmatpush2.bf16.msra.mxu0 0
      %1229 = vmatprep.subr.bf16.mxu0 0
      %1230 = vmatpush2.bf16.msra.mxu0 0
      %1231 = vmatprep.subr.bf16.mxu0 0
      %1232 = vmatpush2.bf16.msra.mxu0 0
      %1233 = vmatprep.subr.bf16.mxu0 0
      %1234 = vmatpush2.bf16.msra.mxu0 0
      %1235 = vmatprep.subr.bf16.mxu0 0
      %1236 = vmatpush2.bf16.msra.mxu0 0
      %1237 = vmatprep.subr.bf16.mxu0 0
      %1238 = vmatpush2.bf16.msra.mxu0 0
      %1239 = vmatprep.subr.bf16.mxu0 0
      %1240 = vmatpush2.bf16.msra.mxu0 0
      %1241 = vmatprep.mubr.bf16.mxu0 0
      %1242 = vmatmul.mubr.bf16.gmra.mxu0 %v1198
      %v1243 = vpop.f32.mrf.mxu0
      %v1244 = vadd.f32 0.0, %v1243
      %v1245 = vpop.f32.mrf.mxu0
      %v1246 = vadd.f32 0.0, %v1245
      %v1247 = vpop.f32.mrf.mxu0
      %v1248 = vpop.f32.mrf.mxu0
      %1249 = vdwg.mxu0
      %1250 = vmatprep.subr.bf16.mxu0 0
      %1251 = vmatpush1.bf16.msra.mxu0 0
      %1252 = vmatprep.subr.bf16.mxu0 0
      %1253 = vmatpush1.bf16.msra.mxu0 0
      %1254 = vmatprep.subr.bf16.mxu0 0
      %1255 = vmatpush1.bf16.msra.mxu0 0
      %1256 = vmatprep.subr.bf16.mxu0 0
      %1257 = vmatpush1.bf16.msra.mxu0 0
      %1258 = vmatprep.subr.bf16.mxu0 0
      %1259 = vmatpush1.bf16.msra.mxu0 0
      %1260 = vmatprep.subr.bf16.mxu0 0
      %1261 = vmatpush1.bf16.msra.mxu0 0
      %1262 = vmatprep.subr.bf16.mxu0 0
      %1263 = vmatpush1.bf16.msra.mxu0 0
      %1264 = vmatprep.subr.bf16.mxu0 0
      %1265 = vmatpush1.bf16.msra.mxu0 %v1207
      %1266 = vmatprep.subr.bf16.mxu0 0
      %1267 = vmatpush2.bf16.msra.mxu0 0
      %1268 = vmatprep.subr.bf16.mxu0 0
      %1269 = vmatpush2.bf16.msra.mxu0 0
      %1270 = vmatprep.subr.bf16.mxu0 0
      %1271 = vmatpush2.bf16.msra.mxu0 0
      %1272 = vmatprep.subr.bf16.mxu0 0
      %1273 = vmatpush2.bf16.msra.mxu0 0
      %1274 = vmatprep.subr.bf16.mxu0 0
      %1275 = vmatpush2.bf16.msra.mxu0 0
      %1276 = vmatprep.subr.bf16.mxu0 0
      %1277 = vmatpush2.bf16.msra.mxu0 0
      %1278 = vmatprep.subr.bf16.mxu0 0
      %1279 = vmatpush2.bf16.msra.mxu0 0
      %1280 = vmatprep.subr.bf16.mxu0 0
      %1281 = vmatpush2.bf16.msra.mxu0 0
      %1282 = vmatprep.mubr.bf16.mxu0 0
      %1283 = vmatmul.mubr.bf16.gmra.mxu0 %v1198
      %v1284 = vpop.f32.mrf.mxu0
      %v1285 = vadd.f32 0.0, %v1284
      %v1286 = vpop.f32.mrf.mxu0
      %v1287 = vpop.f32.mrf.mxu0
      %v1288 = vpop.f32.mrf.mxu0
      %1289 = vdwg.mxu0
      %v1290 = vadd.f32 %v1168, %v1244
      %v1291 = vadd.f32 %v1169, %v1246
      %v1292 = vadd.f32 %v1170, %v1285
      %s1293 = scalar_lea.vmem %s4, 8
      %v1294 = vld [vmem:[%s1293] sm:$0xf]
      %1295 = vrot.lane.b32.xlu0 %v1058, 126
      %v1296 = vpop.permute.xlu0 %1295
      %1297 = vrot.lane.b32.xlu0 %v1059, 126
      %v1298 = vpop.permute.xlu0 %1297
      %1299 = vrot.lane.b32.xlu0 %v1060, 126
      %v1300 = vpop.permute.xlu0 %1299
      %1301 = vrot.lane.b32.xlu0 %v1061, 126
      %v1302 = vpop.permute.xlu0 %1301
      %v1303 = vsel %vm1193, %v1296, %v1298
      %v1304 = vsel %vm1193, %v1298, %v1300
      %v1305 = vsel %vm1193, %v1300, %v1302
      %v1307 = vsel %vm1074, %v1294, 0
      %v1310 = vsel %vm571, %v1303, 0
      %v1313 = vsel %vm571, %v1304, 0
      %v1316 = vsel %vm571, %v1305, 0
      %1318 = vmatprep.subr.bf16.mxu0 0
      %1319 = vmatpush1.bf16.msra.mxu0 0
      %1320 = vmatprep.subr.bf16.mxu0 0
      %1321 = vmatpush1.bf16.msra.mxu0 0
      %1322 = vmatprep.subr.bf16.mxu0 0
      %1323 = vmatpush1.bf16.msra.mxu0 0
      %1324 = vmatprep.subr.bf16.mxu0 0
      %1325 = vmatpush1.bf16.msra.mxu0 0
      %1326 = vmatprep.subr.bf16.mxu0 0
      %1327 = vmatpush1.bf16.msra.mxu0 0
      %1328 = vmatprep.subr.bf16.mxu0 0
      %1329 = vmatpush1.bf16.msra.mxu0 0
      %1330 = vmatprep.subr.bf16.mxu0 0
      %1331 = vmatpush1.bf16.msra.mxu0 0
      %1332 = vmatprep.subr.bf16.mxu0 %v1313
      %1333 = vmatpush1.bf16.msra.mxu0 %v1310
      %1334 = vmatprep.subr.bf16.mxu0 0
      %1335 = vmatpush2.bf16.msra.mxu0 0
      %1336 = vmatprep.subr.bf16.mxu0 0
      %1337 = vmatpush2.bf16.msra.mxu0 0
      %1338 = vmatprep.subr.bf16.mxu0 0
      %1339 = vmatpush2.bf16.msra.mxu0 0
      %1340 = vmatprep.subr.bf16.mxu0 0
      %1341 = vmatpush2.bf16.msra.mxu0 0
      %1342 = vmatprep.subr.bf16.mxu0 0
      %1343 = vmatpush2.bf16.msra.mxu0 0
      %1344 = vmatprep.subr.bf16.mxu0 0
      %1345 = vmatpush2.bf16.msra.mxu0 0
      %1346 = vmatprep.subr.bf16.mxu0 0
      %1347 = vmatpush2.bf16.msra.mxu0 0
      %1348 = vmatprep.subr.bf16.mxu0 0
      %1349 = vmatpush2.bf16.msra.mxu0 0
      %1350 = vmatprep.mubr.bf16.mxu0 0
      %1351 = vmatmul.mubr.bf16.gmra.mxu0 %v1307
      %v1352 = vpop.f32.mrf.mxu0
      %v1353 = vadd.f32 0.0, %v1352
      %v1354 = vpop.f32.mrf.mxu0
      %v1355 = vadd.f32 0.0, %v1354
      %v1356 = vpop.f32.mrf.mxu0
      %v1357 = vpop.f32.mrf.mxu0
      %1358 = vdwg.mxu0
      %1359 = vmatprep.subr.bf16.mxu0 0
      %1360 = vmatpush1.bf16.msra.mxu0 0
      %1361 = vmatprep.subr.bf16.mxu0 0
      %1362 = vmatpush1.bf16.msra.mxu0 0
      %1363 = vmatprep.subr.bf16.mxu0 0
      %1364 = vmatpush1.bf16.msra.mxu0 0
      %1365 = vmatprep.subr.bf16.mxu0 0
      %1366 = vmatpush1.bf16.msra.mxu0 0
      %1367 = vmatprep.subr.bf16.mxu0 0
      %1368 = vmatpush1.bf16.msra.mxu0 0
      %1369 = vmatprep.subr.bf16.mxu0 0
      %1370 = vmatpush1.bf16.msra.mxu0 0
      %1371 = vmatprep.subr.bf16.mxu0 0
      %1372 = vmatpush1.bf16.msra.mxu0 0
      %1373 = vmatprep.subr.bf16.mxu0 0
      %1374 = vmatpush1.bf16.msra.mxu0 %v1316
      %1375 = vmatprep.subr.bf16.mxu0 0
      %1376 = vmatpush2.bf16.msra.mxu0 0
      %1377 = vmatprep.subr.bf16.mxu0 0
      %1378 = vmatpush2.bf16.msra.mxu0 0
      %1379 = vmatprep.subr.bf16.mxu0 0
      %1380 = vmatpush2.bf16.msra.mxu0 0
      %1381 = vmatprep.subr.bf16.mxu0 0
      %1382 = vmatpush2.bf16.msra.mxu0 0
      %1383 = vmatprep.subr.bf16.mxu0 0
      %1384 = vmatpush2.bf16.msra.mxu0 0
      %1385 = vmatprep.subr.bf16.mxu0 0
      %1386 = vmatpush2.bf16.msra.mxu0 0
      %1387 = vmatprep.subr.bf16.mxu0 0
      %1388 = vmatpush2.bf16.msra.mxu0 0
      %1389 = vmatprep.subr.bf16.mxu0 0
      %1390 = vmatpush2.bf16.msra.mxu0 0
      %1391 = vmatprep.mubr.bf16.mxu0 0
      %1392 = vmatmul.mubr.bf16.gmra.mxu0 %v1307
      %v1393 = vpop.f32.mrf.mxu0
      %v1394 = vadd.f32 0.0, %v1393
      %v1395 = vpop.f32.mrf.mxu0
      %v1396 = vpop.f32.mrf.mxu0
      %v1397 = vpop.f32.mrf.mxu0
      %1398 = vdwg.mxu0
      %v1399 = vadd.f32 %v1290, %v1353
      %v1400 = vadd.f32 %v1291, %v1355
      %v1401 = vadd.f32 %v1292, %v1394
      %s1402 = scalar_lea.vmem %s4, 12
      %v1403 = vld [vmem:[%s1402] sm:$0xf]
      %v1404 = vld [vmem:[%s730] sm:$0xff]
      %v1405 = vld [vmem:[%s730 + $0x8] sm:$0xff]
      %v1408 = vunpack.c.l.b16 %v1404
      %v1409 = vunpack.c.h.b16 %v1404
      %v1410 = vunpack.c.l.b16 %v1405
      %v1411 = vunpack.c.h.b16 %v1405
      %v1412 = vpack.c.b16 %v1408, %v1408
      %v1413 = vpack.c.b16 %v1409, %v1409
      %v1414 = vpack.c.b16 %v1410, %v1410
      %v1415 = vpack.c.b16 %v1411, %v1411
      %1416 = vrot.lane.b32.xlu0 %v1412, 109
      %v1417 = vpop.permute.xlu0 %1416
      %1418 = vrot.lane.b32.xlu0 %v1413, 109
      %v1419 = vpop.permute.xlu0 %1418
      %1420 = vrot.lane.b32.xlu0 %v1414, 109
      %v1421 = vpop.permute.xlu0 %1420
      %1422 = vrot.lane.b32.xlu0 %v1415, 109
      %v1423 = vpop.permute.xlu0 %1422
      %vm1424 = vcmask 891904
      %v1425 = vsel %vm1424, %v1417, %v1419
      %v1426 = vsel %vm1424, %v1419, %v1421
      %v1427 = vsel %vm1424, %v1421, %v1423
      %v1429 = vsel %vm1074, %v1403, 0
      %v1432 = vsel %vm571, %v1425, 0
      %v1435 = vsel %vm571, %v1426, 0
      %v1438 = vsel %vm571, %v1427, 0
      %1440 = vmatprep.subr.bf16.mxu0 0
      %1441 = vmatpush1.bf16.msra.mxu0 0
      %1442 = vmatprep.subr.bf16.mxu0 0
      %1443 = vmatpush1.bf16.msra.mxu0 0
      %1444 = vmatprep.subr.bf16.mxu0 0
      %1445 = vmatpush1.bf16.msra.mxu0 0
      %1446 = vmatprep.subr.bf16.mxu0 0
      %1447 = vmatpush1.bf16.msra.mxu0 0
      %1448 = vmatprep.subr.bf16.mxu0 0
      %1449 = vmatpush1.bf16.msra.mxu0 0
      %1450 = vmatprep.subr.bf16.mxu0 0
      %1451 = vmatpush1.bf16.msra.mxu0 0
      %1452 = vmatprep.subr.bf16.mxu0 0
      %1453 = vmatpush1.bf16.msra.mxu0 0
      %1454 = vmatprep.subr.bf16.mxu0 %v1435
      %1455 = vmatpush1.bf16.msra.mxu0 %v1432
      %1456 = vmatprep.subr.bf16.mxu0 0
      %1457 = vmatpush2.bf16.msra.mxu0 0
      %1458 = vmatprep.subr.bf16.mxu0 0
      %1459 = vmatpush2.bf16.msra.mxu0 0
      %1460 = vmatprep.subr.bf16.mxu0 0
      %1461 = vmatpush2.bf16.msra.mxu0 0
      %1462 = vmatprep.subr.bf16.mxu0 0
      %1463 = vmatpush2.bf16.msra.mxu0 0
      %1464 = vmatprep.subr.bf16.mxu0 0
      %1465 = vmatpush2.bf16.msra.mxu0 0
      %1466 = vmatprep.subr.bf16.mxu0 0
      %1467 = vmatpush2.bf16.msra.mxu0 0
      %1468 = vmatprep.subr.bf16.mxu0 0
      %1469 = vmatpush2.bf16.msra.mxu0 0
      %1470 = vmatprep.subr.bf16.mxu0 0
      %1471 = vmatpush2.bf16.msra.mxu0 0
      %1472 = vmatprep.mubr.bf16.mxu0 0
      %1473 = vmatmul.mubr.bf16.gmra.mxu0 %v1429
      %v1474 = vpop.f32.mrf.mxu0
      %v1475 = vadd.f32 0.0, %v1474
      %v1476 = vpop.f32.mrf.mxu0
      %v1477 = vadd.f32 0.0, %v1476
      %v1478 = vpop.f32.mrf.mxu0
      %v1479 = vpop.f32.mrf.mxu0
      %1480 = vdwg.mxu0
      %1481 = vmatprep.subr.bf16.mxu0 0
      %1482 = vmatpush1.bf16.msra.mxu0 0
      %1483 = vmatprep.subr.bf16.mxu0 0
      %1484 = vmatpush1.bf16.msra.mxu0 0
      %1485 = vmatprep.subr.bf16.mxu0 0
      %1486 = vmatpush1.bf16.msra.mxu0 0
      %1487 = vmatprep.subr.bf16.mxu0 0
      %1488 = vmatpush1.bf16.msra.mxu0 0
      %1489 = vmatprep.subr.bf16.mxu0 0
      %1490 = vmatpush1.bf16.msra.mxu0 0
      %1491 = vmatprep.subr.bf16.mxu0 0
      %1492 = vmatpush1.bf16.msra.mxu0 0
      %1493 = vmatprep.subr.bf16.mxu0 0
      %1494 = vmatpush1.bf16.msra.mxu0 0
      %1495 = vmatprep.subr.bf16.mxu0 0
      %1496 = vmatpush1.bf16.msra.mxu0 %v1438
      %1497 = vmatprep.subr.bf16.mxu0 0
      %1498 = vmatpush2.bf16.msra.mxu0 0
      %1499 = vmatprep.subr.bf16.mxu0 0
      %1500 = vmatpush2.bf16.msra.mxu0 0
      %1501 = vmatprep.subr.bf16.mxu0 0
      %1502 = vmatpush2.bf16.msra.mxu0 0
      %1503 = vmatprep.subr.bf16.mxu0 0
      %1504 = vmatpush2.bf16.msra.mxu0 0
      %1505 = vmatprep.subr.bf16.mxu0 0
      %1506 = vmatpush2.bf16.msra.mxu0 0
      %1507 = vmatprep.subr.bf16.mxu0 0
      %1508 = vmatpush2.bf16.msra.mxu0 0
      %1509 = vmatprep.subr.bf16.mxu0 0
      %1510 = vmatpush2.bf16.msra.mxu0 0
      %1511 = vmatprep.subr.bf16.mxu0 0
      %1512 = vmatpush2.bf16.msra.mxu0 0
      %1513 = vmatprep.mubr.bf16.mxu0 0
      %1514 = vmatmul.mubr.bf16.gmra.mxu0 %v1429
      %v1515 = vpop.f32.mrf.mxu0
      %v1516 = vadd.f32 0.0, %v1515
      %v1517 = vpop.f32.mrf.mxu0
      %v1518 = vpop.f32.mrf.mxu0
      %v1519 = vpop.f32.mrf.mxu0
      %1520 = vdwg.mxu0
      %v1521 = vadd.f32 %v1399, %v1475
      %v1522 = vadd.f32 %v1400, %v1477
      %v1523 = vadd.f32 %v1401, %v1516
      %s1524 = scalar_lea.vmem %s4, 16
      %v1525 = vld [vmem:[%s1524] sm:$0xf]
      %v1526 = vld [vmem:[#allocation3] sm:$0xff]
      %v1527 = vld [vmem:[#allocation3 + $0x8] sm:$0xff]
      %v1530 = vunpack.c.l.b16 %v1526
      %v1531 = vunpack.c.h.b16 %v1526
      %v1532 = vunpack.c.l.b16 %v1527
      %v1533 = vunpack.c.h.b16 %v1527
      %v1534 = vpack.c.b16 %v1530, %v1530
      %v1535 = vpack.c.b16 %v1531, %v1531
      %v1536 = vpack.c.b16 %v1532, %v1532
      %v1537 = vpack.c.b16 %v1533, %v1533
      %1538 = vrot.lane.b32.xlu0 %v1534, 108
      %v1539 = vpop.permute.xlu0 %1538
      %1540 = vrot.lane.b32.xlu0 %v1535, 108
      %v1541 = vpop.permute.xlu0 %1540
      %1542 = vrot.lane.b32.xlu0 %v1536, 108
      %v1543 = vpop.permute.xlu0 %1542
      %1544 = vrot.lane.b32.xlu0 %v1537, 108
      %v1545 = vpop.permute.xlu0 %1544
      %v1546 = vsel %vm440, %v1539, %v1541
      %v1547 = vsel %vm440, %v1541, %v1543
      %v1548 = vsel %vm440, %v1543, %v1545
      %v1550 = vsel %vm1074, %v1525, 0
      %v1553 = vsel %vm571, %v1546, 0
      %v1556 = vsel %vm571, %v1547, 0
      %v1559 = vsel %vm571, %v1548, 0
      %1561 = vmatprep.subr.bf16.mxu0 0
      %1562 = vmatpush1.bf16.msra.mxu0 0
      %1563 = vmatprep.subr.bf16.mxu0 0
      %1564 = vmatpush1.bf16.msra.mxu0 0
      %1565 = vmatprep.subr.bf16.mxu0 0
      %1566 = vmatpush1.bf16.msra.mxu0 0
      %1567 = vmatprep.subr.bf16.mxu0 0
      %1568 = vmatpush1.bf16.msra.mxu0 0
      %1569 = vmatprep.subr.bf16.mxu0 0
      %1570 = vmatpush1.bf16.msra.mxu0 0
      %1571 = vmatprep.subr.bf16.mxu0 0
      %1572 = vmatpush1.bf16.msra.mxu0 0
      %1573 = vmatprep.subr.bf16.mxu0 0
      %1574 = vmatpush1.bf16.msra.mxu0 0
      %1575 = vmatprep.subr.bf16.mxu0 %v1556
      %1576 = vmatpush1.bf16.msra.mxu0 %v1553
      %1577 = vmatprep.subr.bf16.mxu0 0
      %1578 = vmatpush2.bf16.msra.mxu0 0
      %1579 = vmatprep.subr.bf16.mxu0 0
      %1580 = vmatpush2.bf16.msra.mxu0 0
      %1581 = vmatprep.subr.bf16.mxu0 0
      %1582 = vmatpush2.bf16.msra.mxu0 0
      %1583 = vmatprep.subr.bf16.mxu0 0
      %1584 = vmatpush2.bf16.msra.mxu0 0
      %1585 = vmatprep.subr.bf16.mxu0 0
      %1586 = vmatpush2.bf16.msra.mxu0 0
      %1587 = vmatprep.subr.bf16.mxu0 0
      %1588 = vmatpush2.bf16.msra.mxu0 0
      %1589 = vmatprep.subr.bf16.mxu0 0
      %1590 = vmatpush2.bf16.msra.mxu0 0
      %1591 = vmatprep.subr.bf16.mxu0 0
      %1592 = vmatpush2.bf16.msra.mxu0 0
      %1593 = vmatprep.mubr.bf16.mxu0 0
      %1594 = vmatmul.mubr.bf16.gmra.mxu0 %v1550
      %v1595 = vpop.f32.mrf.mxu0
      %v1596 = vadd.f32 0.0, %v1595
      %v1597 = vpop.f32.mrf.mxu0
      %v1598 = vadd.f32 0.0, %v1597
      %v1599 = vpop.f32.mrf.mxu0
      %v1600 = vpop.f32.mrf.mxu0
      %1601 = vdwg.mxu0
      %1602 = vmatprep.subr.bf16.mxu0 0
      %1603 = vmatpush1.bf16.msra.mxu0 0
      %1604 = vmatprep.subr.bf16.mxu0 0
      %1605 = vmatpush1.bf16.msra.mxu0 0
      %1606 = vmatprep.subr.bf16.mxu0 0
      %1607 = vmatpush1.bf16.msra.mxu0 0
      %1608 = vmatprep.subr.bf16.mxu0 0
      %1609 = vmatpush1.bf16.msra.mxu0 0
      %1610 = vmatprep.subr.bf16.mxu0 0
      %1611 = vmatpush1.bf16.msra.mxu0 0
      %1612 = vmatprep.subr.bf16.mxu0 0
      %1613 = vmatpush1.bf16.msra.mxu0 0
      %1614 = vmatprep.subr.bf16.mxu0 0
      %1615 = vmatpush1.bf16.msra.mxu0 0
      %1616 = vmatprep.subr.bf16.mxu0 0
      %1617 = vmatpush1.bf16.msra.mxu0 %v1559
      %1618 = vmatprep.subr.bf16.mxu0 0
      %1619 = vmatpush2.bf16.msra.mxu0 0
      %1620 = vmatprep.subr.bf16.mxu0 0
      %1621 = vmatpush2.bf16.msra.mxu0 0
      %1622 = vmatprep.subr.bf16.mxu0 0
      %1623 = vmatpush2.bf16.msra.mxu0 0
      %1624 = vmatprep.subr.bf16.mxu0 0
      %1625 = vmatpush2.bf16.msra.mxu0 0
      %1626 = vmatprep.subr.bf16.mxu0 0
      %1627 = vmatpush2.bf16.msra.mxu0 0
      %1628 = vmatprep.subr.bf16.mxu0 0
      %1629 = vmatpush2.bf16.msra.mxu0 0
      %1630 = vmatprep.subr.bf16.mxu0 0
      %1631 = vmatpush2.bf16.msra.mxu0 0
      %1632 = vmatprep.subr.bf16.mxu0 0
      %1633 = vmatpush2.bf16.msra.mxu0 0
      %1634 = vmatprep.mubr.bf16.mxu0 0
      %1635 = vmatmul.mubr.bf16.gmra.mxu0 %v1550
      %v1636 = vpop.f32.mrf.mxu0
      %v1637 = vadd.f32 0.0, %v1636
      %v1638 = vpop.f32.mrf.mxu0
      %v1639 = vpop.f32.mrf.mxu0
      %v1640 = vpop.f32.mrf.mxu0
      %1641 = vdwg.mxu0
      %v1642 = vadd.f32 %v1521, %v1596
      %v1643 = vadd.f32 %v1522, %v1598
      %v1644 = vadd.f32 %v1523, %v1637
      %s1645 = scalar_lea.vmem %s4, 20
      %v1646 = vld [vmem:[%s1645] sm:$0xf]
      %1647 = vrot.lane.b32.xlu0 %v1412, 108
      %v1648 = vpop.permute.xlu0 %1647
      %1649 = vrot.lane.b32.xlu0 %v1413, 108
      %v1650 = vpop.permute.xlu0 %1649
      %1651 = vrot.lane.b32.xlu0 %v1414, 108
      %v1652 = vpop.permute.xlu0 %1651
      %1653 = vrot.lane.b32.xlu0 %v1415, 108
      %v1654 = vpop.permute.xlu0 %1653
      %v1655 = vsel %vm440, %v1648, %v1650
      %v1656 = vsel %vm440, %v1650, %v1652
      %v1657 = vsel %vm440, %v1652, %v1654
      %v1659 = vsel %vm1074, %v1646, 0
      %v1662 = vsel %vm571, %v1655, 0
      %v1665 = vsel %vm571, %v1656, 0
      %v1668 = vsel %vm571, %v1657, 0
      %1670 = vmatprep.subr.bf16.mxu0 0
      %1671 = vmatpush1.bf16.msra.mxu0 0
      %1672 = vmatprep.subr.bf16.mxu0 0
      %1673 = vmatpush1.bf16.msra.mxu0 0
      %1674 = vmatprep.subr.bf16.mxu0 0
      %1675 = vmatpush1.bf16.msra.mxu0 0
      %1676 = vmatprep.subr.bf16.mxu0 0
      %1677 = vmatpush1.bf16.msra.mxu0 0
      %1678 = vmatprep.subr.bf16.mxu0 0
      %1679 = vmatpush1.bf16.msra.mxu0 0
      %1680 = vmatprep.subr.bf16.mxu0 0
      %1681 = vmatpush1.bf16.msra.mxu0 0
      %1682 = vmatprep.subr.bf16.mxu0 0
      %1683 = vmatpush1.bf16.msra.mxu0 0
      %1684 = vmatprep.subr.bf16.mxu0 %v1665
      %1685 = vmatpush1.bf16.msra.mxu0 %v1662
      %1686 = vmatprep.subr.bf16.mxu0 0
      %1687 = vmatpush2.bf16.msra.mxu0 0
      %1688 = vmatprep.subr.bf16.mxu0 0
      %1689 = vmatpush2.bf16.msra.mxu0 0
      %1690 = vmatprep.subr.bf16.mxu0 0
      %1691 = vmatpush2.bf16.msra.mxu0 0
      %1692 = vmatprep.subr.bf16.mxu0 0
      %1693 = vmatpush2.bf16.msra.mxu0 0
      %1694 = vmatprep.subr.bf16.mxu0 0
      %1695 = vmatpush2.bf16.msra.mxu0 0
      %1696 = vmatprep.subr.bf16.mxu0 0
      %1697 = vmatpush2.bf16.msra.mxu0 0
      %1698 = vmatprep.subr.bf16.mxu0 0
      %1699 = vmatpush2.bf16.msra.mxu0 0
      %1700 = vmatprep.subr.bf16.mxu0 0
      %1701 = vmatpush2.bf16.msra.mxu0 0
      %1702 = vmatprep.mubr.bf16.mxu0 0
      %1703 = vmatmul.mubr.bf16.gmra.mxu0 %v1659
      %v1704 = vpop.f32.mrf.mxu0
      %v1705 = vadd.f32 0.0, %v1704
      %v1706 = vpop.f32.mrf.mxu0
      %v1707 = vadd.f32 0.0, %v1706
      %v1708 = vpop.f32.mrf.mxu0
      %v1709 = vpop.f32.mrf.mxu0
      %1710 = vdwg.mxu0
      %1711 = vmatprep.subr.bf16.mxu0 0
      %1712 = vmatpush1.bf16.msra.mxu0 0
      %1713 = vmatprep.subr.bf16.mxu0 0
      %1714 = vmatpush1.bf16.msra.mxu0 0
      %1715 = vmatprep.subr.bf16.mxu0 0
      %1716 = vmatpush1.bf16.msra.mxu0 0
      %1717 = vmatprep.subr.bf16.mxu0 0
      %1718 = vmatpush1.bf16.msra.mxu0 0
      %1719 = vmatprep.subr.bf16.mxu0 0
      %1720 = vmatpush1.bf16.msra.mxu0 0
      %1721 = vmatprep.subr.bf16.mxu0 0
      %1722 = vmatpush1.bf16.msra.mxu0 0
      %1723 = vmatprep.subr.bf16.mxu0 0
      %1724 = vmatpush1.bf16.msra.mxu0 0
      %1725 = vmatprep.subr.bf16.mxu0 0
      %1726 = vmatpush1.bf16.msra.mxu0 %v1668
      %1727 = vmatprep.subr.bf16.mxu0 0
      %1728 = vmatpush2.bf16.msra.mxu0 0
      %1729 = vmatprep.subr.bf16.mxu0 0
      %1730 = vmatpush2.bf16.msra.mxu0 0
      %1731 = vmatprep.subr.bf16.mxu0 0
      %1732 = vmatpush2.bf16.msra.mxu0 0
      %1733 = vmatprep.subr.bf16.mxu0 0
      %1734 = vmatpush2.bf16.msra.mxu0 0
      %1735 = vmatprep.subr.bf16.mxu0 0
      %1736 = vmatpush2.bf16.msra.mxu0 0
      %1737 = vmatprep.subr.bf16.mxu0 0
      %1738 = vmatpush2.bf16.msra.mxu0 0
      %1739 = vmatprep.subr.bf16.mxu0 0
      %1740 = vmatpush2.bf16.msra.mxu0 0
      %1741 = vmatprep.subr.bf16.mxu0 0
      %1742 = vmatpush2.bf16.msra.mxu0 0
      %1743 = vmatprep.mubr.bf16.mxu0 0
      %1744 = vmatmul.mubr.bf16.gmra.mxu0 %v1659
      %v1745 = vpop.f32.mrf.mxu0
      %v1746 = vadd.f32 0.0, %v1745
      %v1747 = vpop.f32.mrf.mxu0
      %v1748 = vpop.f32.mrf.mxu0
      %v1749 = vpop.f32.mrf.mxu0
      %1750 = vdwg.mxu0
      %v1751 = vadd.f32 %v1642, %v1705
      %v1752 = vadd.f32 %v1643, %v1707
      %v1753 = vadd.f32 %v1644, %v1746
      %s1754 = scalar_lea.vmem %s4, 24
      %v1755 = vld [vmem:[%s1754] sm:$0xf]
      %1756 = vrot.lane.b32.xlu0 %v1058, 109
      %v1757 = vpop.permute.xlu0 %1756
      %1758 = vrot.lane.b32.xlu0 %v1059, 109
      %v1759 = vpop.permute.xlu0 %1758
      %1760 = vrot.lane.b32.xlu0 %v1060, 109
      %v1761 = vpop.permute.xlu0 %1760
      %1762 = vrot.lane.b32.xlu0 %v1061, 109
      %v1763 = vpop.permute.xlu0 %1762
      %v1764 = vsel %vm1424, %v1757, %v1759
      %v1765 = vsel %vm1424, %v1759, %v1761
      %v1766 = vsel %vm1424, %v1761, %v1763
      %v1768 = vsel %vm1074, %v1755, 0
      %v1771 = vsel %vm571, %v1764, 0
      %v1774 = vsel %vm571, %v1765, 0
      %v1777 = vsel %vm571, %v1766, 0
      %1779 = vmatprep.subr.bf16.mxu0 0
      %1780 = vmatpush1.bf16.msra.mxu0 0
      %1781 = vmatprep.subr.bf16.mxu0 0
      %1782 = vmatpush1.bf16.msra.mxu0 0
      %1783 = vmatprep.subr.bf16.mxu0 0
      %1784 = vmatpush1.bf16.msra.mxu0 0
      %1785 = vmatprep.subr.bf16.mxu0 0
      %1786 = vmatpush1.bf16.msra.mxu0 0
      %1787 = vmatprep.subr.bf16.mxu0 0
      %1788 = vmatpush1.bf16.msra.mxu0 0
      %1789 = vmatprep.subr.bf16.mxu0 0
      %1790 = vmatpush1.bf16.msra.mxu0 0
      %1791 = vmatprep.subr.bf16.mxu0 0
      %1792 = vmatpush1.bf16.msra.mxu0 0
      %1793 = vmatprep.subr.bf16.mxu0 %v1774
      %1794 = vmatpush1.bf16.msra.mxu0 %v1771
      %1795 = vmatprep.subr.bf16.mxu0 0
      %1796 = vmatpush2.bf16.msra.mxu0 0
      %1797 = vmatprep.subr.bf16.mxu0 0
      %1798 = vmatpush2.bf16.msra.mxu0 0
      %1799 = vmatprep.subr.bf16.mxu0 0
      %1800 = vmatpush2.bf16.msra.mxu0 0
      %1801 = vmatprep.subr.bf16.mxu0 0
      %1802 = vmatpush2.bf16.msra.mxu0 0
      %1803 = vmatprep.subr.bf16.mxu0 0
      %1804 = vmatpush2.bf16.msra.mxu0 0
      %1805 = vmatprep.subr.bf16.mxu0 0
      %1806 = vmatpush2.bf16.msra.mxu0 0
      %1807 = vmatprep.subr.bf16.mxu0 0
      %1808 = vmatpush2.bf16.msra.mxu0 0
      %1809 = vmatprep.subr.bf16.mxu0 0
      %1810 = vmatpush2.bf16.msra.mxu0 0
      %1811 = vmatprep.mubr.bf16.mxu0 0
      %1812 = vmatmul.mubr.bf16.gmra.mxu0 %v1768
      %v1813 = vpop.f32.mrf.mxu0
      %v1814 = vadd.f32 0.0, %v1813
      %v1815 = vpop.f32.mrf.mxu0
      %v1816 = vadd.f32 0.0, %v1815
      %v1817 = vpop.f32.mrf.mxu0
      %v1818 = vpop.f32.mrf.mxu0
      %1819 = vdwg.mxu0
      %1820 = vmatprep.subr.bf16.mxu0 0
      %1821 = vmatpush1.bf16.msra.mxu0 0
      %1822 = vmatprep.subr.bf16.mxu0 0
      %1823 = vmatpush1.bf16.msra.mxu0 0
      %1824 = vmatprep.subr.bf16.mxu0 0
      %1825 = vmatpush1.bf16.msra.mxu0 0
      %1826 = vmatprep.subr.bf16.mxu0 0
      %1827 = vmatpush1.bf16.msra.mxu0 0
      %1828 = vmatprep.subr.bf16.mxu0 0
      %1829 = vmatpush1.bf16.msra.mxu0 0
      %1830 = vmatprep.subr.bf16.mxu0 0
      %1831 = vmatpush1.bf16.msra.mxu0 0
      %1832 = vmatprep.subr.bf16.mxu0 0
      %1833 = vmatpush1.bf16.msra.mxu0 0
      %1834 = vmatprep.subr.bf16.mxu0 0
      %1835 = vmatpush1.bf16.msra.mxu0 %v1777
      %1836 = vmatprep.subr.bf16.mxu0 0
      %1837 = vmatpush2.bf16.msra.mxu0 0
      %1838 = vmatprep.subr.bf16.mxu0 0
      %1839 = vmatpush2.bf16.msra.mxu0 0
      %1840 = vmatprep.subr.bf16.mxu0 0
      %1841 = vmatpush2.bf16.msra.mxu0 0
      %1842 = vmatprep.subr.bf16.mxu0 0
      %1843 = vmatpush2.bf16.msra.mxu0 0
      %1844 = vmatprep.subr.bf16.mxu0 0
      %1845 = vmatpush2.bf16.msra.mxu0 0
      %1846 = vmatprep.subr.bf16.mxu0 0
      %1847 = vmatpush2.bf16.msra.mxu0 0
      %1848 = vmatprep.subr.bf16.mxu0 0
      %1849 = vmatpush2.bf16.msra.mxu0 0
      %1850 = vmatprep.subr.bf16.mxu0 0
      %1851 = vmatpush2.bf16.msra.mxu0 0
      %1852 = vmatprep.mubr.bf16.mxu0 0
      %1853 = vmatmul.mubr.bf16.gmra.mxu0 %v1768
      %v1854 = vpop.f32.mrf.mxu0
      %v1855 = vadd.f32 0.0, %v1854
      %v1856 = vpop.f32.mrf.mxu0
      %v1857 = vpop.f32.mrf.mxu0
      %v1858 = vpop.f32.mrf.mxu0
      %1859 = vdwg.mxu0
      %v1860 = vadd.f32 %v1751, %v1814
      %v1861 = vadd.f32 %v1752, %v1816
      %v1862 = vadd.f32 %v1753, %v1855
      %s1863 = scalar_lea.vmem %s4, 28
      %v1864 = vld [vmem:[%s1863] sm:$0xf]
      %1865 = vrot.lane.b32.xlu0 %v1181, 108
      %v1866 = vpop.permute.xlu0 %1865
      %1867 = vrot.lane.b32.xlu0 %v1182, 108
      %v1868 = vpop.permute.xlu0 %1867
      %1869 = vrot.lane.b32.xlu0 %v1183, 108
      %v1870 = vpop.permute.xlu0 %1869
      %1871 = vrot.lane.b32.xlu0 %v1184, 108
      %v1872 = vpop.permute.xlu0 %1871
      %v1873 = vsel %vm440, %v1866, %v1868
      %v1874 = vsel %vm440, %v1868, %v1870
      %v1875 = vsel %vm440, %v1870, %v1872
      %v1877 = vsel %vm1074, %v1864, 0
      %v1880 = vsel %vm571, %v1873, 0
      %v1883 = vsel %vm571, %v1874, 0
      %v1886 = vsel %vm571, %v1875, 0
      %1888 = vmatprep.subr.bf16.mxu0 0
      %1889 = vmatpush1.bf16.msra.mxu0 0
      %1890 = vmatprep.subr.bf16.mxu0 0
      %1891 = vmatpush1.bf16.msra.mxu0 0
      %1892 = vmatprep.subr.bf16.mxu0 0
      %1893 = vmatpush1.bf16.msra.mxu0 0
      %1894 = vmatprep.subr.bf16.mxu0 0
      %1895 = vmatpush1.bf16.msra.mxu0 0
      %1896 = vmatprep.subr.bf16.mxu0 0
      %1897 = vmatpush1.bf16.msra.mxu0 0
      %1898 = vmatprep.subr.bf16.mxu0 0
      %1899 = vmatpush1.bf16.msra.mxu0 0
      %1900 = vmatprep.subr.bf16.mxu0 0
      %1901 = vmatpush1.bf16.msra.mxu0 0
      %1902 = vmatprep.subr.bf16.mxu0 %v1883
      %1903 = vmatpush1.bf16.msra.mxu0 %v1880
      %1904 = vmatprep.subr.bf16.mxu0 0
      %1905 = vmatpush2.bf16.msra.mxu0 0
      %1906 = vmatprep.subr.bf16.mxu0 0
      %1907 = vmatpush2.bf16.msra.mxu0 0
      %1908 = vmatprep.subr.bf16.mxu0 0
      %1909 = vmatpush2.bf16.msra.mxu0 0
      %1910 = vmatprep.subr.bf16.mxu0 0
      %1911 = vmatpush2.bf16.msra.mxu0 0
      %1912 = vmatprep.subr.bf16.mxu0 0
      %1913 = vmatpush2.bf16.msra.mxu0 0
      %1914 = vmatprep.subr.bf16.mxu0 0
      %1915 = vmatpush2.bf16.msra.mxu0 0
      %1916 = vmatprep.subr.bf16.mxu0 0
      %1917 = vmatpush2.bf16.msra.mxu0 0
      %1918 = vmatprep.subr.bf16.mxu0 0
      %1919 = vmatpush2.bf16.msra.mxu0 0
      %1920 = vmatprep.mubr.bf16.mxu0 0
      %1921 = vmatmul.mubr.bf16.gmra.mxu0 %v1877
      %v1922 = vpop.f32.mrf.mxu0
      %v1923 = vadd.f32 0.0, %v1922
      %v1924 = vpop.f32.mrf.mxu0
      %v1925 = vadd.f32 0.0, %v1924
      %v1926 = vpop.f32.mrf.mxu0
      %v1927 = vpop.f32.mrf.mxu0
      %1928 = vdwg.mxu0
      %1929 = vmatprep.subr.bf16.mxu0 0
      %1930 = vmatpush1.bf16.msra.mxu0 0
      %1931 = vmatprep.subr.bf16.mxu0 0
      %1932 = vmatpush1.bf16.msra.mxu0 0
      %1933 = vmatprep.subr.bf16.mxu0 0
      %1934 = vmatpush1.bf16.msra.mxu0 0
      %1935 = vmatprep.subr.bf16.mxu0 0
      %1936 = vmatpush1.bf16.msra.mxu0 0
      %1937 = vmatprep.subr.bf16.mxu0 0
      %1938 = vmatpush1.bf16.msra.mxu0 0
      %1939 = vmatprep.subr.bf16.mxu0 0
      %1940 = vmatpush1.bf16.msra.mxu0 0
      %1941 = vmatprep.subr.bf16.mxu0 0
      %1942 = vmatpush1.bf16.msra.mxu0 0
      %1943 = vmatprep.subr.bf16.mxu0 0
      %1944 = vmatpush1.bf16.msra.mxu0 %v1886
      %1945 = vmatprep.subr.bf16.mxu0 0
      %1946 = vmatpush2.bf16.msra.mxu0 0
      %1947 = vmatprep.subr.bf16.mxu0 0
      %1948 = vmatpush2.bf16.msra.mxu0 0
      %1949 = vmatprep.subr.bf16.mxu0 0
      %1950 = vmatpush2.bf16.msra.mxu0 0
      %1951 = vmatprep.subr.bf16.mxu0 0
      %1952 = vmatpush2.bf16.msra.mxu0 0
      %1953 = vmatprep.subr.bf16.mxu0 0
      %1954 = vmatpush2.bf16.msra.mxu0 0
      %1955 = vmatprep.subr.bf16.mxu0 0
      %1956 = vmatpush2.bf16.msra.mxu0 0
      %1957 = vmatprep.subr.bf16.mxu0 0
      %1958 = vmatpush2.bf16.msra.mxu0 0
      %1959 = vmatprep.subr.bf16.mxu0 0
      %1960 = vmatpush2.bf16.msra.mxu0 0
      %1961 = vmatprep.mubr.bf16.mxu0 0
      %1962 = vmatmul.mubr.bf16.gmra.mxu0 %v1877
      %v1963 = vpop.f32.mrf.mxu0
      %v1964 = vadd.f32 0.0, %v1963
      %v1965 = vpop.f32.mrf.mxu0
      %v1966 = vpop.f32.mrf.mxu0
      %v1967 = vpop.f32.mrf.mxu0
      %1968 = vdwg.mxu0
      %v1969 = vadd.f32 %v1860, %v1923
      %v1970 = vadd.f32 %v1861, %v1925
      %v1971 = vadd.f32 %v1862, %v1964
      %s1972 = scalar_lea.vmem %s4, 32
      %v1973 = vld [vmem:[%s1972] sm:$0xf]
      %1974 = vrot.lane.b32.xlu0 %v1058, 108
      %v1975 = vpop.permute.xlu0 %1974
      %1976 = vrot.lane.b32.xlu0 %v1059, 108
      %v1977 = vpop.permute.xlu0 %1976
      %1978 = vrot.lane.b32.xlu0 %v1060, 108
      %v1979 = vpop.permute.xlu0 %1978
      %1980 = vrot.lane.b32.xlu0 %v1061, 108
      %v1981 = vpop.permute.xlu0 %1980
      %v1982 = vsel %vm440, %v1975, %v1977
      %v1983 = vsel %vm440, %v1977, %v1979
      %v1984 = vsel %vm440, %v1979, %v1981
      %v1986 = vsel %vm1074, %v1973, 0
      %v1989 = vsel %vm571, %v1982, 0
      %v1992 = vsel %vm571, %v1983, 0
      %v1995 = vsel %vm571, %v1984, 0
      %1997 = vmatprep.subr.bf16.mxu0 0
      %1998 = vmatpush1.bf16.msra.mxu0 0
      %1999 = vmatprep.subr.bf16.mxu0 0
      %2000 = vmatpush1.bf16.msra.mxu0 0
      %2001 = vmatprep.subr.bf16.mxu0 0
      %2002 = vmatpush1.bf16.msra.mxu0 0
      %2003 = vmatprep.subr.bf16.mxu0 0
      %2004 = vmatpush1.bf16.msra.mxu0 0
      %2005 = vmatprep.subr.bf16.mxu0 0
      %2006 = vmatpush1.bf16.msra.mxu0 0
      %2007 = vmatprep.subr.bf16.mxu0 0
      %2008 = vmatpush1.bf16.msra.mxu0 0
      %2009 = vmatprep.subr.bf16.mxu0 0
      %2010 = vmatpush1.bf16.msra.mxu0 0
      %2011 = vmatprep.subr.bf16.mxu0 %v1992
      %2012 = vmatpush1.bf16.msra.mxu0 %v1989
      %2013 = vmatprep.subr.bf16.mxu0 0
      %2014 = vmatpush2.bf16.msra.mxu0 0
      %2015 = vmatprep.subr.bf16.mxu0 0
      %2016 = vmatpush2.bf16.msra.mxu0 0
      %2017 = vmatprep.subr.bf16.mxu0 0
      %2018 = vmatpush2.bf16.msra.mxu0 0
      %2019 = vmatprep.subr.bf16.mxu0 0
      %2020 = vmatpush2.bf16.msra.mxu0 0
      %2021 = vmatprep.subr.bf16.mxu0 0
      %2022 = vmatpush2.bf16.msra.mxu0 0
      %2023 = vmatprep.subr.bf16.mxu0 0
      %2024 = vmatpush2.bf16.msra.mxu0 0
      %2025 = vmatprep.subr.bf16.mxu0 0
      %2026 = vmatpush2.bf16.msra.mxu0 0
      %2027 = vmatprep.subr.bf16.mxu0 0
      %2028 = vmatpush2.bf16.msra.mxu0 0
      %2029 = vmatprep.mubr.bf16.mxu0 0
      %2030 = vmatmul.mubr.bf16.gmra.mxu0 %v1986
      %v2031 = vpop.f32.mrf.mxu0
      %v2032 = vadd.f32 0.0, %v2031
      %v2033 = vpop.f32.mrf.mxu0
      %v2034 = vadd.f32 0.0, %v2033
      %v2035 = vpop.f32.mrf.mxu0
      %v2036 = vpop.f32.mrf.mxu0
      %2037 = vdwg.mxu0
      %2038 = vmatprep.subr.bf16.mxu0 0
      %2039 = vmatpush1.bf16.msra.mxu0 0
      %2040 = vmatprep.subr.bf16.mxu0 0
      %2041 = vmatpush1.bf16.msra.mxu0 0
      %2042 = vmatprep.subr.bf16.mxu0 0
      %2043 = vmatpush1.bf16.msra.mxu0 0
      %2044 = vmatprep.subr.bf16.mxu0 0
      %2045 = vmatpush1.bf16.msra.mxu0 0
      %2046 = vmatprep.subr.bf16.mxu0 0
      %2047 = vmatpush1.bf16.msra.mxu0 0
      %2048 = vmatprep.subr.bf16.mxu0 0
      %2049 = vmatpush1.bf16.msra.mxu0 0
      %2050 = vmatprep.subr.bf16.mxu0 0
      %2051 = vmatpush1.bf16.msra.mxu0 0
      %2052 = vmatprep.subr.bf16.mxu0 0
      %2053 = vmatpush1.bf16.msra.mxu0 %v1995
      %2054 = vmatprep.subr.bf16.mxu0 0
      %2055 = vmatpush2.bf16.msra.mxu0 0
      %2056 = vmatprep.subr.bf16.mxu0 0
      %2057 = vmatpush2.bf16.msra.mxu0 0
      %2058 = vmatprep.subr.bf16.mxu0 0
      %2059 = vmatpush2.bf16.msra.mxu0 0
      %2060 = vmatprep.subr.bf16.mxu0 0
      %2061 = vmatpush2.bf16.msra.mxu0 0
      %2062 = vmatprep.subr.bf16.mxu0 0
      %2063 = vmatpush2.bf16.msra.mxu0 0
      %2064 = vmatprep.subr.bf16.mxu0 0
      %2065 = vmatpush2.bf16.msra.mxu0 0
      %2066 = vmatprep.subr.bf16.mxu0 0
      %2067 = vmatpush2.bf16.msra.mxu0 0
      %2068 = vmatprep.subr.bf16.mxu0 0
      %2069 = vmatpush2.bf16.msra.mxu0 0
      %2070 = vmatprep.mubr.bf16.mxu0 0
      %2071 = vmatmul.mubr.bf16.gmra.mxu0 %v1986
      %v2072 = vpop.f32.mrf.mxu0
      %v2073 = vadd.f32 0.0, %v2072
      %v2074 = vpop.f32.mrf.mxu0
      %v2075 = vpop.f32.mrf.mxu0
      %v2076 = vpop.f32.mrf.mxu0
      %2077 = vdwg.mxu0
      %v2078 = vadd.f32 %v1969, %v2032
      %v2079 = vadd.f32 %v1970, %v2034
      %v2080 = vadd.f32 %v1971, %v2073
      %v2081 = vmul.f32 %v2078, 0.2
      %v2082 = vmul.f32 %v2079, 0.2
      %v2083 = vmul.f32 %v2080, 0.2
      %v2084 = vmax.f32 %v2078, %v2081
      %v2085 = vmax.f32 %v2079, %v2082
      %v2086 = vmax.f32 %v2080, %v2083
      %v2087 = vpack.c.bf16 %v2084, %v2084
      %v2088 = vpack.c.bf16 %v2085, %v2085
      %v2089 = vpack.c.bf16 %v2086, %v2086
      %v2093 = vunpack.c.l.b16 %v2087
      %v2094 = vunpack.c.l.b16 %v2088
      %v2095 = vunpack.c.l.b16 %v2089
      %v2096 = vpack.c.b16 %v2094, %v2093
      %v2097 = vpack.c.b16 %v2095, %v2095
      %2100 = vst [vmem:[%s251] sm:$0xff] %v2096
      %2101 = vst [vmem:[%s251 + $0x8] sm:$0xf] %v2097
      %v2102 = vld [vmem:[%s4] sm:$0xf]
      %v2103 = vld [vmem:[%s888] sm:$0xff]
      %v2104 = vld [vmem:[%s888 + $0x8] sm:$0xff]
      %v2107 = vunpack.c.l.b16 %v2103
      %v2108 = vunpack.c.h.b16 %v2103
      %v2109 = vunpack.c.l.b16 %v2104
      %v2110 = vunpack.c.h.b16 %v2104
      %v2111 = vpack.c.b16 %v2107, %v2107
      %v2112 = vpack.c.b16 %v2108, %v2108
      %v2113 = vpack.c.b16 %v2109, %v2109
      %v2114 = vpack.c.b16 %v2110, %v2110
      %2115 = vrot.lane.b32.xlu0 %v2111, 126
      %v2116 = vpop.permute.xlu0 %2115
      %2117 = vrot.lane.b32.xlu0 %v2112, 126
      %v2118 = vpop.permute.xlu0 %2117
      %2119 = vrot.lane.b32.xlu0 %v2113, 126
      %v2120 = vpop.permute.xlu0 %2119
      %2121 = vrot.lane.b32.xlu0 %v2114, 126
      %v2122 = vpop.permute.xlu0 %2121
      %v2123 = vsel %vm1193, %v2116, %v2118
      %v2124 = vsel %vm1193, %v2118, %v2120
      %v2125 = vsel %vm1193, %v2120, %v2122
      %v2127 = vsel %vm1074, %v2102, 0
      %v2130 = vsel %vm571, %v2123, 0
      %v2133 = vsel %vm571, %v2124, 0
      %v2136 = vsel %vm571, %v2125, 0
      %2138 = vmatprep.subr.bf16.mxu0 0
      %2139 = vmatpush1.bf16.msra.mxu0 0
      %2140 = vmatprep.subr.bf16.mxu0 0
      %2141 = vmatpush1.bf16.msra.mxu0 0
      %2142 = vmatprep.subr.bf16.mxu0 0
      %2143 = vmatpush1.bf16.msra.mxu0 0
      %2144 = vmatprep.subr.bf16.mxu0 0
      %2145 = vmatpush1.bf16.msra.mxu0 0
      %2146 = vmatprep.subr.bf16.mxu0 0
      %2147 = vmatpush1.bf16.msra.mxu0 0
      %2148 = vmatprep.subr.bf16.mxu0 0
      %2149 = vmatpush1.bf16.msra.mxu0 0
      %2150 = vmatprep.subr.bf16.mxu0 0
      %2151 = vmatpush1.bf16.msra.mxu0 0
      %2152 = vmatprep.subr.bf16.mxu0 %v2133
      %2153 = vmatpush1.bf16.msra.mxu0 %v2130
      %2154 = vmatprep.subr.bf16.mxu0 0
      %2155 = vmatpush2.bf16.msra.mxu0 0
      %2156 = vmatprep.subr.bf16.mxu0 0
      %2157 = vmatpush2.bf16.msra.mxu0 0
      %2158 = vmatprep.subr.bf16.mxu0 0
      %2159 = vmatpush2.bf16.msra.mxu0 0
      %2160 = vmatprep.subr.bf16.mxu0 0
      %2161 = vmatpush2.bf16.msra.mxu0 0
      %2162 = vmatprep.subr.bf16.mxu0 0
      %2163 = vmatpush2.bf16.msra.mxu0 0
      %2164 = vmatprep.subr.bf16.mxu0 0
      %2165 = vmatpush2.bf16.msra.mxu0 0
      %2166 = vmatprep.subr.bf16.mxu0 0
      %2167 = vmatpush2.bf16.msra.mxu0 0
      %2168 = vmatprep.subr.bf16.mxu0 0
      %2169 = vmatpush2.bf16.msra.mxu0 0
      %2170 = vmatprep.mubr.bf16.mxu0 0
      %2171 = vmatmul.mubr.bf16.gmra.mxu0 %v2127
      %v2172 = vpop.f32.mrf.mxu0
      %v2173 = vadd.f32 0.0, %v2172
      %v2174 = vpop.f32.mrf.mxu0
      %v2175 = vadd.f32 0.0, %v2174
      %v2176 = vpop.f32.mrf.mxu0
      %v2177 = vpop.f32.mrf.mxu0
      %2178 = vdwg.mxu0
      %2179 = vmatprep.subr.bf16.mxu0 0
      %2180 = vmatpush1.bf16.msra.mxu0 0
      %2181 = vmatprep.subr.bf16.mxu0 0
      %2182 = vmatpush1.bf16.msra.mxu0 0
      %2183 = vmatprep.subr.bf16.mxu0 0
      %2184 = vmatpush1.bf16.msra.mxu0 0
      %2185 = vmatprep.subr.bf16.mxu0 0
      %2186 = vmatpush1.bf16.msra.mxu0 0
      %2187 = vmatprep.subr.bf16.mxu0 0
      %2188 = vmatpush1.bf16.msra.mxu0 0
      %2189 = vmatprep.subr.bf16.mxu0 0
      %2190 = vmatpush1.bf16.msra.mxu0 0
      %2191 = vmatprep.subr.bf16.mxu0 0
      %2192 = vmatpush1.bf16.msra.mxu0 0
      %2193 = vmatprep.subr.bf16.mxu0 0
      %2194 = vmatpush1.bf16.msra.mxu0 %v2136
      %2195 = vmatprep.subr.bf16.mxu0 0
      %2196 = vmatpush2.bf16.msra.mxu0 0
      %2197 = vmatprep.subr.bf16.mxu0 0
      %2198 = vmatpush2.bf16.msra.mxu0 0
      %2199 = vmatprep.subr.bf16.mxu0 0
      %2200 = vmatpush2.bf16.msra.mxu0 0
      %2201 = vmatprep.subr.bf16.mxu0 0
      %2202 = vmatpush2.bf16.msra.mxu0 0
      %2203 = vmatprep.subr.bf16.mxu0 0
      %2204 = vmatpush2.bf16.msra.mxu0 0
      %2205 = vmatprep.subr.bf16.mxu0 0
      %2206 = vmatpush2.bf16.msra.mxu0 0
      %2207 = vmatprep.subr.bf16.mxu0 0
      %2208 = vmatpush2.bf16.msra.mxu0 0
      %2209 = vmatprep.subr.bf16.mxu0 0
      %2210 = vmatpush2.bf16.msra.mxu0 0
      %2211 = vmatprep.mubr.bf16.mxu0 0
      %2212 = vmatmul.mubr.bf16.gmra.mxu0 %v2127
      %v2213 = vpop.f32.mrf.mxu0
      %v2214 = vadd.f32 0.0, %v2213
      %v2215 = vpop.f32.mrf.mxu0
      %v2216 = vpop.f32.mrf.mxu0
      %v2217 = vpop.f32.mrf.mxu0
      %2218 = vdwg.mxu0
      %v2219 = vadd.f32 %v409, %v2173
      %v2220 = vadd.f32 %v409, %v2175
      %v2221 = vadd.f32 %v409, %v2214
      %v2222 = vld [vmem:[%s1171] sm:$0xf]
      %v2223 = vld [vmem:[%s1046] sm:$0xff]
      %v2224 = vld [vmem:[%s1046 + $0x8] sm:$0xff]
      %v2227 = vunpack.c.l.b16 %v2223
      %v2228 = vunpack.c.h.b16 %v2223
      %v2229 = vunpack.c.l.b16 %v2224
      %v2230 = vunpack.c.h.b16 %v2224
      %v2231 = vpack.c.b16 %v2227, %v2227
      %v2232 = vpack.c.b16 %v2228, %v2228
      %v2233 = vpack.c.b16 %v2229, %v2229
      %v2234 = vpack.c.b16 %v2230, %v2230
      %2235 = vrot.lane.b32.xlu0 %v2231, 126
      %v2236 = vpop.permute.xlu0 %2235
      %2237 = vrot.lane.b32.xlu0 %v2232, 126
      %v2238 = vpop.permute.xlu0 %2237
      %2239 = vrot.lane.b32.xlu0 %v2233, 126
      %v2240 = vpop.permute.xlu0 %2239
      %2241 = vrot.lane.b32.xlu0 %v2234, 126
      %v2242 = vpop.permute.xlu0 %2241
      %v2243 = vsel %vm1193, %v2236, %v2238
      %v2244 = vsel %vm1193, %v2238, %v2240
      %v2245 = vsel %vm1193, %v2240, %v2242
      %v2247 = vsel %vm1074, %v2222, 0
      %v2250 = vsel %vm571, %v2243, 0
      %v2253 = vsel %vm571, %v2244, 0
      %v2256 = vsel %vm571, %v2245, 0
      %2258 = vmatprep.subr.bf16.mxu0 0
      %2259 = vmatpush1.bf16.msra.mxu0 0
      %2260 = vmatprep.subr.bf16.mxu0 0
      %2261 = vmatpush1.bf16.msra.mxu0 0
      %2262 = vmatprep.subr.bf16.mxu0 0
      %2263 = vmatpush1.bf16.msra.mxu0 0
      %2264 = vmatprep.subr.bf16.mxu0 0
      %2265 = vmatpush1.bf16.msra.mxu0 0
      %2266 = vmatprep.subr.bf16.mxu0 0
      %2267 = vmatpush1.bf16.msra.mxu0 0
      %2268 = vmatprep.subr.bf16.mxu0 0
      %2269 = vmatpush1.bf16.msra.mxu0 0
      %2270 = vmatprep.subr.bf16.mxu0 0
      %2271 = vmatpush1.bf16.msra.mxu0 0
      %2272 = vmatprep.subr.bf16.mxu0 %v2253
      %2273 = vmatpush1.bf16.msra.mxu0 %v2250
      %2274 = vmatprep.subr.bf16.mxu0 0
      %2275 = vmatpush2.bf16.msra.mxu0 0
      %2276 = vmatprep.subr.bf16.mxu0 0
      %2277 = vmatpush2.bf16.msra.mxu0 0
      %2278 = vmatprep.subr.bf16.mxu0 0
      %2279 = vmatpush2.bf16.msra.mxu0 0
      %2280 = vmatprep.subr.bf16.mxu0 0
      %2281 = vmatpush2.bf16.msra.mxu0 0
      %2282 = vmatprep.subr.bf16.mxu0 0
      %2283 = vmatpush2.bf16.msra.mxu0 0
      %2284 = vmatprep.subr.bf16.mxu0 0
      %2285 = vmatpush2.bf16.msra.mxu0 0
      %2286 = vmatprep.subr.bf16.mxu0 0
      %2287 = vmatpush2.bf16.msra.mxu0 0
      %2288 = vmatprep.subr.bf16.mxu0 0
      %2289 = vmatpush2.bf16.msra.mxu0 0
      %2290 = vmatprep.mubr.bf16.mxu0 0
      %2291 = vmatmul.mubr.bf16.gmra.mxu0 %v2247
      %v2292 = vpop.f32.mrf.mxu0
      %v2293 = vadd.f32 0.0, %v2292
      %v2294 = vpop.f32.mrf.mxu0
      %v2295 = vadd.f32 0.0, %v2294
      %v2296 = vpop.f32.mrf.mxu0
      %v2297 = vpop.f32.mrf.mxu0
      %2298 = vdwg.mxu0
      %2299 = vmatprep.subr.bf16.mxu0 0
      %2300 = vmatpush1.bf16.msra.mxu0 0
      %2301 = vmatprep.subr.bf16.mxu0 0
      %2302 = vmatpush1.bf16.msra.mxu0 0
      %2303 = vmatprep.subr.bf16.mxu0 0
      %2304 = vmatpush1.bf16.msra.mxu0 0
      %2305 = vmatprep.subr.bf16.mxu0 0
      %2306 = vmatpush1.bf16.msra.mxu0 0
      %2307 = vmatprep.subr.bf16.mxu0 0
      %2308 = vmatpush1.bf16.msra.mxu0 0
      %2309 = vmatprep.subr.bf16.mxu0 0
      %2310 = vmatpush1.bf16.msra.mxu0 0
      %2311 = vmatprep.subr.bf16.mxu0 0
      %2312 = vmatpush1.bf16.msra.mxu0 0
      %2313 = vmatprep.subr.bf16.mxu0 0
      %2314 = vmatpush1.bf16.msra.mxu0 %v2256
      %2315 = vmatprep.subr.bf16.mxu0 0
      %2316 = vmatpush2.bf16.msra.mxu0 0
      %2317 = vmatprep.subr.bf16.mxu0 0
      %2318 = vmatpush2.bf16.msra.mxu0 0
      %2319 = vmatprep.subr.bf16.mxu0 0
      %2320 = vmatpush2.bf16.msra.mxu0 0
      %2321 = vmatprep.subr.bf16.mxu0 0
      %2322 = vmatpush2.bf16.msra.mxu0 0
      %2323 = vmatprep.subr.bf16.mxu0 0
      %2324 = vmatpush2.bf16.msra.mxu0 0
      %2325 = vmatprep.subr.bf16.mxu0 0
      %2326 = vmatpush2.bf16.msra.mxu0 0
      %2327 = vmatprep.subr.bf16.mxu0 0
      %2328 = vmatpush2.bf16.msra.mxu0 0
      %2329 = vmatprep.subr.bf16.mxu0 0
      %2330 = vmatpush2.bf16.msra.mxu0 0
      %2331 = vmatprep.mubr.bf16.mxu0 0
      %2332 = vmatmul.mubr.bf16.gmra.mxu0 %v2247
      %v2333 = vpop.f32.mrf.mxu0
      %v2334 = vadd.f32 0.0, %v2333
      %v2335 = vpop.f32.mrf.mxu0
      %v2336 = vpop.f32.mrf.mxu0
      %v2337 = vpop.f32.mrf.mxu0
      %2338 = vdwg.mxu0
      %v2339 = vadd.f32 %v2219, %v2293
      %v2340 = vadd.f32 %v2220, %v2295
      %v2341 = vadd.f32 %v2221, %v2334
      %v2342 = vld [vmem:[%s1293] sm:$0xf]
      %2343 = vrot.lane.b32.xlu0 %v2111, 125
      %v2344 = vpop.permute.xlu0 %2343
      %2345 = vrot.lane.b32.xlu0 %v2112, 125
      %v2346 = vpop.permute.xlu0 %2345
      %2347 = vrot.lane.b32.xlu0 %v2113, 125
      %v2348 = vpop.permute.xlu0 %2347
      %2349 = vrot.lane.b32.xlu0 %v2114, 125
      %v2350 = vpop.permute.xlu0 %2349
      %vm2351 = vcmask 1022976
      %v2352 = vsel %vm2351, %v2344, %v2346
      %v2353 = vsel %vm2351, %v2346, %v2348
      %v2354 = vsel %vm2351, %v2348, %v2350
      %v2356 = vsel %vm1074, %v2342, 0
      %v2359 = vsel %vm571, %v2352, 0
      %v2362 = vsel %vm571, %v2353, 0
      %v2365 = vsel %vm571, %v2354, 0
      %2367 = vmatprep.subr.bf16.mxu0 0
      %2368 = vmatpush1.bf16.msra.mxu0 0
      %2369 = vmatprep.subr.bf16.mxu0 0
      %2370 = vmatpush1.bf16.msra.mxu0 0
      %2371 = vmatprep.subr.bf16.mxu0 0
      %2372 = vmatpush1.bf16.msra.mxu0 0
      %2373 = vmatprep.subr.bf16.mxu0 0
      %2374 = vmatpush1.bf16.msra.mxu0 0
      %2375 = vmatprep.subr.bf16.mxu0 0
      %2376 = vmatpush1.bf16.msra.mxu0 0
      %2377 = vmatprep.subr.bf16.mxu0 0
      %2378 = vmatpush1.bf16.msra.mxu0 0
      %2379 = vmatprep.subr.bf16.mxu0 0
      %2380 = vmatpush1.bf16.msra.mxu0 0
      %2381 = vmatprep.subr.bf16.mxu0 %v2362
      %2382 = vmatpush1.bf16.msra.mxu0 %v2359
      %2383 = vmatprep.subr.bf16.mxu0 0
      %2384 = vmatpush2.bf16.msra.mxu0 0
      %2385 = vmatprep.subr.bf16.mxu0 0
      %2386 = vmatpush2.bf16.msra.mxu0 0
      %2387 = vmatprep.subr.bf16.mxu0 0
      %2388 = vmatpush2.bf16.msra.mxu0 0
      %2389 = vmatprep.subr.bf16.mxu0 0
      %2390 = vmatpush2.bf16.msra.mxu0 0
      %2391 = vmatprep.subr.bf16.mxu0 0
      %2392 = vmatpush2.bf16.msra.mxu0 0
      %2393 = vmatprep.subr.bf16.mxu0 0
      %2394 = vmatpush2.bf16.msra.mxu0 0
      %2395 = vmatprep.subr.bf16.mxu0 0
      %2396 = vmatpush2.bf16.msra.mxu0 0
      %2397 = vmatprep.subr.bf16.mxu0 0
      %2398 = vmatpush2.bf16.msra.mxu0 0
      %2399 = vmatprep.mubr.bf16.mxu0 0
      %2400 = vmatmul.mubr.bf16.gmra.mxu0 %v2356
      %v2401 = vpop.f32.mrf.mxu0
      %v2402 = vadd.f32 0.0, %v2401
      %v2403 = vpop.f32.mrf.mxu0
      %v2404 = vadd.f32 0.0, %v2403
      %v2405 = vpop.f32.mrf.mxu0
      %v2406 = vpop.f32.mrf.mxu0
      %2407 = vdwg.mxu0
      %2408 = vmatprep.subr.bf16.mxu0 0
      %2409 = vmatpush1.bf16.msra.mxu0 0
      %2410 = vmatprep.subr.bf16.mxu0 0
      %2411 = vmatpush1.bf16.msra.mxu0 0
      %2412 = vmatprep.subr.bf16.mxu0 0
      %2413 = vmatpush1.bf16.msra.mxu0 0
      %2414 = vmatprep.subr.bf16.mxu0 0
      %2415 = vmatpush1.bf16.msra.mxu0 0
      %2416 = vmatprep.subr.bf16.mxu0 0
      %2417 = vmatpush1.bf16.msra.mxu0 0
      %2418 = vmatprep.subr.bf16.mxu0 0
      %2419 = vmatpush1.bf16.msra.mxu0 0
      %2420 = vmatprep.subr.bf16.mxu0 0
      %2421 = vmatpush1.bf16.msra.mxu0 0
      %2422 = vmatprep.subr.bf16.mxu0 0
      %2423 = vmatpush1.bf16.msra.mxu0 %v2365
      %2424 = vmatprep.subr.bf16.mxu0 0
      %2425 = vmatpush2.bf16.msra.mxu0 0
      %2426 = vmatprep.subr.bf16.mxu0 0
      %2427 = vmatpush2.bf16.msra.mxu0 0
      %2428 = vmatprep.subr.bf16.mxu0 0
      %2429 = vmatpush2.bf16.msra.mxu0 0
      %2430 = vmatprep.subr.bf16.mxu0 0
      %2431 = vmatpush2.bf16.msra.mxu0 0
      %2432 = vmatprep.subr.bf16.mxu0 0
      %2433 = vmatpush2.bf16.msra.mxu0 0
      %2434 = vmatprep.subr.bf16.mxu0 0
      %2435 = vmatpush2.bf16.msra.mxu0 0
      %2436 = vmatprep.subr.bf16.mxu0 0
      %2437 = vmatpush2.bf16.msra.mxu0 0
      %2438 = vmatprep.subr.bf16.mxu0 0
      %2439 = vmatpush2.bf16.msra.mxu0 0
      %2440 = vmatprep.mubr.bf16.mxu0 0
      %2441 = vmatmul.mubr.bf16.gmra.mxu0 %v2356
      %v2442 = vpop.f32.mrf.mxu0
      %v2443 = vadd.f32 0.0, %v2442
      %v2444 = vpop.f32.mrf.mxu0
      %v2445 = vpop.f32.mrf.mxu0
      %v2446 = vpop.f32.mrf.mxu0
      %2447 = vdwg.mxu0
      %v2448 = vadd.f32 %v2339, %v2402
      %v2449 = vadd.f32 %v2340, %v2404
      %v2450 = vadd.f32 %v2341, %v2443
      %v2451 = vld [vmem:[%s1402] sm:$0xf]
      %v2452 = vld [vmem:[#allocation3] sm:$0xff]
      %v2453 = vld [vmem:[#allocation3 + $0x8] sm:$0xff]
      %v2456 = vunpack.c.l.b16 %v2452
      %v2457 = vunpack.c.h.b16 %v2452
      %v2458 = vunpack.c.l.b16 %v2453
      %v2459 = vunpack.c.h.b16 %v2453
      %v2460 = vpack.c.b16 %v2456, %v2456
      %v2461 = vpack.c.b16 %v2457, %v2457
      %v2462 = vpack.c.b16 %v2458, %v2458
      %v2463 = vpack.c.b16 %v2459, %v2459
      %2464 = vrot.lane.b32.xlu0 %v2460, 108
      %v2465 = vpop.permute.xlu0 %2464
      %2466 = vrot.lane.b32.xlu0 %v2461, 108
      %v2467 = vpop.permute.xlu0 %2466
      %2468 = vrot.lane.b32.xlu0 %v2462, 108
      %v2469 = vpop.permute.xlu0 %2468
      %2470 = vrot.lane.b32.xlu0 %v2463, 108
      %v2471 = vpop.permute.xlu0 %2470
      %v2472 = vsel %vm440, %v2465, %v2467
      %v2473 = vsel %vm440, %v2467, %v2469
      %v2474 = vsel %vm440, %v2469, %v2471
      %v2476 = vsel %vm1074, %v2451, 0
      %v2479 = vsel %vm571, %v2472, 0
      %v2482 = vsel %vm571, %v2473, 0
      %v2485 = vsel %vm571, %v2474, 0
      %2487 = vmatprep.subr.bf16.mxu0 0
      %2488 = vmatpush1.bf16.msra.mxu0 0
      %2489 = vmatprep.subr.bf16.mxu0 0
      %2490 = vmatpush1.bf16.msra.mxu0 0
      %2491 = vmatprep.subr.bf16.mxu0 0
      %2492 = vmatpush1.bf16.msra.mxu0 0
      %2493 = vmatprep.subr.bf16.mxu0 0
      %2494 = vmatpush1.bf16.msra.mxu0 0
      %2495 = vmatprep.subr.bf16.mxu0 0
      %2496 = vmatpush1.bf16.msra.mxu0 0
      %2497 = vmatprep.subr.bf16.mxu0 0
      %2498 = vmatpush1.bf16.msra.mxu0 0
      %2499 = vmatprep.subr.bf16.mxu0 0
      %2500 = vmatpush1.bf16.msra.mxu0 0
      %2501 = vmatprep.subr.bf16.mxu0 %v2482
      %2502 = vmatpush1.bf16.msra.mxu0 %v2479
      %2503 = vmatprep.subr.bf16.mxu0 0
      %2504 = vmatpush2.bf16.msra.mxu0 0
      %2505 = vmatprep.subr.bf16.mxu0 0
      %2506 = vmatpush2.bf16.msra.mxu0 0
      %2507 = vmatprep.subr.bf16.mxu0 0
      %2508 = vmatpush2.bf16.msra.mxu0 0
      %2509 = vmatprep.subr.bf16.mxu0 0
      %2510 = vmatpush2.bf16.msra.mxu0 0
      %2511 = vmatprep.subr.bf16.mxu0 0
      %2512 = vmatpush2.bf16.msra.mxu0 0
      %2513 = vmatprep.subr.bf16.mxu0 0
      %2514 = vmatpush2.bf16.msra.mxu0 0
      %2515 = vmatprep.subr.bf16.mxu0 0
      %2516 = vmatpush2.bf16.msra.mxu0 0
      %2517 = vmatprep.subr.bf16.mxu0 0
      %2518 = vmatpush2.bf16.msra.mxu0 0
      %2519 = vmatprep.mubr.bf16.mxu0 0
      %2520 = vmatmul.mubr.bf16.gmra.mxu0 %v2476
      %v2521 = vpop.f32.mrf.mxu0
      %v2522 = vadd.f32 0.0, %v2521
      %v2523 = vpop.f32.mrf.mxu0
      %v2524 = vadd.f32 0.0, %v2523
      %v2525 = vpop.f32.mrf.mxu0
      %v2526 = vpop.f32.mrf.mxu0
      %2527 = vdwg.mxu0
      %2528 = vmatprep.subr.bf16.mxu0 0
      %2529 = vmatpush1.bf16.msra.mxu0 0
      %2530 = vmatprep.subr.bf16.mxu0 0
      %2531 = vmatpush1.bf16.msra.mxu0 0
      %2532 = vmatprep.subr.bf16.mxu0 0
      %2533 = vmatpush1.bf16.msra.mxu0 0
      %2534 = vmatprep.subr.bf16.mxu0 0
      %2535 = vmatpush1.bf16.msra.mxu0 0
      %2536 = vmatprep.subr.bf16.mxu0 0
      %2537 = vmatpush1.bf16.msra.mxu0 0
      %2538 = vmatprep.subr.bf16.mxu0 0
      %2539 = vmatpush1.bf16.msra.mxu0 0
      %2540 = vmatprep.subr.bf16.mxu0 0
      %2541 = vmatpush1.bf16.msra.mxu0 0
      %2542 = vmatprep.subr.bf16.mxu0 0
      %2543 = vmatpush1.bf16.msra.mxu0 %v2485
      %2544 = vmatprep.subr.bf16.mxu0 0
      %2545 = vmatpush2.bf16.msra.mxu0 0
      %2546 = vmatprep.subr.bf16.mxu0 0
      %2547 = vmatpush2.bf16.msra.mxu0 0
      %2548 = vmatprep.subr.bf16.mxu0 0
      %2549 = vmatpush2.bf16.msra.mxu0 0
      %2550 = vmatprep.subr.bf16.mxu0 0
      %2551 = vmatpush2.bf16.msra.mxu0 0
      %2552 = vmatprep.subr.bf16.mxu0 0
      %2553 = vmatpush2.bf16.msra.mxu0 0
      %2554 = vmatprep.subr.bf16.mxu0 0
      %2555 = vmatpush2.bf16.msra.mxu0 0
      %2556 = vmatprep.subr.bf16.mxu0 0
      %2557 = vmatpush2.bf16.msra.mxu0 0
      %2558 = vmatprep.subr.bf16.mxu0 0
      %2559 = vmatpush2.bf16.msra.mxu0 0
      %2560 = vmatprep.mubr.bf16.mxu0 0
      %2561 = vmatmul.mubr.bf16.gmra.mxu0 %v2476
      %v2562 = vpop.f32.mrf.mxu0
      %v2563 = vadd.f32 0.0, %v2562
      %v2564 = vpop.f32.mrf.mxu0
      %v2565 = vpop.f32.mrf.mxu0
      %v2566 = vpop.f32.mrf.mxu0
      %2567 = vdwg.mxu0
      %v2568 = vadd.f32 %v2448, %v2522
      %v2569 = vadd.f32 %v2449, %v2524
      %v2570 = vadd.f32 %v2450, %v2563
      %v2571 = vld [vmem:[%s1524] sm:$0xf]
      %v2572 = vld [vmem:[%s730] sm:$0xff]
      %v2573 = vld [vmem:[%s730 + $0x8] sm:$0xff]
      %v2576 = vunpack.c.l.b16 %v2572
      %v2577 = vunpack.c.h.b16 %v2572
      %v2578 = vunpack.c.l.b16 %v2573
      %v2579 = vunpack.c.h.b16 %v2573
      %v2580 = vpack.c.b16 %v2576, %v2576
      %v2581 = vpack.c.b16 %v2577, %v2577
      %v2582 = vpack.c.b16 %v2578, %v2578
      %v2583 = vpack.c.b16 %v2579, %v2579
      %2584 = vrot.lane.b32.xlu0 %v2580, 108
      %v2585 = vpop.permute.xlu0 %2584
      %2586 = vrot.lane.b32.xlu0 %v2581, 108
      %v2587 = vpop.permute.xlu0 %2586
      %2588 = vrot.lane.b32.xlu0 %v2582, 108
      %v2589 = vpop.permute.xlu0 %2588
      %2590 = vrot.lane.b32.xlu0 %v2583, 108
      %v2591 = vpop.permute.xlu0 %2590
      %v2592 = vsel %vm440, %v2585, %v2587
      %v2593 = vsel %vm440, %v2587, %v2589
      %v2594 = vsel %vm440, %v2589, %v2591
      %v2596 = vsel %vm1074, %v2571, 0
      %v2599 = vsel %vm571, %v2592, 0
      %v2602 = vsel %vm571, %v2593, 0
      %v2605 = vsel %vm571, %v2594, 0
      %2607 = vmatprep.subr.bf16.mxu0 0
      %2608 = vmatpush1.bf16.msra.mxu0 0
      %2609 = vmatprep.subr.bf16.mxu0 0
      %2610 = vmatpush1.bf16.msra.mxu0 0
      %2611 = vmatprep.subr.bf16.mxu0 0
      %2612 = vmatpush1.bf16.msra.mxu0 0
      %2613 = vmatprep.subr.bf16.mxu0 0
      %2614 = vmatpush1.bf16.msra.mxu0 0
      %2615 = vmatprep.subr.bf16.mxu0 0
      %2616 = vmatpush1.bf16.msra.mxu0 0
      %2617 = vmatprep.subr.bf16.mxu0 0
      %2618 = vmatpush1.bf16.msra.mxu0 0
      %2619 = vmatprep.subr.bf16.mxu0 0
      %2620 = vmatpush1.bf16.msra.mxu0 0
      %2621 = vmatprep.subr.bf16.mxu0 %v2602
      %2622 = vmatpush1.bf16.msra.mxu0 %v2599
      %2623 = vmatprep.subr.bf16.mxu0 0
      %2624 = vmatpush2.bf16.msra.mxu0 0
      %2625 = vmatprep.subr.bf16.mxu0 0
      %2626 = vmatpush2.bf16.msra.mxu0 0
      %2627 = vmatprep.subr.bf16.mxu0 0
      %2628 = vmatpush2.bf16.msra.mxu0 0
      %2629 = vmatprep.subr.bf16.mxu0 0
      %2630 = vmatpush2.bf16.msra.mxu0 0
      %2631 = vmatprep.subr.bf16.mxu0 0
      %2632 = vmatpush2.bf16.msra.mxu0 0
      %2633 = vmatprep.subr.bf16.mxu0 0
      %2634 = vmatpush2.bf16.msra.mxu0 0
      %2635 = vmatprep.subr.bf16.mxu0 0
      %2636 = vmatpush2.bf16.msra.mxu0 0
      %2637 = vmatprep.subr.bf16.mxu0 0
      %2638 = vmatpush2.bf16.msra.mxu0 0
      %2639 = vmatprep.mubr.bf16.mxu0 0
      %2640 = vmatmul.mubr.bf16.gmra.mxu0 %v2596
      %v2641 = vpop.f32.mrf.mxu0
      %v2642 = vadd.f32 0.0, %v2641
      %v2643 = vpop.f32.mrf.mxu0
      %v2644 = vadd.f32 0.0, %v2643
      %v2645 = vpop.f32.mrf.mxu0
      %v2646 = vpop.f32.mrf.mxu0
      %2647 = vdwg.mxu0
      %2648 = vmatprep.subr.bf16.mxu0 0
      %2649 = vmatpush1.bf16.msra.mxu0 0
      %2650 = vmatprep.subr.bf16.mxu0 0
      %2651 = vmatpush1.bf16.msra.mxu0 0
      %2652 = vmatprep.subr.bf16.mxu0 0
      %2653 = vmatpush1.bf16.msra.mxu0 0
      %2654 = vmatprep.subr.bf16.mxu0 0
      %2655 = vmatpush1.bf16.msra.mxu0 0
      %2656 = vmatprep.subr.bf16.mxu0 0
      %2657 = vmatpush1.bf16.msra.mxu0 0
      %2658 = vmatprep.subr.bf16.mxu0 0
      %2659 = vmatpush1.bf16.msra.mxu0 0
      %2660 = vmatprep.subr.bf16.mxu0 0
      %2661 = vmatpush1.bf16.msra.mxu0 0
      %2662 = vmatprep.subr.bf16.mxu0 0
      %2663 = vmatpush1.bf16.msra.mxu0 %v2605
      %2664 = vmatprep.subr.bf16.mxu0 0
      %2665 = vmatpush2.bf16.msra.mxu0 0
      %2666 = vmatprep.subr.bf16.mxu0 0
      %2667 = vmatpush2.bf16.msra.mxu0 0
      %2668 = vmatprep.subr.bf16.mxu0 0
      %2669 = vmatpush2.bf16.msra.mxu0 0
      %2670 = vmatprep.subr.bf16.mxu0 0
      %2671 = vmatpush2.bf16.msra.mxu0 0
      %2672 = vmatprep.subr.bf16.mxu0 0
      %2673 = vmatpush2.bf16.msra.mxu0 0
      %2674 = vmatprep.subr.bf16.mxu0 0
      %2675 = vmatpush2.bf16.msra.mxu0 0
      %2676 = vmatprep.subr.bf16.mxu0 0
      %2677 = vmatpush2.bf16.msra.mxu0 0
      %2678 = vmatprep.subr.bf16.mxu0 0
      %2679 = vmatpush2.bf16.msra.mxu0 0
      %2680 = vmatprep.mubr.bf16.mxu0 0
      %2681 = vmatmul.mubr.bf16.gmra.mxu0 %v2596
      %v2682 = vpop.f32.mrf.mxu0
      %v2683 = vadd.f32 0.0, %v2682
      %v2684 = vpop.f32.mrf.mxu0
      %v2685 = vpop.f32.mrf.mxu0
      %v2686 = vpop.f32.mrf.mxu0
      %2687 = vdwg.mxu0
      %v2688 = vadd.f32 %v2568, %v2642
      %v2689 = vadd.f32 %v2569, %v2644
      %v2690 = vadd.f32 %v2570, %v2683
      %v2691 = vld [vmem:[%s1645] sm:$0xf]
      %2692 = vrot.lane.b32.xlu0 %v2460, 107
      %v2693 = vpop.permute.xlu0 %2692
      %2694 = vrot.lane.b32.xlu0 %v2461, 107
      %v2695 = vpop.permute.xlu0 %2694
      %2696 = vrot.lane.b32.xlu0 %v2462, 107
      %v2697 = vpop.permute.xlu0 %2696
      %2698 = vrot.lane.b32.xlu0 %v2463, 107
      %v2699 = vpop.permute.xlu0 %2698
      %v2700 = vsel %vm605, %v2693, %v2695
      %v2701 = vsel %vm605, %v2695, %v2697
      %v2702 = vsel %vm605, %v2697, %v2699
      %v2704 = vsel %vm1074, %v2691, 0
      %v2707 = vsel %vm571, %v2700, 0
      %v2710 = vsel %vm571, %v2701, 0
      %v2713 = vsel %vm571, %v2702, 0
      %2715 = vmatprep.subr.bf16.mxu0 0
      %2716 = vmatpush1.bf16.msra.mxu0 0
      %2717 = vmatprep.subr.bf16.mxu0 0
      %2718 = vmatpush1.bf16.msra.mxu0 0
      %2719 = vmatprep.subr.bf16.mxu0 0
      %2720 = vmatpush1.bf16.msra.mxu0 0
      %2721 = vmatprep.subr.bf16.mxu0 0
      %2722 = vmatpush1.bf16.msra.mxu0 0
      %2723 = vmatprep.subr.bf16.mxu0 0
      %2724 = vmatpush1.bf16.msra.mxu0 0
      %2725 = vmatprep.subr.bf16.mxu0 0
      %2726 = vmatpush1.bf16.msra.mxu0 0
      %2727 = vmatprep.subr.bf16.mxu0 0
      %2728 = vmatpush1.bf16.msra.mxu0 0
      %2729 = vmatprep.subr.bf16.mxu0 %v2710
      %2730 = vmatpush1.bf16.msra.mxu0 %v2707
      %2731 = vmatprep.subr.bf16.mxu0 0
      %2732 = vmatpush2.bf16.msra.mxu0 0
      %2733 = vmatprep.subr.bf16.mxu0 0
      %2734 = vmatpush2.bf16.msra.mxu0 0
      %2735 = vmatprep.subr.bf16.mxu0 0
      %2736 = vmatpush2.bf16.msra.mxu0 0
      %2737 = vmatprep.subr.bf16.mxu0 0
      %2738 = vmatpush2.bf16.msra.mxu0 0
      %2739 = vmatprep.subr.bf16.mxu0 0
      %2740 = vmatpush2.bf16.msra.mxu0 0
      %2741 = vmatprep.subr.bf16.mxu0 0
      %2742 = vmatpush2.bf16.msra.mxu0 0
      %2743 = vmatprep.subr.bf16.mxu0 0
      %2744 = vmatpush2.bf16.msra.mxu0 0
      %2745 = vmatprep.subr.bf16.mxu0 0
      %2746 = vmatpush2.bf16.msra.mxu0 0
      %2747 = vmatprep.mubr.bf16.mxu0 0
      %2748 = vmatmul.mubr.bf16.gmra.mxu0 %v2704
      %v2749 = vpop.f32.mrf.mxu0
      %v2750 = vadd.f32 0.0, %v2749
      %v2751 = vpop.f32.mrf.mxu0
      %v2752 = vadd.f32 0.0, %v2751
      %v2753 = vpop.f32.mrf.mxu0
      %v2754 = vpop.f32.mrf.mxu0
      %2755 = vdwg.mxu0
      %2756 = vmatprep.subr.bf16.mxu0 0
      %2757 = vmatpush1.bf16.msra.mxu0 0
      %2758 = vmatprep.subr.bf16.mxu0 0
      %2759 = vmatpush1.bf16.msra.mxu0 0
      %2760 = vmatprep.subr.bf16.mxu0 0
      %2761 = vmatpush1.bf16.msra.mxu0 0
      %2762 = vmatprep.subr.bf16.mxu0 0
      %2763 = vmatpush1.bf16.msra.mxu0 0
      %2764 = vmatprep.subr.bf16.mxu0 0
      %2765 = vmatpush1.bf16.msra.mxu0 0
      %2766 = vmatprep.subr.bf16.mxu0 0
      %2767 = vmatpush1.bf16.msra.mxu0 0
      %2768 = vmatprep.subr.bf16.mxu0 0
      %2769 = vmatpush1.bf16.msra.mxu0 0
      %2770 = vmatprep.subr.bf16.mxu0 0
      %2771 = vmatpush1.bf16.msra.mxu0 %v2713
      %2772 = vmatprep.subr.bf16.mxu0 0
      %2773 = vmatpush2.bf16.msra.mxu0 0
      %2774 = vmatprep.subr.bf16.mxu0 0
      %2775 = vmatpush2.bf16.msra.mxu0 0
      %2776 = vmatprep.subr.bf16.mxu0 0
      %2777 = vmatpush2.bf16.msra.mxu0 0
      %2778 = vmatprep.subr.bf16.mxu0 0
      %2779 = vmatpush2.bf16.msra.mxu0 0
      %2780 = vmatprep.subr.bf16.mxu0 0
      %2781 = vmatpush2.bf16.msra.mxu0 0
      %2782 = vmatprep.subr.bf16.mxu0 0
      %2783 = vmatpush2.bf16.msra.mxu0 0
      %2784 = vmatprep.subr.bf16.mxu0 0
      %2785 = vmatpush2.bf16.msra.mxu0 0
      %2786 = vmatprep.subr.bf16.mxu0 0
      %2787 = vmatpush2.bf16.msra.mxu0 0
      %2788 = vmatprep.mubr.bf16.mxu0 0
      %2789 = vmatmul.mubr.bf16.gmra.mxu0 %v2704
      %v2790 = vpop.f32.mrf.mxu0
      %v2791 = vadd.f32 0.0, %v2790
      %v2792 = vpop.f32.mrf.mxu0
      %v2793 = vpop.f32.mrf.mxu0
      %v2794 = vpop.f32.mrf.mxu0
      %2795 = vdwg.mxu0
      %v2796 = vadd.f32 %v2688, %v2750
      %v2797 = vadd.f32 %v2689, %v2752
      %v2798 = vadd.f32 %v2690, %v2791
      %v2799 = vld [vmem:[%s1754] sm:$0xf]
      %2800 = vrot.lane.b32.xlu0 %v2111, 108
      %v2801 = vpop.permute.xlu0 %2800
      %2802 = vrot.lane.b32.xlu0 %v2112, 108
      %v2803 = vpop.permute.xlu0 %2802
      %2804 = vrot.lane.b32.xlu0 %v2113, 108
      %v2805 = vpop.permute.xlu0 %2804
      %2806 = vrot.lane.b32.xlu0 %v2114, 108
      %v2807 = vpop.permute.xlu0 %2806
      %v2808 = vsel %vm440, %v2801, %v2803
      %v2809 = vsel %vm440, %v2803, %v2805
      %v2810 = vsel %vm440, %v2805, %v2807
      %v2812 = vsel %vm1074, %v2799, 0
      %v2815 = vsel %vm571, %v2808, 0
      %v2818 = vsel %vm571, %v2809, 0
      %v2821 = vsel %vm571, %v2810, 0
      %2823 = vmatprep.subr.bf16.mxu0 0
      %2824 = vmatpush1.bf16.msra.mxu0 0
      %2825 = vmatprep.subr.bf16.mxu0 0
      %2826 = vmatpush1.bf16.msra.mxu0 0
      %2827 = vmatprep.subr.bf16.mxu0 0
      %2828 = vmatpush1.bf16.msra.mxu0 0
      %2829 = vmatprep.subr.bf16.mxu0 0
      %2830 = vmatpush1.bf16.msra.mxu0 0
      %2831 = vmatprep.subr.bf16.mxu0 0
      %2832 = vmatpush1.bf16.msra.mxu0 0
      %2833 = vmatprep.subr.bf16.mxu0 0
      %2834 = vmatpush1.bf16.msra.mxu0 0
      %2835 = vmatprep.subr.bf16.mxu0 0
      %2836 = vmatpush1.bf16.msra.mxu0 0
      %2837 = vmatprep.subr.bf16.mxu0 %v2818
      %2838 = vmatpush1.bf16.msra.mxu0 %v2815
      %2839 = vmatprep.subr.bf16.mxu0 0
      %2840 = vmatpush2.bf16.msra.mxu0 0
      %2841 = vmatprep.subr.bf16.mxu0 0
      %2842 = vmatpush2.bf16.msra.mxu0 0
      %2843 = vmatprep.subr.bf16.mxu0 0
      %2844 = vmatpush2.bf16.msra.mxu0 0
      %2845 = vmatprep.subr.bf16.mxu0 0
      %2846 = vmatpush2.bf16.msra.mxu0 0
      %2847 = vmatprep.subr.bf16.mxu0 0
      %2848 = vmatpush2.bf16.msra.mxu0 0
      %2849 = vmatprep.subr.bf16.mxu0 0
      %2850 = vmatpush2.bf16.msra.mxu0 0
      %2851 = vmatprep.subr.bf16.mxu0 0
      %2852 = vmatpush2.bf16.msra.mxu0 0
      %2853 = vmatprep.subr.bf16.mxu0 0
      %2854 = vmatpush2.bf16.msra.mxu0 0
      %2855 = vmatprep.mubr.bf16.mxu0 0
      %2856 = vmatmul.mubr.bf16.gmra.mxu0 %v2812
      %v2857 = vpop.f32.mrf.mxu0
      %v2858 = vadd.f32 0.0, %v2857
      %v2859 = vpop.f32.mrf.mxu0
      %v2860 = vadd.f32 0.0, %v2859
      %v2861 = vpop.f32.mrf.mxu0
      %v2862 = vpop.f32.mrf.mxu0
      %2863 = vdwg.mxu0
      %2864 = vmatprep.subr.bf16.mxu0 0
      %2865 = vmatpush1.bf16.msra.mxu0 0
      %2866 = vmatprep.subr.bf16.mxu0 0
      %2867 = vmatpush1.bf16.msra.mxu0 0
      %2868 = vmatprep.subr.bf16.mxu0 0
      %2869 = vmatpush1.bf16.msra.mxu0 0
      %2870 = vmatprep.subr.bf16.mxu0 0
      %2871 = vmatpush1.bf16.msra.mxu0 0
      %2872 = vmatprep.subr.bf16.mxu0 0
      %2873 = vmatpush1.bf16.msra.mxu0 0
      %2874 = vmatprep.subr.bf16.mxu0 0
      %2875 = vmatpush1.bf16.msra.mxu0 0
      %2876 = vmatprep.subr.bf16.mxu0 0
      %2877 = vmatpush1.bf16.msra.mxu0 0
      %2878 = vmatprep.subr.bf16.mxu0 0
      %2879 = vmatpush1.bf16.msra.mxu0 %v2821
      %2880 = vmatprep.subr.bf16.mxu0 0
      %2881 = vmatpush2.bf16.msra.mxu0 0
      %2882 = vmatprep.subr.bf16.mxu0 0
      %2883 = vmatpush2.bf16.msra.mxu0 0
      %2884 = vmatprep.subr.bf16.mxu0 0
      %2885 = vmatpush2.bf16.msra.mxu0 0
      %2886 = vmatprep.subr.bf16.mxu0 0
      %2887 = vmatpush2.bf16.msra.mxu0 0
      %2888 = vmatprep.subr.bf16.mxu0 0
      %2889 = vmatpush2.bf16.msra.mxu0 0
      %2890 = vmatprep.subr.bf16.mxu0 0
      %2891 = vmatpush2.bf16.msra.mxu0 0
      %2892 = vmatprep.subr.bf16.mxu0 0
      %2893 = vmatpush2.bf16.msra.mxu0 0
      %2894 = vmatprep.subr.bf16.mxu0 0
      %2895 = vmatpush2.bf16.msra.mxu0 0
      %2896 = vmatprep.mubr.bf16.mxu0 0
      %2897 = vmatmul.mubr.bf16.gmra.mxu0 %v2812
      %v2898 = vpop.f32.mrf.mxu0
      %v2899 = vadd.f32 0.0, %v2898
      %v2900 = vpop.f32.mrf.mxu0
      %v2901 = vpop.f32.mrf.mxu0
      %v2902 = vpop.f32.mrf.mxu0
      %2903 = vdwg.mxu0
      %v2904 = vadd.f32 %v2796, %v2858
      %v2905 = vadd.f32 %v2797, %v2860
      %v2906 = vadd.f32 %v2798, %v2899
      %v2907 = vld [vmem:[%s1863] sm:$0xf]
      %2908 = vrot.lane.b32.xlu0 %v2231, 108
      %v2909 = vpop.permute.xlu0 %2908
      %2910 = vrot.lane.b32.xlu0 %v2232, 108
      %v2911 = vpop.permute.xlu0 %2910
      %2912 = vrot.lane.b32.xlu0 %v2233, 108
      %v2913 = vpop.permute.xlu0 %2912
      %2914 = vrot.lane.b32.xlu0 %v2234, 108
      %v2915 = vpop.permute.xlu0 %2914
      %v2916 = vsel %vm440, %v2909, %v2911
      %v2917 = vsel %vm440, %v2911, %v2913
      %v2918 = vsel %vm440, %v2913, %v2915
      %v2920 = vsel %vm1074, %v2907, 0
      %v2923 = vsel %vm571, %v2916, 0
      %v2926 = vsel %vm571, %v2917, 0
      %v2929 = vsel %vm571, %v2918, 0
      %2931 = vmatprep.subr.bf16.mxu0 0
      %2932 = vmatpush1.bf16.msra.mxu0 0
      %2933 = vmatprep.subr.bf16.mxu0 0
      %2934 = vmatpush1.bf16.msra.mxu0 0
      %2935 = vmatprep.subr.bf16.mxu0 0
      %2936 = vmatpush1.bf16.msra.mxu0 0
      %2937 = vmatprep.subr.bf16.mxu0 0
      %2938 = vmatpush1.bf16.msra.mxu0 0
      %2939 = vmatprep.subr.bf16.mxu0 0
      %2940 = vmatpush1.bf16.msra.mxu0 0
      %2941 = vmatprep.subr.bf16.mxu0 0
      %2942 = vmatpush1.bf16.msra.mxu0 0
      %2943 = vmatprep.subr.bf16.mxu0 0
      %2944 = vmatpush1.bf16.msra.mxu0 0
      %2945 = vmatprep.subr.bf16.mxu0 %v2926
      %2946 = vmatpush1.bf16.msra.mxu0 %v2923
      %2947 = vmatprep.subr.bf16.mxu0 0
      %2948 = vmatpush2.bf16.msra.mxu0 0
      %2949 = vmatprep.subr.bf16.mxu0 0
      %2950 = vmatpush2.bf16.msra.mxu0 0
      %2951 = vmatprep.subr.bf16.mxu0 0
      %2952 = vmatpush2.bf16.msra.mxu0 0
      %2953 = vmatprep.subr.bf16.mxu0 0
      %2954 = vmatpush2.bf16.msra.mxu0 0
      %2955 = vmatprep.subr.bf16.mxu0 0
      %2956 = vmatpush2.bf16.msra.mxu0 0
      %2957 = vmatprep.subr.bf16.mxu0 0
      %2958 = vmatpush2.bf16.msra.mxu0 0
      %2959 = vmatprep.subr.bf16.mxu0 0
      %2960 = vmatpush2.bf16.msra.mxu0 0
      %2961 = vmatprep.subr.bf16.mxu0 0
      %2962 = vmatpush2.bf16.msra.mxu0 0
      %2963 = vmatprep.mubr.bf16.mxu0 0
      %2964 = vmatmul.mubr.bf16.gmra.mxu0 %v2920
      %v2965 = vpop.f32.mrf.mxu0
      %v2966 = vadd.f32 0.0, %v2965
      %v2967 = vpop.f32.mrf.mxu0
      %v2968 = vadd.f32 0.0, %v2967
      %v2969 = vpop.f32.mrf.mxu0
      %v2970 = vpop.f32.mrf.mxu0
      %2971 = vdwg.mxu0
      %2972 = vmatprep.subr.bf16.mxu0 0
      %2973 = vmatpush1.bf16.msra.mxu0 0
      %2974 = vmatprep.subr.bf16.mxu0 0
      %2975 = vmatpush1.bf16.msra.mxu0 0
      %2976 = vmatprep.subr.bf16.mxu0 0
      %2977 = vmatpush1.bf16.msra.mxu0 0
      %2978 = vmatprep.subr.bf16.mxu0 0
      %2979 = vmatpush1.bf16.msra.mxu0 0
      %2980 = vmatprep.subr.bf16.mxu0 0
      %2981 = vmatpush1.bf16.msra.mxu0 0
      %2982 = vmatprep.subr.bf16.mxu0 0
      %2983 = vmatpush1.bf16.msra.mxu0 0
      %2984 = vmatprep.subr.bf16.mxu0 0
      %2985 = vmatpush1.bf16.msra.mxu0 0
      %2986 = vmatprep.subr.bf16.mxu0 0
      %2987 = vmatpush1.bf16.msra.mxu0 %v2929
      %2988 = vmatprep.subr.bf16.mxu0 0
      %2989 = vmatpush2.bf16.msra.mxu0 0
      %2990 = vmatprep.subr.bf16.mxu0 0
      %2991 = vmatpush2.bf16.msra.mxu0 0
      %2992 = vmatprep.subr.bf16.mxu0 0
      %2993 = vmatpush2.bf16.msra.mxu0 0
      %2994 = vmatprep.subr.bf16.mxu0 0
      %2995 = vmatpush2.bf16.msra.mxu0 0
      %2996 = vmatprep.subr.bf16.mxu0 0
      %2997 = vmatpush2.bf16.msra.mxu0 0
      %2998 = vmatprep.subr.bf16.mxu0 0
      %2999 = vmatpush2.bf16.msra.mxu0 0
      %3000 = vmatprep.subr.bf16.mxu0 0
      %3001 = vmatpush2.bf16.msra.mxu0 0
      %3002 = vmatprep.subr.bf16.mxu0 0
      %3003 = vmatpush2.bf16.msra.mxu0 0
      %3004 = vmatprep.mubr.bf16.mxu0 0
      %3005 = vmatmul.mubr.bf16.gmra.mxu0 %v2920
      %v3006 = vpop.f32.mrf.mxu0
      %v3007 = vadd.f32 0.0, %v3006
      %v3008 = vpop.f32.mrf.mxu0
      %v3009 = vpop.f32.mrf.mxu0
      %v3010 = vpop.f32.mrf.mxu0
      %3011 = vdwg.mxu0
      %v3012 = vadd.f32 %v2904, %v2966
      %v3013 = vadd.f32 %v2905, %v2968
      %v3014 = vadd.f32 %v2906, %v3007
      %v3015 = vld [vmem:[%s1972] sm:$0xf]
      %3016 = vrot.lane.b32.xlu0 %v2111, 107
      %v3017 = vpop.permute.xlu0 %3016
      %3018 = vrot.lane.b32.xlu0 %v2112, 107
      %v3019 = vpop.permute.xlu0 %3018
      %3020 = vrot.lane.b32.xlu0 %v2113, 107
      %v3021 = vpop.permute.xlu0 %3020
      %3022 = vrot.lane.b32.xlu0 %v2114, 107
      %v3023 = vpop.permute.xlu0 %3022
      %v3024 = vsel %vm605, %v3017, %v3019
      %v3025 = vsel %vm605, %v3019, %v3021
      %v3026 = vsel %vm605, %v3021, %v3023
      %v3028 = vsel %vm1074, %v3015, 0
      %v3031 = vsel %vm571, %v3024, 0
      %v3034 = vsel %vm571, %v3025, 0
      %v3037 = vsel %vm571, %v3026, 0
      %3039 = vmatprep.subr.bf16.mxu0 0
      %3040 = vmatpush1.bf16.msra.mxu0 0
      %3041 = vmatprep.subr.bf16.mxu0 0
      %3042 = vmatpush1.bf16.msra.mxu0 0
      %3043 = vmatprep.subr.bf16.mxu0 0
      %3044 = vmatpush1.bf16.msra.mxu0 0
      %3045 = vmatprep.subr.bf16.mxu0 0
      %3046 = vmatpush1.bf16.msra.mxu0 0
      %3047 = vmatprep.subr.bf16.mxu0 0
      %3048 = vmatpush1.bf16.msra.mxu0 0
      %3049 = vmatprep.subr.bf16.mxu0 0
      %3050 = vmatpush1.bf16.msra.mxu0 0
      %3051 = vmatprep.subr.bf16.mxu0 0
      %3052 = vmatpush1.bf16.msra.mxu0 0
      %3053 = vmatprep.subr.bf16.mxu0 %v3034
      %3054 = vmatpush1.bf16.msra.mxu0 %v3031
      %3055 = vmatprep.subr.bf16.mxu0 0
      %3056 = vmatpush2.bf16.msra.mxu0 0
      %3057 = vmatprep.subr.bf16.mxu0 0
      %3058 = vmatpush2.bf16.msra.mxu0 0
      %3059 = vmatprep.subr.bf16.mxu0 0
      %3060 = vmatpush2.bf16.msra.mxu0 0
      %3061 = vmatprep.subr.bf16.mxu0 0
      %3062 = vmatpush2.bf16.msra.mxu0 0
      %3063 = vmatprep.subr.bf16.mxu0 0
      %3064 = vmatpush2.bf16.msra.mxu0 0
      %3065 = vmatprep.subr.bf16.mxu0 0
      %3066 = vmatpush2.bf16.msra.mxu0 0
      %3067 = vmatprep.subr.bf16.mxu0 0
      %3068 = vmatpush2.bf16.msra.mxu0 0
      %3069 = vmatprep.subr.bf16.mxu0 0
      %3070 = vmatpush2.bf16.msra.mxu0 0
      %3071 = vmatprep.mubr.bf16.mxu0 0
      %3072 = vmatmul.mubr.bf16.gmra.mxu0 %v3028
      %v3073 = vpop.f32.mrf.mxu0
      %v3074 = vadd.f32 0.0, %v3073
      %v3075 = vpop.f32.mrf.mxu0
      %v3076 = vadd.f32 0.0, %v3075
      %v3077 = vpop.f32.mrf.mxu0
      %v3078 = vpop.f32.mrf.mxu0
      %3079 = vdwg.mxu0
      %3080 = vmatprep.subr.bf16.mxu0 0
      %3081 = vmatpush1.bf16.msra.mxu0 0
      %3082 = vmatprep.subr.bf16.mxu0 0
      %3083 = vmatpush1.bf16.msra.mxu0 0
      %3084 = vmatprep.subr.bf16.mxu0 0
      %3085 = vmatpush1.bf16.msra.mxu0 0
      %3086 = vmatprep.subr.bf16.mxu0 0
      %3087 = vmatpush1.bf16.msra.mxu0 0
      %3088 = vmatprep.subr.bf16.mxu0 0
      %3089 = vmatpush1.bf16.msra.mxu0 0
      %3090 = vmatprep.subr.bf16.mxu0 0
      %3091 = vmatpush1.bf16.msra.mxu0 0
      %3092 = vmatprep.subr.bf16.mxu0 0
      %3093 = vmatpush1.bf16.msra.mxu0 0
      %3094 = vmatprep.subr.bf16.mxu0 0
      %3095 = vmatpush1.bf16.msra.mxu0 %v3037
      %3096 = vmatprep.subr.bf16.mxu0 0
      %3097 = vmatpush2.bf16.msra.mxu0 0
      %3098 = vmatprep.subr.bf16.mxu0 0
      %3099 = vmatpush2.bf16.msra.mxu0 0
      %3100 = vmatprep.subr.bf16.mxu0 0
      %3101 = vmatpush2.bf16.msra.mxu0 0
      %3102 = vmatprep.subr.bf16.mxu0 0
      %3103 = vmatpush2.bf16.msra.mxu0 0
      %3104 = vmatprep.subr.bf16.mxu0 0
      %3105 = vmatpush2.bf16.msra.mxu0 0
      %3106 = vmatprep.subr.bf16.mxu0 0
      %3107 = vmatpush2.bf16.msra.mxu0 0
      %3108 = vmatprep.subr.bf16.mxu0 0
      %3109 = vmatpush2.bf16.msra.mxu0 0
      %3110 = vmatprep.subr.bf16.mxu0 0
      %3111 = vmatpush2.bf16.msra.mxu0 0
      %3112 = vmatprep.mubr.bf16.mxu0 0
      %3113 = vmatmul.mubr.bf16.gmra.mxu0 %v3028
      %v3114 = vpop.f32.mrf.mxu0
      %v3115 = vadd.f32 0.0, %v3114
      %v3116 = vpop.f32.mrf.mxu0
      %v3117 = vpop.f32.mrf.mxu0
      %v3118 = vpop.f32.mrf.mxu0
      %3119 = vdwg.mxu0
      %v3120 = vadd.f32 %v3012, %v3074
      %v3121 = vadd.f32 %v3013, %v3076
      %v3122 = vadd.f32 %v3014, %v3115
      %v3123 = vmul.f32 %v3120, 0.2
      %v3124 = vmul.f32 %v3121, 0.2
      %v3125 = vmul.f32 %v3122, 0.2
      %v3126 = vmax.f32 %v3120, %v3123
      %v3127 = vmax.f32 %v3121, %v3124
      %v3128 = vmax.f32 %v3122, %v3125
      %v3129 = vpack.c.bf16 %v3126, %v3126
      %v3130 = vpack.c.bf16 %v3127, %v3127
      %v3131 = vpack.c.bf16 %v3128, %v3128
      %v3135 = vunpack.c.l.b16 %v3129
      %v3136 = vunpack.c.l.b16 %v3130
      %v3137 = vunpack.c.l.b16 %v3131
      %v3138 = vpack.c.b16 %v3136, %v3135
      %v3139 = vpack.c.b16 %v3137, %v3137
      %s3142 = scalar_lea.vmem %s251, 12
      %3143 = vst [vmem:[%s3142] sm:$0xff] %v3138
      %3144 = vst [vmem:[%s3142 + $0x8] sm:$0xf] %v3139
      %v3145 = vld [vmem:[%s4] sm:$0xf]
      %v3146 = vld [vmem:[%s730] sm:$0xff]
      %v3147 = vld [vmem:[%s730 + $0x8] sm:$0xff]
      %v3150 = vunpack.c.l.b16 %v3146
      %v3151 = vunpack.c.h.b16 %v3146
      %v3152 = vunpack.c.l.b16 %v3147
      %v3153 = vunpack.c.h.b16 %v3147
      %v3154 = vpack.c.b16 %v3150, %v3150
      %v3155 = vpack.c.b16 %v3151, %v3151
      %v3156 = vpack.c.b16 %v3152, %v3152
      %v3157 = vpack.c.b16 %v3153, %v3153
      %3158 = vrot.lane.b32.xlu0 %v3154, 109
      %v3159 = vpop.permute.xlu0 %3158
      %3160 = vrot.lane.b32.xlu0 %v3155, 109
      %v3161 = vpop.permute.xlu0 %3160
      %3162 = vrot.lane.b32.xlu0 %v3156, 109
      %v3163 = vpop.permute.xlu0 %3162
      %3164 = vrot.lane.b32.xlu0 %v3157, 109
      %v3165 = vpop.permute.xlu0 %3164
      %v3166 = vsel %vm1424, %v3159, %v3161
      %v3167 = vsel %vm1424, %v3161, %v3163
      %v3168 = vsel %vm1424, %v3163, %v3165
      %v3170 = vsel %vm1074, %v3145, 0
      %v3173 = vsel %vm571, %v3166, 0
      %v3176 = vsel %vm571, %v3167, 0
      %v3179 = vsel %vm571, %v3168, 0
      %3181 = vmatprep.subr.bf16.mxu0 0
      %3182 = vmatpush1.bf16.msra.mxu0 0
      %3183 = vmatprep.subr.bf16.mxu0 0
      %3184 = vmatpush1.bf16.msra.mxu0 0
      %3185 = vmatprep.subr.bf16.mxu0 0
      %3186 = vmatpush1.bf16.msra.mxu0 0
      %3187 = vmatprep.subr.bf16.mxu0 0
      %3188 = vmatpush1.bf16.msra.mxu0 0
      %3189 = vmatprep.subr.bf16.mxu0 0
      %3190 = vmatpush1.bf16.msra.mxu0 0
      %3191 = vmatprep.subr.bf16.mxu0 0
      %3192 = vmatpush1.bf16.msra.mxu0 0
      %3193 = vmatprep.subr.bf16.mxu0 0
      %3194 = vmatpush1.bf16.msra.mxu0 0
      %3195 = vmatprep.subr.bf16.mxu0 %v3176
      %3196 = vmatpush1.bf16.msra.mxu0 %v3173
      %3197 = vmatprep.subr.bf16.mxu0 0
      %3198 = vmatpush2.bf16.msra.mxu0 0
      %3199 = vmatprep.subr.bf16.mxu0 0
      %3200 = vmatpush2.bf16.msra.mxu0 0
      %3201 = vmatprep.subr.bf16.mxu0 0
      %3202 = vmatpush2.bf16.msra.mxu0 0
      %3203 = vmatprep.subr.bf16.mxu0 0
      %3204 = vmatpush2.bf16.msra.mxu0 0
      %3205 = vmatprep.subr.bf16.mxu0 0
      %3206 = vmatpush2.bf16.msra.mxu0 0
      %3207 = vmatprep.subr.bf16.mxu0 0
      %3208 = vmatpush2.bf16.msra.mxu0 0
      %3209 = vmatprep.subr.bf16.mxu0 0
      %3210 = vmatpush2.bf16.msra.mxu0 0
      %3211 = vmatprep.subr.bf16.mxu0 0
      %3212 = vmatpush2.bf16.msra.mxu0 0
      %3213 = vmatprep.mubr.bf16.mxu0 0
      %3214 = vmatmul.mubr.bf16.gmra.mxu0 %v3170
      %v3215 = vpop.f32.mrf.mxu0
      %v3216 = vadd.f32 0.0, %v3215
      %v3217 = vpop.f32.mrf.mxu0
      %v3218 = vadd.f32 0.0, %v3217
      %v3219 = vpop.f32.mrf.mxu0
      %v3220 = vpop.f32.mrf.mxu0
      %3221 = vdwg.mxu0
      %3222 = vmatprep.subr.bf16.mxu0 0
      %3223 = vmatpush1.bf16.msra.mxu0 0
      %3224 = vmatprep.subr.bf16.mxu0 0
      %3225 = vmatpush1.bf16.msra.mxu0 0
      %3226 = vmatprep.subr.bf16.mxu0 0
      %3227 = vmatpush1.bf16.msra.mxu0 0
      %3228 = vmatprep.subr.bf16.mxu0 0
      %3229 = vmatpush1.bf16.msra.mxu0 0
      %3230 = vmatprep.subr.bf16.mxu0 0
      %3231 = vmatpush1.bf16.msra.mxu0 0
      %3232 = vmatprep.subr.bf16.mxu0 0
      %3233 = vmatpush1.bf16.msra.mxu0 0
      %3234 = vmatprep.subr.bf16.mxu0 0
      %3235 = vmatpush1.bf16.msra.mxu0 0
      %3236 = vmatprep.subr.bf16.mxu0 0
      %3237 = vmatpush1.bf16.msra.mxu0 %v3179
      %3238 = vmatprep.subr.bf16.mxu0 0
      %3239 = vmatpush2.bf16.msra.mxu0 0
      %3240 = vmatprep.subr.bf16.mxu0 0
      %3241 = vmatpush2.bf16.msra.mxu0 0
      %3242 = vmatprep.subr.bf16.mxu0 0
      %3243 = vmatpush2.bf16.msra.mxu0 0
      %3244 = vmatprep.subr.bf16.mxu0 0
      %3245 = vmatpush2.bf16.msra.mxu0 0
      %3246 = vmatprep.subr.bf16.mxu0 0
      %3247 = vmatpush2.bf16.msra.mxu0 0
      %3248 = vmatprep.subr.bf16.mxu0 0
      %3249 = vmatpush2.bf16.msra.mxu0 0
      %3250 = vmatprep.subr.bf16.mxu0 0
      %3251 = vmatpush2.bf16.msra.mxu0 0
      %3252 = vmatprep.subr.bf16.mxu0 0
      %3253 = vmatpush2.bf16.msra.mxu0 0
      %3254 = vmatprep.mubr.bf16.mxu0 0
      %3255 = vmatmul.mubr.bf16.gmra.mxu0 %v3170
      %v3256 = vpop.f32.mrf.mxu0
      %v3257 = vadd.f32 0.0, %v3256
      %v3258 = vpop.f32.mrf.mxu0
      %v3259 = vpop.f32.mrf.mxu0
      %v3260 = vpop.f32.mrf.mxu0
      %3261 = vdwg.mxu0
      %v3262 = vadd.f32 %v409, %v3216
      %v3263 = vadd.f32 %v409, %v3218
      %v3264 = vadd.f32 %v409, %v3257
      %v3265 = vld [vmem:[%s1171] sm:$0xf]
      %v3266 = vld [vmem:[#allocation3] sm:$0xff]
      %v3267 = vld [vmem:[#allocation3 + $0x8] sm:$0xff]
      %v3270 = vunpack.c.l.b16 %v3266
      %v3271 = vunpack.c.h.b16 %v3266
      %v3272 = vunpack.c.l.b16 %v3267
      %v3273 = vunpack.c.h.b16 %v3267
      %v3274 = vpack.c.b16 %v3270, %v3270
      %v3275 = vpack.c.b16 %v3271, %v3271
      %v3276 = vpack.c.b16 %v3272, %v3272
      %v3277 = vpack.c.b16 %v3273, %v3273
      %3278 = vrot.lane.b32.xlu0 %v3274, 108
      %v3279 = vpop.permute.xlu0 %3278
      %3280 = vrot.lane.b32.xlu0 %v3275, 108
      %v3281 = vpop.permute.xlu0 %3280
      %3282 = vrot.lane.b32.xlu0 %v3276, 108
      %v3283 = vpop.permute.xlu0 %3282
      %3284 = vrot.lane.b32.xlu0 %v3277, 108
      %v3285 = vpop.permute.xlu0 %3284
      %v3286 = vsel %vm440, %v3279, %v3281
      %v3287 = vsel %vm440, %v3281, %v3283
      %v3288 = vsel %vm440, %v3283, %v3285
      %v3290 = vsel %vm1074, %v3265, 0
      %v3293 = vsel %vm571, %v3286, 0
      %v3296 = vsel %vm571, %v3287, 0
      %v3299 = vsel %vm571, %v3288, 0
      %3301 = vmatprep.subr.bf16.mxu0 0
      %3302 = vmatpush1.bf16.msra.mxu0 0
      %3303 = vmatprep.subr.bf16.mxu0 0
      %3304 = vmatpush1.bf16.msra.mxu0 0
      %3305 = vmatprep.subr.bf16.mxu0 0
      %3306 = vmatpush1.bf16.msra.mxu0 0
      %3307 = vmatprep.subr.bf16.mxu0 0
      %3308 = vmatpush1.bf16.msra.mxu0 0
      %3309 = vmatprep.subr.bf16.mxu0 0
      %3310 = vmatpush1.bf16.msra.mxu0 0
      %3311 = vmatprep.subr.bf16.mxu0 0
      %3312 = vmatpush1.bf16.msra.mxu0 0
      %3313 = vmatprep.subr.bf16.mxu0 0
      %3314 = vmatpush1.bf16.msra.mxu0 0
      %3315 = vmatprep.subr.bf16.mxu0 %v3296
      %3316 = vmatpush1.bf16.msra.mxu0 %v3293
      %3317 = vmatprep.subr.bf16.mxu0 0
      %3318 = vmatpush2.bf16.msra.mxu0 0
      %3319 = vmatprep.subr.bf16.mxu0 0
      %3320 = vmatpush2.bf16.msra.mxu0 0
      %3321 = vmatprep.subr.bf16.mxu0 0
      %3322 = vmatpush2.bf16.msra.mxu0 0
      %3323 = vmatprep.subr.bf16.mxu0 0
      %3324 = vmatpush2.bf16.msra.mxu0 0
      %3325 = vmatprep.subr.bf16.mxu0 0
      %3326 = vmatpush2.bf16.msra.mxu0 0
      %3327 = vmatprep.subr.bf16.mxu0 0
      %3328 = vmatpush2.bf16.msra.mxu0 0
      %3329 = vmatprep.subr.bf16.mxu0 0
      %3330 = vmatpush2.bf16.msra.mxu0 0
      %3331 = vmatprep.subr.bf16.mxu0 0
      %3332 = vmatpush2.bf16.msra.mxu0 0
      %3333 = vmatprep.mubr.bf16.mxu0 0
      %3334 = vmatmul.mubr.bf16.gmra.mxu0 %v3290
      %v3335 = vpop.f32.mrf.mxu0
      %v3336 = vadd.f32 0.0, %v3335
      %v3337 = vpop.f32.mrf.mxu0
      %v3338 = vadd.f32 0.0, %v3337
      %v3339 = vpop.f32.mrf.mxu0
      %v3340 = vpop.f32.mrf.mxu0
      %3341 = vdwg.mxu0
      %3342 = vmatprep.subr.bf16.mxu0 0
      %3343 = vmatpush1.bf16.msra.mxu0 0
      %3344 = vmatprep.subr.bf16.mxu0 0
      %3345 = vmatpush1.bf16.msra.mxu0 0
      %3346 = vmatprep.subr.bf16.mxu0 0
      %3347 = vmatpush1.bf16.msra.mxu0 0
      %3348 = vmatprep.subr.bf16.mxu0 0
      %3349 = vmatpush1.bf16.msra.mxu0 0
      %3350 = vmatprep.subr.bf16.mxu0 0
      %3351 = vmatpush1.bf16.msra.mxu0 0
      %3352 = vmatprep.subr.bf16.mxu0 0
      %3353 = vmatpush1.bf16.msra.mxu0 0
      %3354 = vmatprep.subr.bf16.mxu0 0
      %3355 = vmatpush1.bf16.msra.mxu0 0
      %3356 = vmatprep.subr.bf16.mxu0 0
      %3357 = vmatpush1.bf16.msra.mxu0 %v3299
      %3358 = vmatprep.subr.bf16.mxu0 0
      %3359 = vmatpush2.bf16.msra.mxu0 0
      %3360 = vmatprep.subr.bf16.mxu0 0
      %3361 = vmatpush2.bf16.msra.mxu0 0
      %3362 = vmatprep.subr.bf16.mxu0 0
      %3363 = vmatpush2.bf16.msra.mxu0 0
      %3364 = vmatprep.subr.bf16.mxu0 0
      %3365 = vmatpush2.bf16.msra.mxu0 0
      %3366 = vmatprep.subr.bf16.mxu0 0
      %3367 = vmatpush2.bf16.msra.mxu0 0
      %3368 = vmatprep.subr.bf16.mxu0 0
      %3369 = vmatpush2.bf16.msra.mxu0 0
      %3370 = vmatprep.subr.bf16.mxu0 0
      %3371 = vmatpush2.bf16.msra.mxu0 0
      %3372 = vmatprep.subr.bf16.mxu0 0
      %3373 = vmatpush2.bf16.msra.mxu0 0
      %3374 = vmatprep.mubr.bf16.mxu0 0
      %3375 = vmatmul.mubr.bf16.gmra.mxu0 %v3290
      %v3376 = vpop.f32.mrf.mxu0
      %v3377 = vadd.f32 0.0, %v3376
      %v3378 = vpop.f32.mrf.mxu0
      %v3379 = vpop.f32.mrf.mxu0
      %v3380 = vpop.f32.mrf.mxu0
      %3381 = vdwg.mxu0
      %v3382 = vadd.f32 %v3262, %v3336
      %v3383 = vadd.f32 %v3263, %v3338
      %v3384 = vadd.f32 %v3264, %v3377
      %v3385 = vld [vmem:[%s1293] sm:$0xf]
      %3386 = vrot.lane.b32.xlu0 %v3154, 108
      %v3387 = vpop.permute.xlu0 %3386
      %3388 = vrot.lane.b32.xlu0 %v3155, 108
      %v3389 = vpop.permute.xlu0 %3388
      %3390 = vrot.lane.b32.xlu0 %v3156, 108
      %v3391 = vpop.permute.xlu0 %3390
      %3392 = vrot.lane.b32.xlu0 %v3157, 108
      %v3393 = vpop.permute.xlu0 %3392
      %v3394 = vsel %vm440, %v3387, %v3389
      %v3395 = vsel %vm440, %v3389, %v3391
      %v3396 = vsel %vm440, %v3391, %v3393
      %v3398 = vsel %vm1074, %v3385, 0
      %v3401 = vsel %vm571, %v3394, 0
      %v3404 = vsel %vm571, %v3395, 0
      %v3407 = vsel %vm571, %v3396, 0
      %3409 = vmatprep.subr.bf16.mxu0 0
      %3410 = vmatpush1.bf16.msra.mxu0 0
      %3411 = vmatprep.subr.bf16.mxu0 0
      %3412 = vmatpush1.bf16.msra.mxu0 0
      %3413 = vmatprep.subr.bf16.mxu0 0
      %3414 = vmatpush1.bf16.msra.mxu0 0
      %3415 = vmatprep.subr.bf16.mxu0 0
      %3416 = vmatpush1.bf16.msra.mxu0 0
      %3417 = vmatprep.subr.bf16.mxu0 0
      %3418 = vmatpush1.bf16.msra.mxu0 0
      %3419 = vmatprep.subr.bf16.mxu0 0
      %3420 = vmatpush1.bf16.msra.mxu0 0
      %3421 = vmatprep.subr.bf16.mxu0 0
      %3422 = vmatpush1.bf16.msra.mxu0 0
      %3423 = vmatprep.subr.bf16.mxu0 %v3404
      %3424 = vmatpush1.bf16.msra.mxu0 %v3401
      %3425 = vmatprep.subr.bf16.mxu0 0
      %3426 = vmatpush2.bf16.msra.mxu0 0
      %3427 = vmatprep.subr.bf16.mxu0 0
      %3428 = vmatpush2.bf16.msra.mxu0 0
      %3429 = vmatprep.subr.bf16.mxu0 0
      %3430 = vmatpush2.bf16.msra.mxu0 0
      %3431 = vmatprep.subr.bf16.mxu0 0
      %3432 = vmatpush2.bf16.msra.mxu0 0
      %3433 = vmatprep.subr.bf16.mxu0 0
      %3434 = vmatpush2.bf16.msra.mxu0 0
      %3435 = vmatprep.subr.bf16.mxu0 0
      %3436 = vmatpush2.bf16.msra.mxu0 0
      %3437 = vmatprep.subr.bf16.mxu0 0
      %3438 = vmatpush2.bf16.msra.mxu0 0
      %3439 = vmatprep.subr.bf16.mxu0 0
      %3440 = vmatpush2.bf16.msra.mxu0 0
      %3441 = vmatprep.mubr.bf16.mxu0 0
      %3442 = vmatmul.mubr.bf16.gmra.mxu0 %v3398
      %v3443 = vpop.f32.mrf.mxu0
      %v3444 = vadd.f32 0.0, %v3443
      %v3445 = vpop.f32.mrf.mxu0
      %v3446 = vadd.f32 0.0, %v3445
      %v3447 = vpop.f32.mrf.mxu0
      %v3448 = vpop.f32.mrf.mxu0
      %3449 = vdwg.mxu0
      %3450 = vmatprep.subr.bf16.mxu0 0
      %3451 = vmatpush1.bf16.msra.mxu0 0
      %3452 = vmatprep.subr.bf16.mxu0 0
      %3453 = vmatpush1.bf16.msra.mxu0 0
      %3454 = vmatprep.subr.bf16.mxu0 0
      %3455 = vmatpush1.bf16.msra.mxu0 0
      %3456 = vmatprep.subr.bf16.mxu0 0
      %3457 = vmatpush1.bf16.msra.mxu0 0
      %3458 = vmatprep.subr.bf16.mxu0 0
      %3459 = vmatpush1.bf16.msra.mxu0 0
      %3460 = vmatprep.subr.bf16.mxu0 0
      %3461 = vmatpush1.bf16.msra.mxu0 0
      %3462 = vmatprep.subr.bf16.mxu0 0
      %3463 = vmatpush1.bf16.msra.mxu0 0
      %3464 = vmatprep.subr.bf16.mxu0 0
      %3465 = vmatpush1.bf16.msra.mxu0 %v3407
      %3466 = vmatprep.subr.bf16.mxu0 0
      %3467 = vmatpush2.bf16.msra.mxu0 0
      %3468 = vmatprep.subr.bf16.mxu0 0
      %3469 = vmatpush2.bf16.msra.mxu0 0
      %3470 = vmatprep.subr.bf16.mxu0 0
      %3471 = vmatpush2.bf16.msra.mxu0 0
      %3472 = vmatprep.subr.bf16.mxu0 0
      %3473 = vmatpush2.bf16.msra.mxu0 0
      %3474 = vmatprep.subr.bf16.mxu0 0
      %3475 = vmatpush2.bf16.msra.mxu0 0
      %3476 = vmatprep.subr.bf16.mxu0 0
      %3477 = vmatpush2.bf16.msra.mxu0 0
      %3478 = vmatprep.subr.bf16.mxu0 0
      %3479 = vmatpush2.bf16.msra.mxu0 0
      %3480 = vmatprep.subr.bf16.mxu0 0
      %3481 = vmatpush2.bf16.msra.mxu0 0
      %3482 = vmatprep.mubr.bf16.mxu0 0
      %3483 = vmatmul.mubr.bf16.gmra.mxu0 %v3398
      %v3484 = vpop.f32.mrf.mxu0
      %v3485 = vadd.f32 0.0, %v3484
      %v3486 = vpop.f32.mrf.mxu0
      %v3487 = vpop.f32.mrf.mxu0
      %v3488 = vpop.f32.mrf.mxu0
      %3489 = vdwg.mxu0
      %v3490 = vadd.f32 %v3382, %v3444
      %v3491 = vadd.f32 %v3383, %v3446
      %v3492 = vadd.f32 %v3384, %v3485
      %v3493 = vld [vmem:[%s1402] sm:$0xf]
      %v3494 = vld [vmem:[%s1046] sm:$0xff]
      %v3495 = vld [vmem:[%s1046 + $0x8] sm:$0xff]
      %v3498 = vunpack.c.l.b16 %v3494
      %v3499 = vunpack.c.h.b16 %v3494
      %v3500 = vunpack.c.l.b16 %v3495
      %v3501 = vunpack.c.h.b16 %v3495
      %v3502 = vpack.c.b16 %v3498, %v3498
      %v3503 = vpack.c.b16 %v3499, %v3499
      %v3504 = vpack.c.b16 %v3500, %v3500
      %v3505 = vpack.c.b16 %v3501, %v3501
      %3506 = vrot.lane.b32.xlu0 %v3502, 109
      %v3507 = vpop.permute.xlu0 %3506
      %3508 = vrot.lane.b32.xlu0 %v3503, 109
      %v3509 = vpop.permute.xlu0 %3508
      %3510 = vrot.lane.b32.xlu0 %v3504, 109
      %v3511 = vpop.permute.xlu0 %3510
      %3512 = vrot.lane.b32.xlu0 %v3505, 109
      %v3513 = vpop.permute.xlu0 %3512
      %v3514 = vsel %vm1424, %v3507, %v3509
      %v3515 = vsel %vm1424, %v3509, %v3511
      %v3516 = vsel %vm1424, %v3511, %v3513
      %v3518 = vsel %vm1074, %v3493, 0
      %v3521 = vsel %vm571, %v3514, 0
      %v3524 = vsel %vm571, %v3515, 0
      %v3527 = vsel %vm571, %v3516, 0
      %3529 = vmatprep.subr.bf16.mxu0 0
      %3530 = vmatpush1.bf16.msra.mxu0 0
      %3531 = vmatprep.subr.bf16.mxu0 0
      %3532 = vmatpush1.bf16.msra.mxu0 0
      %3533 = vmatprep.subr.bf16.mxu0 0
      %3534 = vmatpush1.bf16.msra.mxu0 0
      %3535 = vmatprep.subr.bf16.mxu0 0
      %3536 = vmatpush1.bf16.msra.mxu0 0
      %3537 = vmatprep.subr.bf16.mxu0 0
      %3538 = vmatpush1.bf16.msra.mxu0 0
      %3539 = vmatprep.subr.bf16.mxu0 0
      %3540 = vmatpush1.bf16.msra.mxu0 0
      %3541 = vmatprep.subr.bf16.mxu0 0
      %3542 = vmatpush1.bf16.msra.mxu0 0
      %3543 = vmatprep.subr.bf16.mxu0 %v3524
      %3544 = vmatpush1.bf16.msra.mxu0 %v3521
      %3545 = vmatprep.subr.bf16.mxu0 0
      %3546 = vmatpush2.bf16.msra.mxu0 0
      %3547 = vmatprep.subr.bf16.mxu0 0
      %3548 = vmatpush2.bf16.msra.mxu0 0
      %3549 = vmatprep.subr.bf16.mxu0 0
      %3550 = vmatpush2.bf16.msra.mxu0 0
      %3551 = vmatprep.subr.bf16.mxu0 0
      %3552 = vmatpush2.bf16.msra.mxu0 0
      %3553 = vmatprep.subr.bf16.mxu0 0
      %3554 = vmatpush2.bf16.msra.mxu0 0
      %3555 = vmatprep.subr.bf16.mxu0 0
      %3556 = vmatpush2.bf16.msra.mxu0 0
      %3557 = vmatprep.subr.bf16.mxu0 0
      %3558 = vmatpush2.bf16.msra.mxu0 0
      %3559 = vmatprep.subr.bf16.mxu0 0
      %3560 = vmatpush2.bf16.msra.mxu0 0
      %3561 = vmatprep.mubr.bf16.mxu0 0
      %3562 = vmatmul.mubr.bf16.gmra.mxu0 %v3518
      %v3563 = vpop.f32.mrf.mxu0
      %v3564 = vadd.f32 0.0, %v3563
      %v3565 = vpop.f32.mrf.mxu0
      %v3566 = vadd.f32 0.0, %v3565
      %v3567 = vpop.f32.mrf.mxu0
      %v3568 = vpop.f32.mrf.mxu0
      %3569 = vdwg.mxu0
      %3570 = vmatprep.subr.bf16.mxu0 0
      %3571 = vmatpush1.bf16.msra.mxu0 0
      %3572 = vmatprep.subr.bf16.mxu0 0
      %3573 = vmatpush1.bf16.msra.mxu0 0
      %3574 = vmatprep.subr.bf16.mxu0 0
      %3575 = vmatpush1.bf16.msra.mxu0 0
      %3576 = vmatprep.subr.bf16.mxu0 0
      %3577 = vmatpush1.bf16.msra.mxu0 0
      %3578 = vmatprep.subr.bf16.mxu0 0
      %3579 = vmatpush1.bf16.msra.mxu0 0
      %3580 = vmatprep.subr.bf16.mxu0 0
      %3581 = vmatpush1.bf16.msra.mxu0 0
      %3582 = vmatprep.subr.bf16.mxu0 0
      %3583 = vmatpush1.bf16.msra.mxu0 0
      %3584 = vmatprep.subr.bf16.mxu0 0
      %3585 = vmatpush1.bf16.msra.mxu0 %v3527
      %3586 = vmatprep.subr.bf16.mxu0 0
      %3587 = vmatpush2.bf16.msra.mxu0 0
      %3588 = vmatprep.subr.bf16.mxu0 0
      %3589 = vmatpush2.bf16.msra.mxu0 0
      %3590 = vmatprep.subr.bf16.mxu0 0
      %3591 = vmatpush2.bf16.msra.mxu0 0
      %3592 = vmatprep.subr.bf16.mxu0 0
      %3593 = vmatpush2.bf16.msra.mxu0 0
      %3594 = vmatprep.subr.bf16.mxu0 0
      %3595 = vmatpush2.bf16.msra.mxu0 0
      %3596 = vmatprep.subr.bf16.mxu0 0
      %3597 = vmatpush2.bf16.msra.mxu0 0
      %3598 = vmatprep.subr.bf16.mxu0 0
      %3599 = vmatpush2.bf16.msra.mxu0 0
      %3600 = vmatprep.subr.bf16.mxu0 0
      %3601 = vmatpush2.bf16.msra.mxu0 0
      %3602 = vmatprep.mubr.bf16.mxu0 0
      %3603 = vmatmul.mubr.bf16.gmra.mxu0 %v3518
      %v3604 = vpop.f32.mrf.mxu0
      %v3605 = vadd.f32 0.0, %v3604
      %v3606 = vpop.f32.mrf.mxu0
      %v3607 = vpop.f32.mrf.mxu0
      %v3608 = vpop.f32.mrf.mxu0
      %3609 = vdwg.mxu0
      %v3610 = vadd.f32 %v3490, %v3564
      %v3611 = vadd.f32 %v3491, %v3566
      %v3612 = vadd.f32 %v3492, %v3605
      %v3613 = vld [vmem:[%s1524] sm:$0xf]
      %v3614 = vld [vmem:[%s888] sm:$0xff]
      %v3615 = vld [vmem:[%s888 + $0x8] sm:$0xff]
      %v3618 = vunpack.c.l.b16 %v3614
      %v3619 = vunpack.c.h.b16 %v3614
      %v3620 = vunpack.c.l.b16 %v3615
      %v3621 = vunpack.c.h.b16 %v3615
      %v3622 = vpack.c.b16 %v3618, %v3618
      %v3623 = vpack.c.b16 %v3619, %v3619
      %v3624 = vpack.c.b16 %v3620, %v3620
      %v3625 = vpack.c.b16 %v3621, %v3621
      %3626 = vrot.lane.b32.xlu0 %v3622, 108
      %v3627 = vpop.permute.xlu0 %3626
      %3628 = vrot.lane.b32.xlu0 %v3623, 108
      %v3629 = vpop.permute.xlu0 %3628
      %3630 = vrot.lane.b32.xlu0 %v3624, 108
      %v3631 = vpop.permute.xlu0 %3630
      %3632 = vrot.lane.b32.xlu0 %v3625, 108
      %v3633 = vpop.permute.xlu0 %3632
      %v3634 = vsel %vm440, %v3627, %v3629
      %v3635 = vsel %vm440, %v3629, %v3631
      %v3636 = vsel %vm440, %v3631, %v3633
      %v3638 = vsel %vm1074, %v3613, 0
      %v3641 = vsel %vm571, %v3634, 0
      %v3644 = vsel %vm571, %v3635, 0
      %v3647 = vsel %vm571, %v3636, 0
      %3649 = vmatprep.subr.bf16.mxu0 0
      %3650 = vmatpush1.bf16.msra.mxu0 0
      %3651 = vmatprep.subr.bf16.mxu0 0
      %3652 = vmatpush1.bf16.msra.mxu0 0
      %3653 = vmatprep.subr.bf16.mxu0 0
      %3654 = vmatpush1.bf16.msra.mxu0 0
      %3655 = vmatprep.subr.bf16.mxu0 0
      %3656 = vmatpush1.bf16.msra.mxu0 0
      %3657 = vmatprep.subr.bf16.mxu0 0
      %3658 = vmatpush1.bf16.msra.mxu0 0
      %3659 = vmatprep.subr.bf16.mxu0 0
      %3660 = vmatpush1.bf16.msra.mxu0 0
      %3661 = vmatprep.subr.bf16.mxu0 0
      %3662 = vmatpush1.bf16.msra.mxu0 0
      %3663 = vmatprep.subr.bf16.mxu0 %v3644
      %3664 = vmatpush1.bf16.msra.mxu0 %v3641
      %3665 = vmatprep.subr.bf16.mxu0 0
      %3666 = vmatpush2.bf16.msra.mxu0 0
      %3667 = vmatprep.subr.bf16.mxu0 0
      %3668 = vmatpush2.bf16.msra.mxu0 0
      %3669 = vmatprep.subr.bf16.mxu0 0
      %3670 = vmatpush2.bf16.msra.mxu0 0
      %3671 = vmatprep.subr.bf16.mxu0 0
      %3672 = vmatpush2.bf16.msra.mxu0 0
      %3673 = vmatprep.subr.bf16.mxu0 0
      %3674 = vmatpush2.bf16.msra.mxu0 0
      %3675 = vmatprep.subr.bf16.mxu0 0
      %3676 = vmatpush2.bf16.msra.mxu0 0
      %3677 = vmatprep.subr.bf16.mxu0 0
      %3678 = vmatpush2.bf16.msra.mxu0 0
      %3679 = vmatprep.subr.bf16.mxu0 0
      %3680 = vmatpush2.bf16.msra.mxu0 0
      %3681 = vmatprep.mubr.bf16.mxu0 0
      %3682 = vmatmul.mubr.bf16.gmra.mxu0 %v3638
      %v3683 = vpop.f32.mrf.mxu0
      %v3684 = vadd.f32 0.0, %v3683
      %v3685 = vpop.f32.mrf.mxu0
      %v3686 = vadd.f32 0.0, %v3685
      %v3687 = vpop.f32.mrf.mxu0
      %v3688 = vpop.f32.mrf.mxu0
      %3689 = vdwg.mxu0
      %3690 = vmatprep.subr.bf16.mxu0 0
      %3691 = vmatpush1.bf16.msra.mxu0 0
      %3692 = vmatprep.subr.bf16.mxu0 0
      %3693 = vmatpush1.bf16.msra.mxu0 0
      %3694 = vmatprep.subr.bf16.mxu0 0
      %3695 = vmatpush1.bf16.msra.mxu0 0
      %3696 = vmatprep.subr.bf16.mxu0 0
      %3697 = vmatpush1.bf16.msra.mxu0 0
      %3698 = vmatprep.subr.bf16.mxu0 0
      %3699 = vmatpush1.bf16.msra.mxu0 0
      %3700 = vmatprep.subr.bf16.mxu0 0
      %3701 = vmatpush1.bf16.msra.mxu0 0
      %3702 = vmatprep.subr.bf16.mxu0 0
      %3703 = vmatpush1.bf16.msra.mxu0 0
      %3704 = vmatprep.subr.bf16.mxu0 0
      %3705 = vmatpush1.bf16.msra.mxu0 %v3647
      %3706 = vmatprep.subr.bf16.mxu0 0
      %3707 = vmatpush2.bf16.msra.mxu0 0
      %3708 = vmatprep.subr.bf16.mxu0 0
      %3709 = vmatpush2.bf16.msra.mxu0 0
      %3710 = vmatprep.subr.bf16.mxu0 0
      %3711 = vmatpush2.bf16.msra.mxu0 0
      %3712 = vmatprep.subr.bf16.mxu0 0
      %3713 = vmatpush2.bf16.msra.mxu0 0
      %3714 = vmatprep.subr.bf16.mxu0 0
      %3715 = vmatpush2.bf16.msra.mxu0 0
      %3716 = vmatprep.subr.bf16.mxu0 0
      %3717 = vmatpush2.bf16.msra.mxu0 0
      %3718 = vmatprep.subr.bf16.mxu0 0
      %3719 = vmatpush2.bf16.msra.mxu0 0
      %3720 = vmatprep.subr.bf16.mxu0 0
      %3721 = vmatpush2.bf16.msra.mxu0 0
      %3722 = vmatprep.mubr.bf16.mxu0 0
      %3723 = vmatmul.mubr.bf16.gmra.mxu0 %v3638
      %v3724 = vpop.f32.mrf.mxu0
      %v3725 = vadd.f32 0.0, %v3724
      %v3726 = vpop.f32.mrf.mxu0
      %v3727 = vpop.f32.mrf.mxu0
      %v3728 = vpop.f32.mrf.mxu0
      %3729 = vdwg.mxu0
      %v3730 = vadd.f32 %v3610, %v3684
      %v3731 = vadd.f32 %v3611, %v3686
      %v3732 = vadd.f32 %v3612, %v3725
      %v3733 = vld [vmem:[%s1645] sm:$0xf]
      %3734 = vrot.lane.b32.xlu0 %v3502, 108
      %v3735 = vpop.permute.xlu0 %3734
      %3736 = vrot.lane.b32.xlu0 %v3503, 108
      %v3737 = vpop.permute.xlu0 %3736
      %3738 = vrot.lane.b32.xlu0 %v3504, 108
      %v3739 = vpop.permute.xlu0 %3738
      %3740 = vrot.lane.b32.xlu0 %v3505, 108
      %v3741 = vpop.permute.xlu0 %3740
      %v3742 = vsel %vm440, %v3735, %v3737
      %v3743 = vsel %vm440, %v3737, %v3739
      %v3744 = vsel %vm440, %v3739, %v3741
      %v3746 = vsel %vm1074, %v3733, 0
      %v3749 = vsel %vm571, %v3742, 0
      %v3752 = vsel %vm571, %v3743, 0
      %v3755 = vsel %vm571, %v3744, 0
      %3757 = vmatprep.subr.bf16.mxu0 0
      %3758 = vmatpush1.bf16.msra.mxu0 0
      %3759 = vmatprep.subr.bf16.mxu0 0
      %3760 = vmatpush1.bf16.msra.mxu0 0
      %3761 = vmatprep.subr.bf16.mxu0 0
      %3762 = vmatpush1.bf16.msra.mxu0 0
      %3763 = vmatprep.subr.bf16.mxu0 0
      %3764 = vmatpush1.bf16.msra.mxu0 0
      %3765 = vmatprep.subr.bf16.mxu0 0
      %3766 = vmatpush1.bf16.msra.mxu0 0
      %3767 = vmatprep.subr.bf16.mxu0 0
      %3768 = vmatpush1.bf16.msra.mxu0 0
      %3769 = vmatprep.subr.bf16.mxu0 0
      %3770 = vmatpush1.bf16.msra.mxu0 0
      %3771 = vmatprep.subr.bf16.mxu0 %v3752
      %3772 = vmatpush1.bf16.msra.mxu0 %v3749
      %3773 = vmatprep.subr.bf16.mxu0 0
      %3774 = vmatpush2.bf16.msra.mxu0 0
      %3775 = vmatprep.subr.bf16.mxu0 0
      %3776 = vmatpush2.bf16.msra.mxu0 0
      %3777 = vmatprep.subr.bf16.mxu0 0
      %3778 = vmatpush2.bf16.msra.mxu0 0
      %3779 = vmatprep.subr.bf16.mxu0 0
      %3780 = vmatpush2.bf16.msra.mxu0 0
      %3781 = vmatprep.subr.bf16.mxu0 0
      %3782 = vmatpush2.bf16.msra.mxu0 0
      %3783 = vmatprep.subr.bf16.mxu0 0
      %3784 = vmatpush2.bf16.msra.mxu0 0
      %3785 = vmatprep.subr.bf16.mxu0 0
      %3786 = vmatpush2.bf16.msra.mxu0 0
      %3787 = vmatprep.subr.bf16.mxu0 0
      %3788 = vmatpush2.bf16.msra.mxu0 0
      %3789 = vmatprep.mubr.bf16.mxu0 0
      %3790 = vmatmul.mubr.bf16.gmra.mxu0 %v3746
      %v3791 = vpop.f32.mrf.mxu0
      %v3792 = vadd.f32 0.0, %v3791
      %v3793 = vpop.f32.mrf.mxu0
      %v3794 = vadd.f32 0.0, %v3793
      %v3795 = vpop.f32.mrf.mxu0
      %v3796 = vpop.f32.mrf.mxu0
      %3797 = vdwg.mxu0
      %3798 = vmatprep.subr.bf16.mxu0 0
      %3799 = vmatpush1.bf16.msra.mxu0 0
      %3800 = vmatprep.subr.bf16.mxu0 0
      %3801 = vmatpush1.bf16.msra.mxu0 0
      %3802 = vmatprep.subr.bf16.mxu0 0
      %3803 = vmatpush1.bf16.msra.mxu0 0
      %3804 = vmatprep.subr.bf16.mxu0 0
      %3805 = vmatpush1.bf16.msra.mxu0 0
      %3806 = vmatprep.subr.bf16.mxu0 0
      %3807 = vmatpush1.bf16.msra.mxu0 0
      %3808 = vmatprep.subr.bf16.mxu0 0
      %3809 = vmatpush1.bf16.msra.mxu0 0
      %3810 = vmatprep.subr.bf16.mxu0 0
      %3811 = vmatpush1.bf16.msra.mxu0 0
      %3812 = vmatprep.subr.bf16.mxu0 0
      %3813 = vmatpush1.bf16.msra.mxu0 %v3755
      %3814 = vmatprep.subr.bf16.mxu0 0
      %3815 = vmatpush2.bf16.msra.mxu0 0
      %3816 = vmatprep.subr.bf16.mxu0 0
      %3817 = vmatpush2.bf16.msra.mxu0 0
      %3818 = vmatprep.subr.bf16.mxu0 0
      %3819 = vmatpush2.bf16.msra.mxu0 0
      %3820 = vmatprep.subr.bf16.mxu0 0
      %3821 = vmatpush2.bf16.msra.mxu0 0
      %3822 = vmatprep.subr.bf16.mxu0 0
      %3823 = vmatpush2.bf16.msra.mxu0 0
      %3824 = vmatprep.subr.bf16.mxu0 0
      %3825 = vmatpush2.bf16.msra.mxu0 0
      %3826 = vmatprep.subr.bf16.mxu0 0
      %3827 = vmatpush2.bf16.msra.mxu0 0
      %3828 = vmatprep.subr.bf16.mxu0 0
      %3829 = vmatpush2.bf16.msra.mxu0 0
      %3830 = vmatprep.mubr.bf16.mxu0 0
      %3831 = vmatmul.mubr.bf16.gmra.mxu0 %v3746
      %v3832 = vpop.f32.mrf.mxu0
      %v3833 = vadd.f32 0.0, %v3832
      %v3834 = vpop.f32.mrf.mxu0
      %v3835 = vpop.f32.mrf.mxu0
      %v3836 = vpop.f32.mrf.mxu0
      %3837 = vdwg.mxu0
      %v3838 = vadd.f32 %v3730, %v3792
      %v3839 = vadd.f32 %v3731, %v3794
      %v3840 = vadd.f32 %v3732, %v3833
      %v3841 = vld [vmem:[%s1754] sm:$0xf]
      %3842 = vrot.lane.b32.xlu0 %v3154, 91
      %v3843 = vpop.permute.xlu0 %3842
      %3844 = vrot.lane.b32.xlu0 %v3155, 91
      %v3845 = vpop.permute.xlu0 %3844
      %3846 = vrot.lane.b32.xlu0 %v3156, 91
      %v3847 = vpop.permute.xlu0 %3846
      %3848 = vrot.lane.b32.xlu0 %v3157, 91
      %v3849 = vpop.permute.xlu0 %3848
      %vm3850 = vcmask 744448
      %v3851 = vsel %vm3850, %v3843, %v3845
      %v3852 = vsel %vm3850, %v3845, %v3847
      %v3853 = vsel %vm3850, %v3847, %v3849
      %v3855 = vsel %vm1074, %v3841, 0
      %v3858 = vsel %vm571, %v3851, 0
      %v3861 = vsel %vm571, %v3852, 0
      %v3864 = vsel %vm571, %v3853, 0
      %3866 = vmatprep.subr.bf16.mxu0 0
      %3867 = vmatpush1.bf16.msra.mxu0 0
      %3868 = vmatprep.subr.bf16.mxu0 0
      %3869 = vmatpush1.bf16.msra.mxu0 0
      %3870 = vmatprep.subr.bf16.mxu0 0
      %3871 = vmatpush1.bf16.msra.mxu0 0
      %3872 = vmatprep.subr.bf16.mxu0 0
      %3873 = vmatpush1.bf16.msra.mxu0 0
      %3874 = vmatprep.subr.bf16.mxu0 0
      %3875 = vmatpush1.bf16.msra.mxu0 0
      %3876 = vmatprep.subr.bf16.mxu0 0
      %3877 = vmatpush1.bf16.msra.mxu0 0
      %3878 = vmatprep.subr.bf16.mxu0 0
      %3879 = vmatpush1.bf16.msra.mxu0 0
      %3880 = vmatprep.subr.bf16.mxu0 %v3861
      %3881 = vmatpush1.bf16.msra.mxu0 %v3858
      %3882 = vmatprep.subr.bf16.mxu0 0
      %3883 = vmatpush2.bf16.msra.mxu0 0
      %3884 = vmatprep.subr.bf16.mxu0 0
      %3885 = vmatpush2.bf16.msra.mxu0 0
      %3886 = vmatprep.subr.bf16.mxu0 0
      %3887 = vmatpush2.bf16.msra.mxu0 0
      %3888 = vmatprep.subr.bf16.mxu0 0
      %3889 = vmatpush2.bf16.msra.mxu0 0
      %3890 = vmatprep.subr.bf16.mxu0 0
      %3891 = vmatpush2.bf16.msra.mxu0 0
      %3892 = vmatprep.subr.bf16.mxu0 0
      %3893 = vmatpush2.bf16.msra.mxu0 0
      %3894 = vmatprep.subr.bf16.mxu0 0
      %3895 = vmatpush2.bf16.msra.mxu0 0
      %3896 = vmatprep.subr.bf16.mxu0 0
      %3897 = vmatpush2.bf16.msra.mxu0 0
      %3898 = vmatprep.mubr.bf16.mxu0 0
      %3899 = vmatmul.mubr.bf16.gmra.mxu0 %v3855
      %v3900 = vpop.f32.mrf.mxu0
      %v3901 = vadd.f32 0.0, %v3900
      %v3902 = vpop.f32.mrf.mxu0
      %v3903 = vadd.f32 0.0, %v3902
      %v3904 = vpop.f32.mrf.mxu0
      %v3905 = vpop.f32.mrf.mxu0
      %3906 = vdwg.mxu0
      %3907 = vmatprep.subr.bf16.mxu0 0
      %3908 = vmatpush1.bf16.msra.mxu0 0
      %3909 = vmatprep.subr.bf16.mxu0 0
      %3910 = vmatpush1.bf16.msra.mxu0 0
      %3911 = vmatprep.subr.bf16.mxu0 0
      %3912 = vmatpush1.bf16.msra.mxu0 0
      %3913 = vmatprep.subr.bf16.mxu0 0
      %3914 = vmatpush1.bf16.msra.mxu0 0
      %3915 = vmatprep.subr.bf16.mxu0 0
      %3916 = vmatpush1.bf16.msra.mxu0 0
      %3917 = vmatprep.subr.bf16.mxu0 0
      %3918 = vmatpush1.bf16.msra.mxu0 0
      %3919 = vmatprep.subr.bf16.mxu0 0
      %3920 = vmatpush1.bf16.msra.mxu0 0
      %3921 = vmatprep.subr.bf16.mxu0 0
      %3922 = vmatpush1.bf16.msra.mxu0 %v3864
      %3923 = vmatprep.subr.bf16.mxu0 0
      %3924 = vmatpush2.bf16.msra.mxu0 0
      %3925 = vmatprep.subr.bf16.mxu0 0
      %3926 = vmatpush2.bf16.msra.mxu0 0
      %3927 = vmatprep.subr.bf16.mxu0 0
      %3928 = vmatpush2.bf16.msra.mxu0 0
      %3929 = vmatprep.subr.bf16.mxu0 0
      %3930 = vmatpush2.bf16.msra.mxu0 0
      %3931 = vmatprep.subr.bf16.mxu0 0
      %3932 = vmatpush2.bf16.msra.mxu0 0
      %3933 = vmatprep.subr.bf16.mxu0 0
      %3934 = vmatpush2.bf16.msra.mxu0 0
      %3935 = vmatprep.subr.bf16.mxu0 0
      %3936 = vmatpush2.bf16.msra.mxu0 0
      %3937 = vmatprep.subr.bf16.mxu0 0
      %3938 = vmatpush2.bf16.msra.mxu0 0
      %3939 = vmatprep.mubr.bf16.mxu0 0
      %3940 = vmatmul.mubr.bf16.gmra.mxu0 %v3855
      %v3941 = vpop.f32.mrf.mxu0
      %v3942 = vadd.f32 0.0, %v3941
      %v3943 = vpop.f32.mrf.mxu0
      %v3944 = vpop.f32.mrf.mxu0
      %v3945 = vpop.f32.mrf.mxu0
      %3946 = vdwg.mxu0
      %v3947 = vadd.f32 %v3838, %v3901
      %v3948 = vadd.f32 %v3839, %v3903
      %v3949 = vadd.f32 %v3840, %v3942
      %v3950 = vld [vmem:[%s1863] sm:$0xf]
      %3951 = vrot.lane.b32.xlu0 %v3274, 90
      %v3952 = vpop.permute.xlu0 %3951
      %3953 = vrot.lane.b32.xlu0 %v3275, 90
      %v3954 = vpop.permute.xlu0 %3953
      %3955 = vrot.lane.b32.xlu0 %v3276, 90
      %v3956 = vpop.permute.xlu0 %3955
      %3957 = vrot.lane.b32.xlu0 %v3277, 90
      %v3958 = vpop.permute.xlu0 %3957
      %v3959 = vsel %vm763, %v3952, %v3954
      %v3960 = vsel %vm763, %v3954, %v3956
      %v3961 = vsel %vm763, %v3956, %v3958
      %v3963 = vsel %vm1074, %v3950, 0
      %v3966 = vsel %vm571, %v3959, 0
      %v3969 = vsel %vm571, %v3960, 0
      %v3972 = vsel %vm571, %v3961, 0
      %3974 = vmatprep.subr.bf16.mxu0 0
      %3975 = vmatpush1.bf16.msra.mxu0 0
      %3976 = vmatprep.subr.bf16.mxu0 0
      %3977 = vmatpush1.bf16.msra.mxu0 0
      %3978 = vmatprep.subr.bf16.mxu0 0
      %3979 = vmatpush1.bf16.msra.mxu0 0
      %3980 = vmatprep.subr.bf16.mxu0 0
      %3981 = vmatpush1.bf16.msra.mxu0 0
      %3982 = vmatprep.subr.bf16.mxu0 0
      %3983 = vmatpush1.bf16.msra.mxu0 0
      %3984 = vmatprep.subr.bf16.mxu0 0
      %3985 = vmatpush1.bf16.msra.mxu0 0
      %3986 = vmatprep.subr.bf16.mxu0 0
      %3987 = vmatpush1.bf16.msra.mxu0 0
      %3988 = vmatprep.subr.bf16.mxu0 %v3969
      %3989 = vmatpush1.bf16.msra.mxu0 %v3966
      %3990 = vmatprep.subr.bf16.mxu0 0
      %3991 = vmatpush2.bf16.msra.mxu0 0
      %3992 = vmatprep.subr.bf16.mxu0 0
      %3993 = vmatpush2.bf16.msra.mxu0 0
      %3994 = vmatprep.subr.bf16.mxu0 0
      %3995 = vmatpush2.bf16.msra.mxu0 0
      %3996 = vmatprep.subr.bf16.mxu0 0
      %3997 = vmatpush2.bf16.msra.mxu0 0
      %3998 = vmatprep.subr.bf16.mxu0 0
      %3999 = vmatpush2.bf16.msra.mxu0 0
      %4000 = vmatprep.subr.bf16.mxu0 0
      %4001 = vmatpush2.bf16.msra.mxu0 0
      %4002 = vmatprep.subr.bf16.mxu0 0
      %4003 = vmatpush2.bf16.msra.mxu0 0
      %4004 = vmatprep.subr.bf16.mxu0 0
      %4005 = vmatpush2.bf16.msra.mxu0 0
      %4006 = vmatprep.mubr.bf16.mxu0 0
      %4007 = vmatmul.mubr.bf16.gmra.mxu0 %v3963
      %v4008 = vpop.f32.mrf.mxu0
      %v4009 = vadd.f32 0.0, %v4008
      %v4010 = vpop.f32.mrf.mxu0
      %v4011 = vadd.f32 0.0, %v4010
      %v4012 = vpop.f32.mrf.mxu0
      %v4013 = vpop.f32.mrf.mxu0
      %4014 = vdwg.mxu0
      %4015 = vmatprep.subr.bf16.mxu0 0
      %4016 = vmatpush1.bf16.msra.mxu0 0
      %4017 = vmatprep.subr.bf16.mxu0 0
      %4018 = vmatpush1.bf16.msra.mxu0 0
      %4019 = vmatprep.subr.bf16.mxu0 0
      %4020 = vmatpush1.bf16.msra.mxu0 0
      %4021 = vmatprep.subr.bf16.mxu0 0
      %4022 = vmatpush1.bf16.msra.mxu0 0
      %4023 = vmatprep.subr.bf16.mxu0 0
      %4024 = vmatpush1.bf16.msra.mxu0 0
      %4025 = vmatprep.subr.bf16.mxu0 0
      %4026 = vmatpush1.bf16.msra.mxu0 0
      %4027 = vmatprep.subr.bf16.mxu0 0
      %4028 = vmatpush1.bf16.msra.mxu0 0
      %4029 = vmatprep.subr.bf16.mxu0 0
      %4030 = vmatpush1.bf16.msra.mxu0 %v3972
      %4031 = vmatprep.subr.bf16.mxu0 0
      %4032 = vmatpush2.bf16.msra.mxu0 0
      %4033 = vmatprep.subr.bf16.mxu0 0
      %4034 = vmatpush2.bf16.msra.mxu0 0
      %4035 = vmatprep.subr.bf16.mxu0 0
      %4036 = vmatpush2.bf16.msra.mxu0 0
      %4037 = vmatprep.subr.bf16.mxu0 0
      %4038 = vmatpush2.bf16.msra.mxu0 0
      %4039 = vmatprep.subr.bf16.mxu0 0
      %4040 = vmatpush2.bf16.msra.mxu0 0
      %4041 = vmatprep.subr.bf16.mxu0 0
      %4042 = vmatpush2.bf16.msra.mxu0 0
      %4043 = vmatprep.subr.bf16.mxu0 0
      %4044 = vmatpush2.bf16.msra.mxu0 0
      %4045 = vmatprep.subr.bf16.mxu0 0
      %4046 = vmatpush2.bf16.msra.mxu0 0
      %4047 = vmatprep.mubr.bf16.mxu0 0
      %4048 = vmatmul.mubr.bf16.gmra.mxu0 %v3963
      %v4049 = vpop.f32.mrf.mxu0
      %v4050 = vadd.f32 0.0, %v4049
      %v4051 = vpop.f32.mrf.mxu0
      %v4052 = vpop.f32.mrf.mxu0
      %v4053 = vpop.f32.mrf.mxu0
      %4054 = vdwg.mxu0
      %v4055 = vadd.f32 %v3947, %v4009
      %v4056 = vadd.f32 %v3948, %v4011
      %v4057 = vadd.f32 %v3949, %v4050
      %v4058 = vld [vmem:[%s1972] sm:$0xf]
      %4059 = vrot.lane.b32.xlu0 %v3154, 90
      %v4060 = vpop.permute.xlu0 %4059
      %4061 = vrot.lane.b32.xlu0 %v3155, 90
      %v4062 = vpop.permute.xlu0 %4061
      %4063 = vrot.lane.b32.xlu0 %v3156, 90
      %v4064 = vpop.permute.xlu0 %4063
      %4065 = vrot.lane.b32.xlu0 %v3157, 90
      %v4066 = vpop.permute.xlu0 %4065
      %v4067 = vsel %vm763, %v4060, %v4062
      %v4068 = vsel %vm763, %v4062, %v4064
      %v4069 = vsel %vm763, %v4064, %v4066
      %v4071 = vsel %vm1074, %v4058, 0
      %v4074 = vsel %vm571, %v4067, 0
      %v4077 = vsel %vm571, %v4068, 0
      %v4080 = vsel %vm571, %v4069, 0
      %4082 = vmatprep.subr.bf16.mxu0 0
      %4083 = vmatpush1.bf16.msra.mxu0 0
      %4084 = vmatprep.subr.bf16.mxu0 0
      %4085 = vmatpush1.bf16.msra.mxu0 0
      %4086 = vmatprep.subr.bf16.mxu0 0
      %4087 = vmatpush1.bf16.msra.mxu0 0
      %4088 = vmatprep.subr.bf16.mxu0 0
      %4089 = vmatpush1.bf16.msra.mxu0 0
      %4090 = vmatprep.subr.bf16.mxu0 0
      %4091 = vmatpush1.bf16.msra.mxu0 0
      %4092 = vmatprep.subr.bf16.mxu0 0
      %4093 = vmatpush1.bf16.msra.mxu0 0
      %4094 = vmatprep.subr.bf16.mxu0 0
      %4095 = vmatpush1.bf16.msra.mxu0 0
      %4096 = vmatprep.subr.bf16.mxu0 %v4077
      %4097 = vmatpush1.bf16.msra.mxu0 %v4074
      %4098 = vmatprep.subr.bf16.mxu0 0
      %4099 = vmatpush2.bf16.msra.mxu0 0
      %4100 = vmatprep.subr.bf16.mxu0 0
      %4101 = vmatpush2.bf16.msra.mxu0 0
      %4102 = vmatprep.subr.bf16.mxu0 0
      %4103 = vmatpush2.bf16.msra.mxu0 0
      %4104 = vmatprep.subr.bf16.mxu0 0
      %4105 = vmatpush2.bf16.msra.mxu0 0
      %4106 = vmatprep.subr.bf16.mxu0 0
      %4107 = vmatpush2.bf16.msra.mxu0 0
      %4108 = vmatprep.subr.bf16.mxu0 0
      %4109 = vmatpush2.bf16.msra.mxu0 0
      %4110 = vmatprep.subr.bf16.mxu0 0
      %4111 = vmatpush2.bf16.msra.mxu0 0
      %4112 = vmatprep.subr.bf16.mxu0 0
      %4113 = vmatpush2.bf16.msra.mxu0 0
      %4114 = vmatprep.mubr.bf16.mxu0 0
      %4115 = vmatmul.mubr.bf16.gmra.mxu0 %v4071
      %v4116 = vpop.f32.mrf.mxu0
      %v4117 = vadd.f32 0.0, %v4116
      %v4118 = vpop.f32.mrf.mxu0
      %v4119 = vadd.f32 0.0, %v4118
      %v4120 = vpop.f32.mrf.mxu0
      %v4121 = vpop.f32.mrf.mxu0
      %4122 = vdwg.mxu0
      %4123 = vmatprep.subr.bf16.mxu0 0
      %4124 = vmatpush1.bf16.msra.mxu0 0
      %4125 = vmatprep.subr.bf16.mxu0 0
      %4126 = vmatpush1.bf16.msra.mxu0 0
      %4127 = vmatprep.subr.bf16.mxu0 0
      %4128 = vmatpush1.bf16.msra.mxu0 0
      %4129 = vmatprep.subr.bf16.mxu0 0
      %4130 = vmatpush1.bf16.msra.mxu0 0
      %4131 = vmatprep.subr.bf16.mxu0 0
      %4132 = vmatpush1.bf16.msra.mxu0 0
      %4133 = vmatprep.subr.bf16.mxu0 0
      %4134 = vmatpush1.bf16.msra.mxu0 0
      %4135 = vmatprep.subr.bf16.mxu0 0
      %4136 = vmatpush1.bf16.msra.mxu0 0
      %4137 = vmatprep.subr.bf16.mxu0 0
      %4138 = vmatpush1.bf16.msra.mxu0 %v4080
      %4139 = vmatprep.subr.bf16.mxu0 0
      %4140 = vmatpush2.bf16.msra.mxu0 0
      %4141 = vmatprep.subr.bf16.mxu0 0
      %4142 = vmatpush2.bf16.msra.mxu0 0
      %4143 = vmatprep.subr.bf16.mxu0 0
      %4144 = vmatpush2.bf16.msra.mxu0 0
      %4145 = vmatprep.subr.bf16.mxu0 0
      %4146 = vmatpush2.bf16.msra.mxu0 0
      %4147 = vmatprep.subr.bf16.mxu0 0
      %4148 = vmatpush2.bf16.msra.mxu0 0
      %4149 = vmatprep.subr.bf16.mxu0 0
      %4150 = vmatpush2.bf16.msra.mxu0 0
      %4151 = vmatprep.subr.bf16.mxu0 0
      %4152 = vmatpush2.bf16.msra.mxu0 0
      %4153 = vmatprep.subr.bf16.mxu0 0
      %4154 = vmatpush2.bf16.msra.mxu0 0
      %4155 = vmatprep.mubr.bf16.mxu0 0
      %4156 = vmatmul.mubr.bf16.gmra.mxu0 %v4071
      %v4157 = vpop.f32.mrf.mxu0
      %v4158 = vadd.f32 0.0, %v4157
      %v4159 = vpop.f32.mrf.mxu0
      %v4160 = vpop.f32.mrf.mxu0
      %v4161 = vpop.f32.mrf.mxu0
      %4162 = vdwg.mxu0
      %v4163 = vadd.f32 %v4055, %v4117
      %v4164 = vadd.f32 %v4056, %v4119
      %v4165 = vadd.f32 %v4057, %v4158
      %v4166 = vmul.f32 %v4163, 0.2
      %v4167 = vmul.f32 %v4164, 0.2
      %v4168 = vmul.f32 %v4165, 0.2
      %v4169 = vmax.f32 %v4163, %v4166
      %v4170 = vmax.f32 %v4164, %v4167
      %v4171 = vmax.f32 %v4165, %v4168
      %v4172 = vpack.c.bf16 %v4169, %v4169
      %v4173 = vpack.c.bf16 %v4170, %v4170
      %v4174 = vpack.c.bf16 %v4171, %v4171
      %v4178 = vunpack.c.l.b16 %v4172
      %v4179 = vunpack.c.l.b16 %v4173
      %v4180 = vunpack.c.l.b16 %v4174
      %v4181 = vpack.c.b16 %v4179, %v4178
      %v4182 = vpack.c.b16 %v4180, %v4180
      %s4185 = scalar_lea.vmem %s251, 24
      %4186 = vst [vmem:[%s4185] sm:$0xff] %v4181
      %4187 = vst [vmem:[%s4185 + $0x8] sm:$0xf] %v4182
      %v4188 = vld [vmem:[%s4] sm:$0xf]
      %v4189 = vld [vmem:[#allocation3] sm:$0xff]
      %v4190 = vld [vmem:[#allocation3 + $0x8] sm:$0xff]
      %v4193 = vunpack.c.l.b16 %v4189
      %v4194 = vunpack.c.h.b16 %v4189
      %v4195 = vunpack.c.l.b16 %v4190
      %v4196 = vunpack.c.h.b16 %v4190
      %v4197 = vpack.c.b16 %v4193, %v4193
      %v4198 = vpack.c.b16 %v4194, %v4194
      %v4199 = vpack.c.b16 %v4195, %v4195
      %v4200 = vpack.c.b16 %v4196, %v4196
      %4201 = vrot.lane.b32.xlu0 %v4197, 108
      %v4202 = vpop.permute.xlu0 %4201
      %4203 = vrot.lane.b32.xlu0 %v4198, 108
      %v4204 = vpop.permute.xlu0 %4203
      %4205 = vrot.lane.b32.xlu0 %v4199, 108
      %v4206 = vpop.permute.xlu0 %4205
      %4207 = vrot.lane.b32.xlu0 %v4200, 108
      %v4208 = vpop.permute.xlu0 %4207
      %v4209 = vsel %vm440, %v4202, %v4204
      %v4210 = vsel %vm440, %v4204, %v4206
      %v4211 = vsel %vm440, %v4206, %v4208
      %v4213 = vsel %vm1074, %v4188, 0
      %v4216 = vsel %vm571, %v4209, 0
      %v4219 = vsel %vm571, %v4210, 0
      %v4222 = vsel %vm571, %v4211, 0
      %4224 = vmatprep.subr.bf16.mxu0 0
      %4225 = vmatpush1.bf16.msra.mxu0 0
      %4226 = vmatprep.subr.bf16.mxu0 0
      %4227 = vmatpush1.bf16.msra.mxu0 0
      %4228 = vmatprep.subr.bf16.mxu0 0
      %4229 = vmatpush1.bf16.msra.mxu0 0
      %4230 = vmatprep.subr.bf16.mxu0 0
      %4231 = vmatpush1.bf16.msra.mxu0 0
      %4232 = vmatprep.subr.bf16.mxu0 0
      %4233 = vmatpush1.bf16.msra.mxu0 0
      %4234 = vmatprep.subr.bf16.mxu0 0
      %4235 = vmatpush1.bf16.msra.mxu0 0
      %4236 = vmatprep.subr.bf16.mxu0 0
      %4237 = vmatpush1.bf16.msra.mxu0 0
      %4238 = vmatprep.subr.bf16.mxu0 %v4219
      %4239 = vmatpush1.bf16.msra.mxu0 %v4216
      %4240 = vmatprep.subr.bf16.mxu0 0
      %4241 = vmatpush2.bf16.msra.mxu0 0
      %4242 = vmatprep.subr.bf16.mxu0 0
      %4243 = vmatpush2.bf16.msra.mxu0 0
      %4244 = vmatprep.subr.bf16.mxu0 0
      %4245 = vmatpush2.bf16.msra.mxu0 0
      %4246 = vmatprep.subr.bf16.mxu0 0
      %4247 = vmatpush2.bf16.msra.mxu0 0
      %4248 = vmatprep.subr.bf16.mxu0 0
      %4249 = vmatpush2.bf16.msra.mxu0 0
      %4250 = vmatprep.subr.bf16.mxu0 0
      %4251 = vmatpush2.bf16.msra.mxu0 0
      %4252 = vmatprep.subr.bf16.mxu0 0
      %4253 = vmatpush2.bf16.msra.mxu0 0
      %4254 = vmatprep.subr.bf16.mxu0 0
      %4255 = vmatpush2.bf16.msra.mxu0 0
      %4256 = vmatprep.mubr.bf16.mxu0 0
      %4257 = vmatmul.mubr.bf16.gmra.mxu0 %v4213
      %v4258 = vpop.f32.mrf.mxu0
      %v4259 = vadd.f32 0.0, %v4258
      %v4260 = vpop.f32.mrf.mxu0
      %v4261 = vadd.f32 0.0, %v4260
      %v4262 = vpop.f32.mrf.mxu0
      %v4263 = vpop.f32.mrf.mxu0
      %4264 = vdwg.mxu0
      %4265 = vmatprep.subr.bf16.mxu0 0
      %4266 = vmatpush1.bf16.msra.mxu0 0
      %4267 = vmatprep.subr.bf16.mxu0 0
      %4268 = vmatpush1.bf16.msra.mxu0 0
      %4269 = vmatprep.subr.bf16.mxu0 0
      %4270 = vmatpush1.bf16.msra.mxu0 0
      %4271 = vmatprep.subr.bf16.mxu0 0
      %4272 = vmatpush1.bf16.msra.mxu0 0
      %4273 = vmatprep.subr.bf16.mxu0 0
      %4274 = vmatpush1.bf16.msra.mxu0 0
      %4275 = vmatprep.subr.bf16.mxu0 0
      %4276 = vmatpush1.bf16.msra.mxu0 0
      %4277 = vmatprep.subr.bf16.mxu0 0
      %4278 = vmatpush1.bf16.msra.mxu0 0
      %4279 = vmatprep.subr.bf16.mxu0 0
      %4280 = vmatpush1.bf16.msra.mxu0 %v4222
      %4281 = vmatprep.subr.bf16.mxu0 0
      %4282 = vmatpush2.bf16.msra.mxu0 0
      %4283 = vmatprep.subr.bf16.mxu0 0
      %4284 = vmatpush2.bf16.msra.mxu0 0
      %4285 = vmatprep.subr.bf16.mxu0 0
      %4286 = vmatpush2.bf16.msra.mxu0 0
      %4287 = vmatprep.subr.bf16.mxu0 0
      %4288 = vmatpush2.bf16.msra.mxu0 0
      %4289 = vmatprep.subr.bf16.mxu0 0
      %4290 = vmatpush2.bf16.msra.mxu0 0
      %4291 = vmatprep.subr.bf16.mxu0 0
      %4292 = vmatpush2.bf16.msra.mxu0 0
      %4293 = vmatprep.subr.bf16.mxu0 0
      %4294 = vmatpush2.bf16.msra.mxu0 0
      %4295 = vmatprep.subr.bf16.mxu0 0
      %4296 = vmatpush2.bf16.msra.mxu0 0
      %4297 = vmatprep.mubr.bf16.mxu0 0
      %4298 = vmatmul.mubr.bf16.gmra.mxu0 %v4213
      %v4299 = vpop.f32.mrf.mxu0
      %v4300 = vadd.f32 0.0, %v4299
      %v4301 = vpop.f32.mrf.mxu0
      %v4302 = vpop.f32.mrf.mxu0
      %v4303 = vpop.f32.mrf.mxu0
      %4304 = vdwg.mxu0
      %v4305 = vadd.f32 %v409, %v4259
      %v4306 = vadd.f32 %v409, %v4261
      %v4307 = vadd.f32 %v409, %v4300
      %v4308 = vld [vmem:[%s1171] sm:$0xf]
      %v4309 = vld [vmem:[%s730] sm:$0xff]
      %v4310 = vld [vmem:[%s730 + $0x8] sm:$0xff]
      %v4313 = vunpack.c.l.b16 %v4309
      %v4314 = vunpack.c.h.b16 %v4309
      %v4315 = vunpack.c.l.b16 %v4310
      %v4316 = vunpack.c.h.b16 %v4310
      %v4317 = vpack.c.b16 %v4313, %v4313
      %v4318 = vpack.c.b16 %v4314, %v4314
      %v4319 = vpack.c.b16 %v4315, %v4315
      %v4320 = vpack.c.b16 %v4316, %v4316
      %4321 = vrot.lane.b32.xlu0 %v4317, 108
      %v4322 = vpop.permute.xlu0 %4321
      %4323 = vrot.lane.b32.xlu0 %v4318, 108
      %v4324 = vpop.permute.xlu0 %4323
      %4325 = vrot.lane.b32.xlu0 %v4319, 108
      %v4326 = vpop.permute.xlu0 %4325
      %4327 = vrot.lane.b32.xlu0 %v4320, 108
      %v4328 = vpop.permute.xlu0 %4327
      %v4329 = vsel %vm440, %v4322, %v4324
      %v4330 = vsel %vm440, %v4324, %v4326
      %v4331 = vsel %vm440, %v4326, %v4328
      %v4333 = vsel %vm1074, %v4308, 0
      %v4336 = vsel %vm571, %v4329, 0
      %v4339 = vsel %vm571, %v4330, 0
      %v4342 = vsel %vm571, %v4331, 0
      %4344 = vmatprep.subr.bf16.mxu0 0
      %4345 = vmatpush1.bf16.msra.mxu0 0
      %4346 = vmatprep.subr.bf16.mxu0 0
      %4347 = vmatpush1.bf16.msra.mxu0 0
      %4348 = vmatprep.subr.bf16.mxu0 0
      %4349 = vmatpush1.bf16.msra.mxu0 0
      %4350 = vmatprep.subr.bf16.mxu0 0
      %4351 = vmatpush1.bf16.msra.mxu0 0
      %4352 = vmatprep.subr.bf16.mxu0 0
      %4353 = vmatpush1.bf16.msra.mxu0 0
      %4354 = vmatprep.subr.bf16.mxu0 0
      %4355 = vmatpush1.bf16.msra.mxu0 0
      %4356 = vmatprep.subr.bf16.mxu0 0
      %4357 = vmatpush1.bf16.msra.mxu0 0
      %4358 = vmatprep.subr.bf16.mxu0 %v4339
      %4359 = vmatpush1.bf16.msra.mxu0 %v4336
      %4360 = vmatprep.subr.bf16.mxu0 0
      %4361 = vmatpush2.bf16.msra.mxu0 0
      %4362 = vmatprep.subr.bf16.mxu0 0
      %4363 = vmatpush2.bf16.msra.mxu0 0
      %4364 = vmatprep.subr.bf16.mxu0 0
      %4365 = vmatpush2.bf16.msra.mxu0 0
      %4366 = vmatprep.subr.bf16.mxu0 0
      %4367 = vmatpush2.bf16.msra.mxu0 0
      %4368 = vmatprep.subr.bf16.mxu0 0
      %4369 = vmatpush2.bf16.msra.mxu0 0
      %4370 = vmatprep.subr.bf16.mxu0 0
      %4371 = vmatpush2.bf16.msra.mxu0 0
      %4372 = vmatprep.subr.bf16.mxu0 0
      %4373 = vmatpush2.bf16.msra.mxu0 0
      %4374 = vmatprep.subr.bf16.mxu0 0
      %4375 = vmatpush2.bf16.msra.mxu0 0
      %4376 = vmatprep.mubr.bf16.mxu0 0
      %4377 = vmatmul.mubr.bf16.gmra.mxu0 %v4333
      %v4378 = vpop.f32.mrf.mxu0
      %v4379 = vadd.f32 0.0, %v4378
      %v4380 = vpop.f32.mrf.mxu0
      %v4381 = vadd.f32 0.0, %v4380
      %v4382 = vpop.f32.mrf.mxu0
      %v4383 = vpop.f32.mrf.mxu0
      %4384 = vdwg.mxu0
      %4385 = vmatprep.subr.bf16.mxu0 0
      %4386 = vmatpush1.bf16.msra.mxu0 0
      %4387 = vmatprep.subr.bf16.mxu0 0
      %4388 = vmatpush1.bf16.msra.mxu0 0
      %4389 = vmatprep.subr.bf16.mxu0 0
      %4390 = vmatpush1.bf16.msra.mxu0 0
      %4391 = vmatprep.subr.bf16.mxu0 0
      %4392 = vmatpush1.bf16.msra.mxu0 0
      %4393 = vmatprep.subr.bf16.mxu0 0
      %4394 = vmatpush1.bf16.msra.mxu0 0
      %4395 = vmatprep.subr.bf16.mxu0 0
      %4396 = vmatpush1.bf16.msra.mxu0 0
      %4397 = vmatprep.subr.bf16.mxu0 0
      %4398 = vmatpush1.bf16.msra.mxu0 0
      %4399 = vmatprep.subr.bf16.mxu0 0
      %4400 = vmatpush1.bf16.msra.mxu0 %v4342
      %4401 = vmatprep.subr.bf16.mxu0 0
      %4402 = vmatpush2.bf16.msra.mxu0 0
      %4403 = vmatprep.subr.bf16.mxu0 0
      %4404 = vmatpush2.bf16.msra.mxu0 0
      %4405 = vmatprep.subr.bf16.mxu0 0
      %4406 = vmatpush2.bf16.msra.mxu0 0
      %4407 = vmatprep.subr.bf16.mxu0 0
      %4408 = vmatpush2.bf16.msra.mxu0 0
      %4409 = vmatprep.subr.bf16.mxu0 0
      %4410 = vmatpush2.bf16.msra.mxu0 0
      %4411 = vmatprep.subr.bf16.mxu0 0
      %4412 = vmatpush2.bf16.msra.mxu0 0
      %4413 = vmatprep.subr.bf16.mxu0 0
      %4414 = vmatpush2.bf16.msra.mxu0 0
      %4415 = vmatprep.subr.bf16.mxu0 0
      %4416 = vmatpush2.bf16.msra.mxu0 0
      %4417 = vmatprep.mubr.bf16.mxu0 0
      %4418 = vmatmul.mubr.bf16.gmra.mxu0 %v4333
      %v4419 = vpop.f32.mrf.mxu0
      %v4420 = vadd.f32 0.0, %v4419
      %v4421 = vpop.f32.mrf.mxu0
      %v4422 = vpop.f32.mrf.mxu0
      %v4423 = vpop.f32.mrf.mxu0
      %4424 = vdwg.mxu0
      %v4425 = vadd.f32 %v4305, %v4379
      %v4426 = vadd.f32 %v4306, %v4381
      %v4427 = vadd.f32 %v4307, %v4420
      %v4428 = vld [vmem:[%s1293] sm:$0xf]
      %4429 = vrot.lane.b32.xlu0 %v4197, 107
      %v4430 = vpop.permute.xlu0 %4429
      %4431 = vrot.lane.b32.xlu0 %v4198, 107
      %v4432 = vpop.permute.xlu0 %4431
      %4433 = vrot.lane.b32.xlu0 %v4199, 107
      %v4434 = vpop.permute.xlu0 %4433
      %4435 = vrot.lane.b32.xlu0 %v4200, 107
      %v4436 = vpop.permute.xlu0 %4435
      %v4437 = vsel %vm605, %v4430, %v4432
      %v4438 = vsel %vm605, %v4432, %v4434
      %v4439 = vsel %vm605, %v4434, %v4436
      %v4441 = vsel %vm1074, %v4428, 0
      %v4444 = vsel %vm571, %v4437, 0
      %v4447 = vsel %vm571, %v4438, 0
      %v4450 = vsel %vm571, %v4439, 0
      %4452 = vmatprep.subr.bf16.mxu0 0
      %4453 = vmatpush1.bf16.msra.mxu0 0
      %4454 = vmatprep.subr.bf16.mxu0 0
      %4455 = vmatpush1.bf16.msra.mxu0 0
      %4456 = vmatprep.subr.bf16.mxu0 0
      %4457 = vmatpush1.bf16.msra.mxu0 0
      %4458 = vmatprep.subr.bf16.mxu0 0
      %4459 = vmatpush1.bf16.msra.mxu0 0
      %4460 = vmatprep.subr.bf16.mxu0 0
      %4461 = vmatpush1.bf16.msra.mxu0 0
      %4462 = vmatprep.subr.bf16.mxu0 0
      %4463 = vmatpush1.bf16.msra.mxu0 0
      %4464 = vmatprep.subr.bf16.mxu0 0
      %4465 = vmatpush1.bf16.msra.mxu0 0
      %4466 = vmatprep.subr.bf16.mxu0 %v4447
      %4467 = vmatpush1.bf16.msra.mxu0 %v4444
      %4468 = vmatprep.subr.bf16.mxu0 0
      %4469 = vmatpush2.bf16.msra.mxu0 0
      %4470 = vmatprep.subr.bf16.mxu0 0
      %4471 = vmatpush2.bf16.msra.mxu0 0
      %4472 = vmatprep.subr.bf16.mxu0 0
      %4473 = vmatpush2.bf16.msra.mxu0 0
      %4474 = vmatprep.subr.bf16.mxu0 0
      %4475 = vmatpush2.bf16.msra.mxu0 0
      %4476 = vmatprep.subr.bf16.mxu0 0
      %4477 = vmatpush2.bf16.msra.mxu0 0
      %4478 = vmatprep.subr.bf16.mxu0 0
      %4479 = vmatpush2.bf16.msra.mxu0 0
      %4480 = vmatprep.subr.bf16.mxu0 0
      %4481 = vmatpush2.bf16.msra.mxu0 0
      %4482 = vmatprep.subr.bf16.mxu0 0
      %4483 = vmatpush2.bf16.msra.mxu0 0
      %4484 = vmatprep.mubr.bf16.mxu0 0
      %4485 = vmatmul.mubr.bf16.gmra.mxu0 %v4441
      %v4486 = vpop.f32.mrf.mxu0
      %v4487 = vadd.f32 0.0, %v4486
      %v4488 = vpop.f32.mrf.mxu0
      %v4489 = vadd.f32 0.0, %v4488
      %v4490 = vpop.f32.mrf.mxu0
      %v4491 = vpop.f32.mrf.mxu0
      %4492 = vdwg.mxu0
      %4493 = vmatprep.subr.bf16.mxu0 0
      %4494 = vmatpush1.bf16.msra.mxu0 0
      %4495 = vmatprep.subr.bf16.mxu0 0
      %4496 = vmatpush1.bf16.msra.mxu0 0
      %4497 = vmatprep.subr.bf16.mxu0 0
      %4498 = vmatpush1.bf16.msra.mxu0 0
      %4499 = vmatprep.subr.bf16.mxu0 0
      %4500 = vmatpush1.bf16.msra.mxu0 0
      %4501 = vmatprep.subr.bf16.mxu0 0
      %4502 = vmatpush1.bf16.msra.mxu0 0
      %4503 = vmatprep.subr.bf16.mxu0 0
      %4504 = vmatpush1.bf16.msra.mxu0 0
      %4505 = vmatprep.subr.bf16.mxu0 0
      %4506 = vmatpush1.bf16.msra.mxu0 0
      %4507 = vmatprep.subr.bf16.mxu0 0
      %4508 = vmatpush1.bf16.msra.mxu0 %v4450
      %4509 = vmatprep.subr.bf16.mxu0 0
      %4510 = vmatpush2.bf16.msra.mxu0 0
      %4511 = vmatprep.subr.bf16.mxu0 0
      %4512 = vmatpush2.bf16.msra.mxu0 0
      %4513 = vmatprep.subr.bf16.mxu0 0
      %4514 = vmatpush2.bf16.msra.mxu0 0
      %4515 = vmatprep.subr.bf16.mxu0 0
      %4516 = vmatpush2.bf16.msra.mxu0 0
      %4517 = vmatprep.subr.bf16.mxu0 0
      %4518 = vmatpush2.bf16.msra.mxu0 0
      %4519 = vmatprep.subr.bf16.mxu0 0
      %4520 = vmatpush2.bf16.msra.mxu0 0
      %4521 = vmatprep.subr.bf16.mxu0 0
      %4522 = vmatpush2.bf16.msra.mxu0 0
      %4523 = vmatprep.subr.bf16.mxu0 0
      %4524 = vmatpush2.bf16.msra.mxu0 0
      %4525 = vmatprep.mubr.bf16.mxu0 0
      %4526 = vmatmul.mubr.bf16.gmra.mxu0 %v4441
      %v4527 = vpop.f32.mrf.mxu0
      %v4528 = vadd.f32 0.0, %v4527
      %v4529 = vpop.f32.mrf.mxu0
      %v4530 = vpop.f32.mrf.mxu0
      %v4531 = vpop.f32.mrf.mxu0
      %4532 = vdwg.mxu0
      %v4533 = vadd.f32 %v4425, %v4487
      %v4534 = vadd.f32 %v4426, %v4489
      %v4535 = vadd.f32 %v4427, %v4528
      %v4536 = vld [vmem:[%s1402] sm:$0xf]
      %v4537 = vld [vmem:[%s888] sm:$0xff]
      %v4538 = vld [vmem:[%s888 + $0x8] sm:$0xff]
      %v4541 = vunpack.c.l.b16 %v4537
      %v4542 = vunpack.c.h.b16 %v4537
      %v4543 = vunpack.c.l.b16 %v4538
      %v4544 = vunpack.c.h.b16 %v4538
      %v4545 = vpack.c.b16 %v4541, %v4541
      %v4546 = vpack.c.b16 %v4542, %v4542
      %v4547 = vpack.c.b16 %v4543, %v4543
      %v4548 = vpack.c.b16 %v4544, %v4544
      %4549 = vrot.lane.b32.xlu0 %v4545, 108
      %v4550 = vpop.permute.xlu0 %4549
      %4551 = vrot.lane.b32.xlu0 %v4546, 108
      %v4552 = vpop.permute.xlu0 %4551
      %4553 = vrot.lane.b32.xlu0 %v4547, 108
      %v4554 = vpop.permute.xlu0 %4553
      %4555 = vrot.lane.b32.xlu0 %v4548, 108
      %v4556 = vpop.permute.xlu0 %4555
      %v4557 = vsel %vm440, %v4550, %v4552
      %v4558 = vsel %vm440, %v4552, %v4554
      %v4559 = vsel %vm440, %v4554, %v4556
      %v4561 = vsel %vm1074, %v4536, 0
      %v4564 = vsel %vm571, %v4557, 0
      %v4567 = vsel %vm571, %v4558, 0
      %v4570 = vsel %vm571, %v4559, 0
      %4572 = vmatprep.subr.bf16.mxu0 0
      %4573 = vmatpush1.bf16.msra.mxu0 0
      %4574 = vmatprep.subr.bf16.mxu0 0
      %4575 = vmatpush1.bf16.msra.mxu0 0
      %4576 = vmatprep.subr.bf16.mxu0 0
      %4577 = vmatpush1.bf16.msra.mxu0 0
      %4578 = vmatprep.subr.bf16.mxu0 0
      %4579 = vmatpush1.bf16.msra.mxu0 0
      %4580 = vmatprep.subr.bf16.mxu0 0
      %4581 = vmatpush1.bf16.msra.mxu0 0
      %4582 = vmatprep.subr.bf16.mxu0 0
      %4583 = vmatpush1.bf16.msra.mxu0 0
      %4584 = vmatprep.subr.bf16.mxu0 0
      %4585 = vmatpush1.bf16.msra.mxu0 0
      %4586 = vmatprep.subr.bf16.mxu0 %v4567
      %4587 = vmatpush1.bf16.msra.mxu0 %v4564
      %4588 = vmatprep.subr.bf16.mxu0 0
      %4589 = vmatpush2.bf16.msra.mxu0 0
      %4590 = vmatprep.subr.bf16.mxu0 0
      %4591 = vmatpush2.bf16.msra.mxu0 0
      %4592 = vmatprep.subr.bf16.mxu0 0
      %4593 = vmatpush2.bf16.msra.mxu0 0
      %4594 = vmatprep.subr.bf16.mxu0 0
      %4595 = vmatpush2.bf16.msra.mxu0 0
      %4596 = vmatprep.subr.bf16.mxu0 0
      %4597 = vmatpush2.bf16.msra.mxu0 0
      %4598 = vmatprep.subr.bf16.mxu0 0
      %4599 = vmatpush2.bf16.msra.mxu0 0
      %4600 = vmatprep.subr.bf16.mxu0 0
      %4601 = vmatpush2.bf16.msra.mxu0 0
      %4602 = vmatprep.subr.bf16.mxu0 0
      %4603 = vmatpush2.bf16.msra.mxu0 0
      %4604 = vmatprep.mubr.bf16.mxu0 0
      %4605 = vmatmul.mubr.bf16.gmra.mxu0 %v4561
      %v4606 = vpop.f32.mrf.mxu0
      %v4607 = vadd.f32 0.0, %v4606
      %v4608 = vpop.f32.mrf.mxu0
      %v4609 = vadd.f32 0.0, %v4608
      %v4610 = vpop.f32.mrf.mxu0
      %v4611 = vpop.f32.mrf.mxu0
      %4612 = vdwg.mxu0
      %4613 = vmatprep.subr.bf16.mxu0 0
      %4614 = vmatpush1.bf16.msra.mxu0 0
      %4615 = vmatprep.subr.bf16.mxu0 0
      %4616 = vmatpush1.bf16.msra.mxu0 0
      %4617 = vmatprep.subr.bf16.mxu0 0
      %4618 = vmatpush1.bf16.msra.mxu0 0
      %4619 = vmatprep.subr.bf16.mxu0 0
      %4620 = vmatpush1.bf16.msra.mxu0 0
      %4621 = vmatprep.subr.bf16.mxu0 0
      %4622 = vmatpush1.bf16.msra.mxu0 0
      %4623 = vmatprep.subr.bf16.mxu0 0
      %4624 = vmatpush1.bf16.msra.mxu0 0
      %4625 = vmatprep.subr.bf16.mxu0 0
      %4626 = vmatpush1.bf16.msra.mxu0 0
      %4627 = vmatprep.subr.bf16.mxu0 0
      %4628 = vmatpush1.bf16.msra.mxu0 %v4570
      %4629 = vmatprep.subr.bf16.mxu0 0
      %4630 = vmatpush2.bf16.msra.mxu0 0
      %4631 = vmatprep.subr.bf16.mxu0 0
      %4632 = vmatpush2.bf16.msra.mxu0 0
      %4633 = vmatprep.subr.bf16.mxu0 0
      %4634 = vmatpush2.bf16.msra.mxu0 0
      %4635 = vmatprep.subr.bf16.mxu0 0
      %4636 = vmatpush2.bf16.msra.mxu0 0
      %4637 = vmatprep.subr.bf16.mxu0 0
      %4638 = vmatpush2.bf16.msra.mxu0 0
      %4639 = vmatprep.subr.bf16.mxu0 0
      %4640 = vmatpush2.bf16.msra.mxu0 0
      %4641 = vmatprep.subr.bf16.mxu0 0
      %4642 = vmatpush2.bf16.msra.mxu0 0
      %4643 = vmatprep.subr.bf16.mxu0 0
      %4644 = vmatpush2.bf16.msra.mxu0 0
      %4645 = vmatprep.mubr.bf16.mxu0 0
      %4646 = vmatmul.mubr.bf16.gmra.mxu0 %v4561
      %v4647 = vpop.f32.mrf.mxu0
      %v4648 = vadd.f32 0.0, %v4647
      %v4649 = vpop.f32.mrf.mxu0
      %v4650 = vpop.f32.mrf.mxu0
      %v4651 = vpop.f32.mrf.mxu0
      %4652 = vdwg.mxu0
      %v4653 = vadd.f32 %v4533, %v4607
      %v4654 = vadd.f32 %v4534, %v4609
      %v4655 = vadd.f32 %v4535, %v4648
      %v4656 = vld [vmem:[%s1524] sm:$0xf]
      %v4657 = vld [vmem:[%s1046] sm:$0xff]
      %v4658 = vld [vmem:[%s1046 + $0x8] sm:$0xff]
      %v4661 = vunpack.c.l.b16 %v4657
      %v4662 = vunpack.c.h.b16 %v4657
      %v4663 = vunpack.c.l.b16 %v4658
      %v4664 = vunpack.c.h.b16 %v4658
      %v4665 = vpack.c.b16 %v4661, %v4661
      %v4666 = vpack.c.b16 %v4662, %v4662
      %v4667 = vpack.c.b16 %v4663, %v4663
      %v4668 = vpack.c.b16 %v4664, %v4664
      %4669 = vrot.lane.b32.xlu0 %v4665, 108
      %v4670 = vpop.permute.xlu0 %4669
      %4671 = vrot.lane.b32.xlu0 %v4666, 108
      %v4672 = vpop.permute.xlu0 %4671
      %4673 = vrot.lane.b32.xlu0 %v4667, 108
      %v4674 = vpop.permute.xlu0 %4673
      %4675 = vrot.lane.b32.xlu0 %v4668, 108
      %v4676 = vpop.permute.xlu0 %4675
      %v4677 = vsel %vm440, %v4670, %v4672
      %v4678 = vsel %vm440, %v4672, %v4674
      %v4679 = vsel %vm440, %v4674, %v4676
      %v4681 = vsel %vm1074, %v4656, 0
      %v4684 = vsel %vm571, %v4677, 0
      %v4687 = vsel %vm571, %v4678, 0
      %v4690 = vsel %vm571, %v4679, 0
      %4692 = vmatprep.subr.bf16.mxu0 0
      %4693 = vmatpush1.bf16.msra.mxu0 0
      %4694 = vmatprep.subr.bf16.mxu0 0
      %4695 = vmatpush1.bf16.msra.mxu0 0
      %4696 = vmatprep.subr.bf16.mxu0 0
      %4697 = vmatpush1.bf16.msra.mxu0 0
      %4698 = vmatprep.subr.bf16.mxu0 0
      %4699 = vmatpush1.bf16.msra.mxu0 0
      %4700 = vmatprep.subr.bf16.mxu0 0
      %4701 = vmatpush1.bf16.msra.mxu0 0
      %4702 = vmatprep.subr.bf16.mxu0 0
      %4703 = vmatpush1.bf16.msra.mxu0 0
      %4704 = vmatprep.subr.bf16.mxu0 0
      %4705 = vmatpush1.bf16.msra.mxu0 0
      %4706 = vmatprep.subr.bf16.mxu0 %v4687
      %4707 = vmatpush1.bf16.msra.mxu0 %v4684
      %4708 = vmatprep.subr.bf16.mxu0 0
      %4709 = vmatpush2.bf16.msra.mxu0 0
      %4710 = vmatprep.subr.bf16.mxu0 0
      %4711 = vmatpush2.bf16.msra.mxu0 0
      %4712 = vmatprep.subr.bf16.mxu0 0
      %4713 = vmatpush2.bf16.msra.mxu0 0
      %4714 = vmatprep.subr.bf16.mxu0 0
      %4715 = vmatpush2.bf16.msra.mxu0 0
      %4716 = vmatprep.subr.bf16.mxu0 0
      %4717 = vmatpush2.bf16.msra.mxu0 0
      %4718 = vmatprep.subr.bf16.mxu0 0
      %4719 = vmatpush2.bf16.msra.mxu0 0
      %4720 = vmatprep.subr.bf16.mxu0 0
      %4721 = vmatpush2.bf16.msra.mxu0 0
      %4722 = vmatprep.subr.bf16.mxu0 0
      %4723 = vmatpush2.bf16.msra.mxu0 0
      %4724 = vmatprep.mubr.bf16.mxu0 0
      %4725 = vmatmul.mubr.bf16.gmra.mxu0 %v4681
      %v4726 = vpop.f32.mrf.mxu0
      %v4727 = vadd.f32 0.0, %v4726
      %v4728 = vpop.f32.mrf.mxu0
      %v4729 = vadd.f32 0.0, %v4728
      %v4730 = vpop.f32.mrf.mxu0
      %v4731 = vpop.f32.mrf.mxu0
      %4732 = vdwg.mxu0
      %4733 = vmatprep.subr.bf16.mxu0 0
      %4734 = vmatpush1.bf16.msra.mxu0 0
      %4735 = vmatprep.subr.bf16.mxu0 0
      %4736 = vmatpush1.bf16.msra.mxu0 0
      %4737 = vmatprep.subr.bf16.mxu0 0
      %4738 = vmatpush1.bf16.msra.mxu0 0
      %4739 = vmatprep.subr.bf16.mxu0 0
      %4740 = vmatpush1.bf16.msra.mxu0 0
      %4741 = vmatprep.subr.bf16.mxu0 0
      %4742 = vmatpush1.bf16.msra.mxu0 0
      %4743 = vmatprep.subr.bf16.mxu0 0
      %4744 = vmatpush1.bf16.msra.mxu0 0
      %4745 = vmatprep.subr.bf16.mxu0 0
      %4746 = vmatpush1.bf16.msra.mxu0 0
      %4747 = vmatprep.subr.bf16.mxu0 0
      %4748 = vmatpush1.bf16.msra.mxu0 %v4690
      %4749 = vmatprep.subr.bf16.mxu0 0
      %4750 = vmatpush2.bf16.msra.mxu0 0
      %4751 = vmatprep.subr.bf16.mxu0 0
      %4752 = vmatpush2.bf16.msra.mxu0 0
      %4753 = vmatprep.subr.bf16.mxu0 0
      %4754 = vmatpush2.bf16.msra.mxu0 0
      %4755 = vmatprep.subr.bf16.mxu0 0
      %4756 = vmatpush2.bf16.msra.mxu0 0
      %4757 = vmatprep.subr.bf16.mxu0 0
      %4758 = vmatpush2.bf16.msra.mxu0 0
      %4759 = vmatprep.subr.bf16.mxu0 0
      %4760 = vmatpush2.bf16.msra.mxu0 0
      %4761 = vmatprep.subr.bf16.mxu0 0
      %4762 = vmatpush2.bf16.msra.mxu0 0
      %4763 = vmatprep.subr.bf16.mxu0 0
      %4764 = vmatpush2.bf16.msra.mxu0 0
      %4765 = vmatprep.mubr.bf16.mxu0 0
      %4766 = vmatmul.mubr.bf16.gmra.mxu0 %v4681
      %v4767 = vpop.f32.mrf.mxu0
      %v4768 = vadd.f32 0.0, %v4767
      %v4769 = vpop.f32.mrf.mxu0
      %v4770 = vpop.f32.mrf.mxu0
      %v4771 = vpop.f32.mrf.mxu0
      %4772 = vdwg.mxu0
      %v4773 = vadd.f32 %v4653, %v4727
      %v4774 = vadd.f32 %v4654, %v4729
      %v4775 = vadd.f32 %v4655, %v4768
      %v4776 = vld [vmem:[%s1645] sm:$0xf]
      %4777 = vrot.lane.b32.xlu0 %v4545, 107
      %v4778 = vpop.permute.xlu0 %4777
      %4779 = vrot.lane.b32.xlu0 %v4546, 107
      %v4780 = vpop.permute.xlu0 %4779
      %4781 = vrot.lane.b32.xlu0 %v4547, 107
      %v4782 = vpop.permute.xlu0 %4781
      %4783 = vrot.lane.b32.xlu0 %v4548, 107
      %v4784 = vpop.permute.xlu0 %4783
      %v4785 = vsel %vm605, %v4778, %v4780
      %v4786 = vsel %vm605, %v4780, %v4782
      %v4787 = vsel %vm605, %v4782, %v4784
      %v4789 = vsel %vm1074, %v4776, 0
      %v4792 = vsel %vm571, %v4785, 0
      %v4795 = vsel %vm571, %v4786, 0
      %v4798 = vsel %vm571, %v4787, 0
      %4800 = vmatprep.subr.bf16.mxu0 0
      %4801 = vmatpush1.bf16.msra.mxu0 0
      %4802 = vmatprep.subr.bf16.mxu0 0
      %4803 = vmatpush1.bf16.msra.mxu0 0
      %4804 = vmatprep.subr.bf16.mxu0 0
      %4805 = vmatpush1.bf16.msra.mxu0 0
      %4806 = vmatprep.subr.bf16.mxu0 0
      %4807 = vmatpush1.bf16.msra.mxu0 0
      %4808 = vmatprep.subr.bf16.mxu0 0
      %4809 = vmatpush1.bf16.msra.mxu0 0
      %4810 = vmatprep.subr.bf16.mxu0 0
      %4811 = vmatpush1.bf16.msra.mxu0 0
      %4812 = vmatprep.subr.bf16.mxu0 0
      %4813 = vmatpush1.bf16.msra.mxu0 0
      %4814 = vmatprep.subr.bf16.mxu0 %v4795
      %4815 = vmatpush1.bf16.msra.mxu0 %v4792
      %4816 = vmatprep.subr.bf16.mxu0 0
      %4817 = vmatpush2.bf16.msra.mxu0 0
      %4818 = vmatprep.subr.bf16.mxu0 0
      %4819 = vmatpush2.bf16.msra.mxu0 0
      %4820 = vmatprep.subr.bf16.mxu0 0
      %4821 = vmatpush2.bf16.msra.mxu0 0
      %4822 = vmatprep.subr.bf16.mxu0 0
      %4823 = vmatpush2.bf16.msra.mxu0 0
      %4824 = vmatprep.subr.bf16.mxu0 0
      %4825 = vmatpush2.bf16.msra.mxu0 0
      %4826 = vmatprep.subr.bf16.mxu0 0
      %4827 = vmatpush2.bf16.msra.mxu0 0
      %4828 = vmatprep.subr.bf16.mxu0 0
      %4829 = vmatpush2.bf16.msra.mxu0 0
      %4830 = vmatprep.subr.bf16.mxu0 0
      %4831 = vmatpush2.bf16.msra.mxu0 0
      %4832 = vmatprep.mubr.bf16.mxu0 0
      %4833 = vmatmul.mubr.bf16.gmra.mxu0 %v4789
      %v4834 = vpop.f32.mrf.mxu0
      %v4835 = vadd.f32 0.0, %v4834
      %v4836 = vpop.f32.mrf.mxu0
      %v4837 = vadd.f32 0.0, %v4836
      %v4838 = vpop.f32.mrf.mxu0
      %v4839 = vpop.f32.mrf.mxu0
      %4840 = vdwg.mxu0
      %4841 = vmatprep.subr.bf16.mxu0 0
      %4842 = vmatpush1.bf16.msra.mxu0 0
      %4843 = vmatprep.subr.bf16.mxu0 0
      %4844 = vmatpush1.bf16.msra.mxu0 0
      %4845 = vmatprep.subr.bf16.mxu0 0
      %4846 = vmatpush1.bf16.msra.mxu0 0
      %4847 = vmatprep.subr.bf16.mxu0 0
      %4848 = vmatpush1.bf16.msra.mxu0 0
      %4849 = vmatprep.subr.bf16.mxu0 0
      %4850 = vmatpush1.bf16.msra.mxu0 0
      %4851 = vmatprep.subr.bf16.mxu0 0
      %4852 = vmatpush1.bf16.msra.mxu0 0
      %4853 = vmatprep.subr.bf16.mxu0 0
      %4854 = vmatpush1.bf16.msra.mxu0 0
      %4855 = vmatprep.subr.bf16.mxu0 0
      %4856 = vmatpush1.bf16.msra.mxu0 %v4798
      %4857 = vmatprep.subr.bf16.mxu0 0
      %4858 = vmatpush2.bf16.msra.mxu0 0
      %4859 = vmatprep.subr.bf16.mxu0 0
      %4860 = vmatpush2.bf16.msra.mxu0 0
      %4861 = vmatprep.subr.bf16.mxu0 0
      %4862 = vmatpush2.bf16.msra.mxu0 0
      %4863 = vmatprep.subr.bf16.mxu0 0
      %4864 = vmatpush2.bf16.msra.mxu0 0
      %4865 = vmatprep.subr.bf16.mxu0 0
      %4866 = vmatpush2.bf16.msra.mxu0 0
      %4867 = vmatprep.subr.bf16.mxu0 0
      %4868 = vmatpush2.bf16.msra.mxu0 0
      %4869 = vmatprep.subr.bf16.mxu0 0
      %4870 = vmatpush2.bf16.msra.mxu0 0
      %4871 = vmatprep.subr.bf16.mxu0 0
      %4872 = vmatpush2.bf16.msra.mxu0 0
      %4873 = vmatprep.mubr.bf16.mxu0 0
      %4874 = vmatmul.mubr.bf16.gmra.mxu0 %v4789
      %v4875 = vpop.f32.mrf.mxu0
      %v4876 = vadd.f32 0.0, %v4875
      %v4877 = vpop.f32.mrf.mxu0
      %v4878 = vpop.f32.mrf.mxu0
      %v4879 = vpop.f32.mrf.mxu0
      %4880 = vdwg.mxu0
      %v4881 = vadd.f32 %v4773, %v4835
      %v4882 = vadd.f32 %v4774, %v4837
      %v4883 = vadd.f32 %v4775, %v4876
      %v4884 = vld [vmem:[%s1754] sm:$0xf]
      %4885 = vrot.lane.b32.xlu0 %v4197, 90
      %v4886 = vpop.permute.xlu0 %4885
      %4887 = vrot.lane.b32.xlu0 %v4198, 90
      %v4888 = vpop.permute.xlu0 %4887
      %4889 = vrot.lane.b32.xlu0 %v4199, 90
      %v4890 = vpop.permute.xlu0 %4889
      %4891 = vrot.lane.b32.xlu0 %v4200, 90
      %v4892 = vpop.permute.xlu0 %4891
      %v4893 = vsel %vm763, %v4886, %v4888
      %v4894 = vsel %vm763, %v4888, %v4890
      %v4895 = vsel %vm763, %v4890, %v4892
      %v4897 = vsel %vm1074, %v4884, 0
      %v4900 = vsel %vm571, %v4893, 0
      %v4903 = vsel %vm571, %v4894, 0
      %v4906 = vsel %vm571, %v4895, 0
      %4908 = vmatprep.subr.bf16.mxu0 0
      %4909 = vmatpush1.bf16.msra.mxu0 0
      %4910 = vmatprep.subr.bf16.mxu0 0
      %4911 = vmatpush1.bf16.msra.mxu0 0
      %4912 = vmatprep.subr.bf16.mxu0 0
      %4913 = vmatpush1.bf16.msra.mxu0 0
      %4914 = vmatprep.subr.bf16.mxu0 0
      %4915 = vmatpush1.bf16.msra.mxu0 0
      %4916 = vmatprep.subr.bf16.mxu0 0
      %4917 = vmatpush1.bf16.msra.mxu0 0
      %4918 = vmatprep.subr.bf16.mxu0 0
      %4919 = vmatpush1.bf16.msra.mxu0 0
      %4920 = vmatprep.subr.bf16.mxu0 0
      %4921 = vmatpush1.bf16.msra.mxu0 0
      %4922 = vmatprep.subr.bf16.mxu0 %v4903
      %4923 = vmatpush1.bf16.msra.mxu0 %v4900
      %4924 = vmatprep.subr.bf16.mxu0 0
      %4925 = vmatpush2.bf16.msra.mxu0 0
      %4926 = vmatprep.subr.bf16.mxu0 0
      %4927 = vmatpush2.bf16.msra.mxu0 0
      %4928 = vmatprep.subr.bf16.mxu0 0
      %4929 = vmatpush2.bf16.msra.mxu0 0
      %4930 = vmatprep.subr.bf16.mxu0 0
      %4931 = vmatpush2.bf16.msra.mxu0 0
      %4932 = vmatprep.subr.bf16.mxu0 0
      %4933 = vmatpush2.bf16.msra.mxu0 0
      %4934 = vmatprep.subr.bf16.mxu0 0
      %4935 = vmatpush2.bf16.msra.mxu0 0
      %4936 = vmatprep.subr.bf16.mxu0 0
      %4937 = vmatpush2.bf16.msra.mxu0 0
      %4938 = vmatprep.subr.bf16.mxu0 0
      %4939 = vmatpush2.bf16.msra.mxu0 0
      %4940 = vmatprep.mubr.bf16.mxu0 0
      %4941 = vmatmul.mubr.bf16.gmra.mxu0 %v4897
      %v4942 = vpop.f32.mrf.mxu0
      %v4943 = vadd.f32 0.0, %v4942
      %v4944 = vpop.f32.mrf.mxu0
      %v4945 = vadd.f32 0.0, %v4944
      %v4946 = vpop.f32.mrf.mxu0
      %v4947 = vpop.f32.mrf.mxu0
      %4948 = vdwg.mxu0
      %4949 = vmatprep.subr.bf16.mxu0 0
      %4950 = vmatpush1.bf16.msra.mxu0 0
      %4951 = vmatprep.subr.bf16.mxu0 0
      %4952 = vmatpush1.bf16.msra.mxu0 0
      %4953 = vmatprep.subr.bf16.mxu0 0
      %4954 = vmatpush1.bf16.msra.mxu0 0
      %4955 = vmatprep.subr.bf16.mxu0 0
      %4956 = vmatpush1.bf16.msra.mxu0 0
      %4957 = vmatprep.subr.bf16.mxu0 0
      %4958 = vmatpush1.bf16.msra.mxu0 0
      %4959 = vmatprep.subr.bf16.mxu0 0
      %4960 = vmatpush1.bf16.msra.mxu0 0
      %4961 = vmatprep.subr.bf16.mxu0 0
      %4962 = vmatpush1.bf16.msra.mxu0 0
      %4963 = vmatprep.subr.bf16.mxu0 0
      %4964 = vmatpush1.bf16.msra.mxu0 %v4906
      %4965 = vmatprep.subr.bf16.mxu0 0
      %4966 = vmatpush2.bf16.msra.mxu0 0
      %4967 = vmatprep.subr.bf16.mxu0 0
      %4968 = vmatpush2.bf16.msra.mxu0 0
      %4969 = vmatprep.subr.bf16.mxu0 0
      %4970 = vmatpush2.bf16.msra.mxu0 0
      %4971 = vmatprep.subr.bf16.mxu0 0
      %4972 = vmatpush2.bf16.msra.mxu0 0
      %4973 = vmatprep.subr.bf16.mxu0 0
      %4974 = vmatpush2.bf16.msra.mxu0 0
      %4975 = vmatprep.subr.bf16.mxu0 0
      %4976 = vmatpush2.bf16.msra.mxu0 0
      %4977 = vmatprep.subr.bf16.mxu0 0
      %4978 = vmatpush2.bf16.msra.mxu0 0
      %4979 = vmatprep.subr.bf16.mxu0 0
      %4980 = vmatpush2.bf16.msra.mxu0 0
      %4981 = vmatprep.mubr.bf16.mxu0 0
      %4982 = vmatmul.mubr.bf16.gmra.mxu0 %v4897
      %v4983 = vpop.f32.mrf.mxu0
      %v4984 = vadd.f32 0.0, %v4983
      %v4985 = vpop.f32.mrf.mxu0
      %v4986 = vpop.f32.mrf.mxu0
      %v4987 = vpop.f32.mrf.mxu0
      %4988 = vdwg.mxu0
      %v4989 = vadd.f32 %v4881, %v4943
      %v4990 = vadd.f32 %v4882, %v4945
      %v4991 = vadd.f32 %v4883, %v4984
      %v4992 = vld [vmem:[%s1863] sm:$0xf]
      %4993 = vrot.lane.b32.xlu0 %v4317, 90
      %v4994 = vpop.permute.xlu0 %4993
      %4995 = vrot.lane.b32.xlu0 %v4318, 90
      %v4996 = vpop.permute.xlu0 %4995
      %4997 = vrot.lane.b32.xlu0 %v4319, 90
      %v4998 = vpop.permute.xlu0 %4997
      %4999 = vrot.lane.b32.xlu0 %v4320, 90
      %v5000 = vpop.permute.xlu0 %4999
      %v5001 = vsel %vm763, %v4994, %v4996
      %v5002 = vsel %vm763, %v4996, %v4998
      %v5003 = vsel %vm763, %v4998, %v5000
      %v5005 = vsel %vm1074, %v4992, 0
      %v5008 = vsel %vm571, %v5001, 0
      %v5011 = vsel %vm571, %v5002, 0
      %v5014 = vsel %vm571, %v5003, 0
      %5016 = vmatprep.subr.bf16.mxu0 0
      %5017 = vmatpush1.bf16.msra.mxu0 0
      %5018 = vmatprep.subr.bf16.mxu0 0
      %5019 = vmatpush1.bf16.msra.mxu0 0
      %5020 = vmatprep.subr.bf16.mxu0 0
      %5021 = vmatpush1.bf16.msra.mxu0 0
      %5022 = vmatprep.subr.bf16.mxu0 0
      %5023 = vmatpush1.bf16.msra.mxu0 0
      %5024 = vmatprep.subr.bf16.mxu0 0
      %5025 = vmatpush1.bf16.msra.mxu0 0
      %5026 = vmatprep.subr.bf16.mxu0 0
      %5027 = vmatpush1.bf16.msra.mxu0 0
      %5028 = vmatprep.subr.bf16.mxu0 0
      %5029 = vmatpush1.bf16.msra.mxu0 0
      %5030 = vmatprep.subr.bf16.mxu0 %v5011
      %5031 = vmatpush1.bf16.msra.mxu0 %v5008
      %5032 = vmatprep.subr.bf16.mxu0 0
      %5033 = vmatpush2.bf16.msra.mxu0 0
      %5034 = vmatprep.subr.bf16.mxu0 0
      %5035 = vmatpush2.bf16.msra.mxu0 0
      %5036 = vmatprep.subr.bf16.mxu0 0
      %5037 = vmatpush2.bf16.msra.mxu0 0
      %5038 = vmatprep.subr.bf16.mxu0 0
      %5039 = vmatpush2.bf16.msra.mxu0 0
      %5040 = vmatprep.subr.bf16.mxu0 0
      %5041 = vmatpush2.bf16.msra.mxu0 0
      %5042 = vmatprep.subr.bf16.mxu0 0
      %5043 = vmatpush2.bf16.msra.mxu0 0
      %5044 = vmatprep.subr.bf16.mxu0 0
      %5045 = vmatpush2.bf16.msra.mxu0 0
      %5046 = vmatprep.subr.bf16.mxu0 0
      %5047 = vmatpush2.bf16.msra.mxu0 0
      %5048 = vmatprep.mubr.bf16.mxu0 0
      %5049 = vmatmul.mubr.bf16.gmra.mxu0 %v5005
      %v5050 = vpop.f32.mrf.mxu0
      %v5051 = vadd.f32 0.0, %v5050
      %v5052 = vpop.f32.mrf.mxu0
      %v5053 = vadd.f32 0.0, %v5052
      %v5054 = vpop.f32.mrf.mxu0
      %v5055 = vpop.f32.mrf.mxu0
      %5056 = vdwg.mxu0
      %5057 = vmatprep.subr.bf16.mxu0 0
      %5058 = vmatpush1.bf16.msra.mxu0 0
      %5059 = vmatprep.subr.bf16.mxu0 0
      %5060 = vmatpush1.bf16.msra.mxu0 0
      %5061 = vmatprep.subr.bf16.mxu0 0
      %5062 = vmatpush1.bf16.msra.mxu0 0
      %5063 = vmatprep.subr.bf16.mxu0 0
      %5064 = vmatpush1.bf16.msra.mxu0 0
      %5065 = vmatprep.subr.bf16.mxu0 0
      %5066 = vmatpush1.bf16.msra.mxu0 0
      %5067 = vmatprep.subr.bf16.mxu0 0
      %5068 = vmatpush1.bf16.msra.mxu0 0
      %5069 = vmatprep.subr.bf16.mxu0 0
      %5070 = vmatpush1.bf16.msra.mxu0 0
      %5071 = vmatprep.subr.bf16.mxu0 0
      %5072 = vmatpush1.bf16.msra.mxu0 %v5014
      %5073 = vmatprep.subr.bf16.mxu0 0
      %5074 = vmatpush2.bf16.msra.mxu0 0
      %5075 = vmatprep.subr.bf16.mxu0 0
      %5076 = vmatpush2.bf16.msra.mxu0 0
      %5077 = vmatprep.subr.bf16.mxu0 0
      %5078 = vmatpush2.bf16.msra.mxu0 0
      %5079 = vmatprep.subr.bf16.mxu0 0
      %5080 = vmatpush2.bf16.msra.mxu0 0
      %5081 = vmatprep.subr.bf16.mxu0 0
      %5082 = vmatpush2.bf16.msra.mxu0 0
      %5083 = vmatprep.subr.bf16.mxu0 0
      %5084 = vmatpush2.bf16.msra.mxu0 0
      %5085 = vmatprep.subr.bf16.mxu0 0
      %5086 = vmatpush2.bf16.msra.mxu0 0
      %5087 = vmatprep.subr.bf16.mxu0 0
      %5088 = vmatpush2.bf16.msra.mxu0 0
      %5089 = vmatprep.mubr.bf16.mxu0 0
      %5090 = vmatmul.mubr.bf16.gmra.mxu0 %v5005
      %v5091 = vpop.f32.mrf.mxu0
      %v5092 = vadd.f32 0.0, %v5091
      %v5093 = vpop.f32.mrf.mxu0
      %v5094 = vpop.f32.mrf.mxu0
      %v5095 = vpop.f32.mrf.mxu0
      %5096 = vdwg.mxu0
      %v5097 = vadd.f32 %v4989, %v5051
      %v5098 = vadd.f32 %v4990, %v5053
      %v5099 = vadd.f32 %v4991, %v5092
      %v5100 = vld [vmem:[%s1972] sm:$0xf]
      %5101 = vrot.lane.b32.xlu0 %v4197, 89
      %v5102 = vpop.permute.xlu0 %5101
      %5103 = vrot.lane.b32.xlu0 %v4198, 89
      %v5104 = vpop.permute.xlu0 %5103
      %5105 = vrot.lane.b32.xlu0 %v4199, 89
      %v5106 = vpop.permute.xlu0 %5105
      %5107 = vrot.lane.b32.xlu0 %v4200, 89
      %v5108 = vpop.permute.xlu0 %5107
      %v5109 = vsel %vm921, %v5102, %v5104
      %v5110 = vsel %vm921, %v5104, %v5106
      %v5111 = vsel %vm921, %v5106, %v5108
      %v5113 = vsel %vm1074, %v5100, 0
      %v5116 = vsel %vm571, %v5109, 0
      %v5119 = vsel %vm571, %v5110, 0
      %v5122 = vsel %vm571, %v5111, 0
      %5124 = vmatprep.subr.bf16.mxu0 0
      %5125 = vmatpush1.bf16.msra.mxu0 0
      %5126 = vmatprep.subr.bf16.mxu0 0
      %5127 = vmatpush1.bf16.msra.mxu0 0
      %5128 = vmatprep.subr.bf16.mxu0 0
      %5129 = vmatpush1.bf16.msra.mxu0 0
      %5130 = vmatprep.subr.bf16.mxu0 0
      %5131 = vmatpush1.bf16.msra.mxu0 0
      %5132 = vmatprep.subr.bf16.mxu0 0
      %5133 = vmatpush1.bf16.msra.mxu0 0
      %5134 = vmatprep.subr.bf16.mxu0 0
      %5135 = vmatpush1.bf16.msra.mxu0 0
      %5136 = vmatprep.subr.bf16.mxu0 0
      %5137 = vmatpush1.bf16.msra.mxu0 0
      %5138 = vmatprep.subr.bf16.mxu0 %v5119
      %5139 = vmatpush1.bf16.msra.mxu0 %v5116
      %5140 = vmatprep.subr.bf16.mxu0 0
      %5141 = vmatpush2.bf16.msra.mxu0 0
      %5142 = vmatprep.subr.bf16.mxu0 0
      %5143 = vmatpush2.bf16.msra.mxu0 0
      %5144 = vmatprep.subr.bf16.mxu0 0
      %5145 = vmatpush2.bf16.msra.mxu0 0
      %5146 = vmatprep.subr.bf16.mxu0 0
      %5147 = vmatpush2.bf16.msra.mxu0 0
      %5148 = vmatprep.subr.bf16.mxu0 0
      %5149 = vmatpush2.bf16.msra.mxu0 0
      %5150 = vmatprep.subr.bf16.mxu0 0
      %5151 = vmatpush2.bf16.msra.mxu0 0
      %5152 = vmatprep.subr.bf16.mxu0 0
      %5153 = vmatpush2.bf16.msra.mxu0 0
      %5154 = vmatprep.subr.bf16.mxu0 0
      %5155 = vmatpush2.bf16.msra.mxu0 0
      %5156 = vmatprep.mubr.bf16.mxu0 0
      %5157 = vmatmul.mubr.bf16.gmra.mxu0 %v5113
      %v5158 = vpop.f32.mrf.mxu0
      %v5159 = vadd.f32 0.0, %v5158
      %v5160 = vpop.f32.mrf.mxu0
      %v5161 = vadd.f32 0.0, %v5160
      %v5162 = vpop.f32.mrf.mxu0
      %v5163 = vpop.f32.mrf.mxu0
      %5164 = vdwg.mxu0
      %5165 = vmatprep.subr.bf16.mxu0 0
      %5166 = vmatpush1.bf16.msra.mxu0 0
      %5167 = vmatprep.subr.bf16.mxu0 0
      %5168 = vmatpush1.bf16.msra.mxu0 0
      %5169 = vmatprep.subr.bf16.mxu0 0
      %5170 = vmatpush1.bf16.msra.mxu0 0
      %5171 = vmatprep.subr.bf16.mxu0 0
      %5172 = vmatpush1.bf16.msra.mxu0 0
      %5173 = vmatprep.subr.bf16.mxu0 0
      %5174 = vmatpush1.bf16.msra.mxu0 0
      %5175 = vmatprep.subr.bf16.mxu0 0
      %5176 = vmatpush1.bf16.msra.mxu0 0
      %5177 = vmatprep.subr.bf16.mxu0 0
      %5178 = vmatpush1.bf16.msra.mxu0 0
      %5179 = vmatprep.subr.bf16.mxu0 0
      %5180 = vmatpush1.bf16.msra.mxu0 %v5122
      %5181 = vmatprep.subr.bf16.mxu0 0
      %5182 = vmatpush2.bf16.msra.mxu0 0
      %5183 = vmatprep.subr.bf16.mxu0 0
      %5184 = vmatpush2.bf16.msra.mxu0 0
      %5185 = vmatprep.subr.bf16.mxu0 0
      %5186 = vmatpush2.bf16.msra.mxu0 0
      %5187 = vmatprep.subr.bf16.mxu0 0
      %5188 = vmatpush2.bf16.msra.mxu0 0
      %5189 = vmatprep.subr.bf16.mxu0 0
      %5190 = vmatpush2.bf16.msra.mxu0 0
      %5191 = vmatprep.subr.bf16.mxu0 0
      %5192 = vmatpush2.bf16.msra.mxu0 0
      %5193 = vmatprep.subr.bf16.mxu0 0
      %5194 = vmatpush2.bf16.msra.mxu0 0
      %5195 = vmatprep.subr.bf16.mxu0 0
      %5196 = vmatpush2.bf16.msra.mxu0 0
      %5197 = vmatprep.mubr.bf16.mxu0 0
      %5198 = vmatmul.mubr.bf16.gmra.mxu0 %v5113
      %v5199 = vpop.f32.mrf.mxu0
      %v5200 = vadd.f32 0.0, %v5199
      %v5201 = vpop.f32.mrf.mxu0
      %v5202 = vpop.f32.mrf.mxu0
      %v5203 = vpop.f32.mrf.mxu0
      %5204 = vdwg.mxu0
      %v5205 = vadd.f32 %v5097, %v5159
      %v5206 = vadd.f32 %v5098, %v5161
      %v5207 = vadd.f32 %v5099, %v5200
      %v5208 = vmul.f32 %v5205, 0.2
      %v5209 = vmul.f32 %v5206, 0.2
      %v5210 = vmul.f32 %v5207, 0.2
      %v5211 = vmax.f32 %v5205, %v5208
      %v5212 = vmax.f32 %v5206, %v5209
      %v5213 = vmax.f32 %v5207, %v5210
      %v5214 = vpack.c.bf16 %v5211, %v5211
      %v5215 = vpack.c.bf16 %v5212, %v5212
      %v5216 = vpack.c.bf16 %v5213, %v5213
      %v5220 = vunpack.c.l.b16 %v5214
      %v5221 = vunpack.c.l.b16 %v5215
      %v5222 = vunpack.c.l.b16 %v5216
      %v5223 = vpack.c.b16 %v5221, %v5220
      %v5224 = vpack.c.b16 %v5222, %v5222
      %s5227 = scalar_lea.vmem %s251, 36
      %5228 = vst [vmem:[%s5227] sm:$0xff] %v5223
      %5229 = vst [vmem:[%s5227 + $0x8] sm:$0xf] %v5224
      %p5230 = scmp.lt.s32.totalorder %s17, 1
      %s5231 = scalar_select %p5230, %s17, 1
      %s5232 = smul.addr %s5231, 12
      %s5233 = smul.addr %s5232, 4
      %s5234 = scalar_lea.vmem %s6, %s5233
      // Predicated region
      $region45: #{discriminator_decoder_block.1} parent=43 // pred_check
        %p5235 = pneg %p166
      $region46: #{discriminator_decoder_block.1} parent=43 // pred_check_branch
        %5237 = sbr.rel (%p5235) target = $region48
      $region47: #{discriminator_decoder_block.1} parent=43 // pred_region
        _
      $region48: #{discriminator_decoder_block.1} parent=43 // pred_fallthru
        _
    $region44: #{discriminator_decoder_block.1} parent=5 // pred_fallthru
      _
    %p5238 = scmp.le.s32.totalorder 2, %s12
    // Predicated region
    $region49: #{discriminator_decoder_block.1} parent=5 // pred_check
      %p5239 = pneg %p5238
    $region50: #{discriminator_decoder_block.1} parent=5 // pred_check_branch
      %5241 = sbr.rel (%p5239) target = $region52
    $region51: #{discriminator_decoder_block.1} parent=5 // pred_region
      %s5242 = ssub.s32 %s12, 2
      // Predicated region
      $region53: #{discriminator_decoder_block.1} parent=51 // pred_check
        %p5243 = pneg %p172
      $region54: #{discriminator_decoder_block.1} parent=51 // pred_check_branch
        %5245 = sbr.rel (%p5243) target = $region56
      $region55: #{discriminator_decoder_block.1} parent=51 // pred_region
        %p5246 = scmp.lt.s32.totalorder %s18, 1
        %s5247 = scalar_select %p5246, %s18, 1
        %s5248 = smul.addr %s5247, 12
        %s5249 = smul.addr %s5248, 4
        %s5250 = scalar_lea.vmem %s6, %s5249
      $region56: #{discriminator_decoder_block.1} parent=51 // pred_fallthru
        _
    $region52: #{discriminator_decoder_block.1} parent=5 // pred_fallthru
      _
  $region6: #{discriminator_decoder_block.1} parent=0 // loop_footer
    %s16 = sadd.s32 1, %s12
  $region7: #{discriminator_decoder_block.1} parent=0 // loop_footer_branch
    %11 = sbr.rel target = $region3
  $region8: #{discriminator_decoder_block.1} parent=0 // loop_exit
    _

</llo_original>
